<compile_context>
chip_gen: v6e
topology: v6e:2x2x1
jax: 0.10.0
libtpu: 0.0.40
codegen_flags: <defaults>
</compile_context>

<pallas_src>
import math
import functools

import jax
import jax.numpy as jnp
from jax.experimental import pallas as pl
from jax.experimental.pallas import tpu as pltpu


def _sparse_flash_kernel(q_ref, k_ref, v_ref, rq_ref, rkv_ref, bias_ref,
                         o_ref, acc_ref, m_ref, l_ref,
                         *, n_experts, d_head, scale):
    E, D = n_experts, d_head
    ki = pl.program_id(2)
    nk = pl.num_programs(2)

    @pl.when(ki == 0)
    def _init():
        m_ref[...] = jnp.full_like(m_ref, -jnp.inf)
        l_ref[...] = jnp.zeros_like(l_ref)
        acc_ref[...] = jnp.zeros_like(acc_ref)

    q = q_ref[0].astype(jnp.float32)       # (TQ,  E*D)
    k = k_ref[0]                           # (TKV, E*D)
    v = v_ref[0].astype(jnp.float32)       # (TKV, E*D)
    rq = rq_ref[0].astype(jnp.float32)     # (TQ,  E)
    rkv = rkv_ref[0].astype(jnp.float32)   # (TKV, E)
    bias = bias_ref[...]                   # (TQ, TKV)  additive: 0 keep / -1e30 masked

    # Static unroll over experts (E is small); all experts handled in one grid step.
    for e in range(E):
        sl = slice(e * D, (e + 1) * D)

        # Gate + 1/sqrt(D) folded into Q (S×D multiply, not S×S).
        qe = (q[:, sl] * (rq[:, e:e + 1] * scale)).astype(jnp.bfloat16)
        ke = k[:, sl].astype(jnp.bfloat16)

        # Q·Kᵀ with contracting dims — no explicit transpose of K, f32 accumulation.
        s = jax.lax.dot_general(qe, ke, (((1,), (1,)), ((), ())),
                                preferred_element_type=jnp.float32)
        s = s + bias                                          # additive mask bias

        # Online softmax (per expert running max / sum / accumulator).
        m_prev = m_ref[:, e:e + 1]
        l_prev = l_ref[:, e:e + 1]
        m_new = jnp.maximum(m_prev, jnp.max(s, axis=-1, keepdims=True))
        alpha = jnp.exp(m_prev - m_new)
        p = jnp.exp(s - m_new)                                # (TQ, TKV), unnormalized
        l_ref[:, e:e + 1] = alpha * l_prev + jnp.sum(p, axis=-1, keepdims=True)
        m_ref[:, e:e + 1] = m_new

        # P @ (route-gated V), bf16 operands, f32 accumulation.
        ve = (v[:, sl] * rkv[:, e:e + 1]).astype(jnp.bfloat16)
        pv = jnp.dot(p.astype(jnp.bfloat16), ve, preferred_element_type=jnp.float32)
        acc_ref[:, sl] = alpha * acc_ref[:, sl] + pv

    @pl.when(ki == nk - 1)
    def _finalize():
        for e in range(E):
            sl = slice(e * D, (e + 1) * D)
            # Deferred normalization: scale the (TQ, D) accumulator, not the (TQ, TKV) P.
            inv = pl.reciprocal(l_ref[:, e:e + 1], approx=True)
            o_ref[0, :, sl] = (acc_ref[:, sl] * inv).astype(o_ref.dtype)


def sparse_attention(Q, K, V, route_mat, mask, *, d_head, n_experts, dropout=0.0,
                     block_q=128, block_kv=128):
    """Pallas SparseAttention forward. Returns [B, n_experts, S, d_head]."""
    del dropout  # eval-mode / p=0.0 -> identity
    B, S, ED = Q.shape
    E, D = n_experts, d_head
    assert ED == E * D, "packed head dim mismatch"

    TQ = min(block_q, S)
    TKV = min(block_kv, S)
    assert S % TQ == 0 and S % TKV == 0, "S must be divisible by the block sizes"

    # Precompute the additive mask bias once (0 keep / -1e30 masked); kernel just adds.
    bias = jnp.where(mask[:S, :S] != 0, jnp.float32(-1e30), jnp.float32(0.0))

    scale = 1.0 / math.sqrt(D)
    kernel = functools.partial(_sparse_flash_kernel,
                               n_experts=E, d_head=D, scale=scale)

    grid = (B, S // TQ, S // TKV)

    out = pl.pallas_call(
        kernel,
        out_shape=jax.ShapeDtypeStruct((B, S, ED), Q.dtype),
        grid=grid,
        in_specs=[
            pl.BlockSpec((1, TQ, ED), lambda b, qi, ki: (b, qi, 0)),   # Q  (query rows)
            pl.BlockSpec((1, TKV, ED), lambda b, qi, ki: (b, ki, 0)),  # K  (key rows)
            pl.BlockSpec((1, TKV, ED), lambda b, qi, ki: (b, ki, 0)),  # V  (key rows)
            pl.BlockSpec((1, TQ, E), lambda b, qi, ki: (b, qi, 0)),    # route (query rows)
            pl.BlockSpec((1, TKV, E), lambda b, qi, ki: (b, ki, 0)),   # route (key rows)
            pl.BlockSpec((TQ, TKV), lambda b, qi, ki: (qi, ki)),       # additive mask bias
        ],
        out_specs=pl.BlockSpec((1, TQ, ED), lambda b, qi, ki: (b, qi, 0)),
        scratch_shapes=[
            pltpu.VMEM((TQ, ED), jnp.float32),   # per-expert output accumulators (packed)
            pltpu.VMEM((TQ, E), jnp.float32),    # running max per expert
            pltpu.VMEM((TQ, E), jnp.float32),    # running sum per expert
        ],
        compiler_params=pltpu.CompilerParams(
            dimension_semantics=("parallel", "parallel", "arbitrary")),
    )(Q, K, V, route_mat, route_mat, bias)

    # Lane-dense [B, S, E*D] from the kernel; single cheap transpose to the module's
    # [B, E, S, D] (keep_shape=False, combine_head=False) layout.
    return out.reshape(B, S, E, D).transpose(0, 2, 1, 3)


def _reference(Q, K, V, route_mat, mask, *, d_head, n_experts):
    B, S, _ = Q.shape
    E, D = n_experts, d_head
    q = Q.reshape(B, S, E, D).transpose(0, 2, 1, 3)
    k = K.reshape(B, S, E, D).transpose(0, 2, 1, 3)
    v = V.reshape(B, S, E, D).transpose(0, 2, 1, 3)
    r = route_mat.transpose(0, 2, 1)[..., None]
    scores = jnp.einsum("beid,bejd->beij", q * r, k) / math.sqrt(D)
    m = mask[:S, :S]
    scores = jnp.where(m[None, None] > 0.0, -jnp.inf, scores)
    p = jax.nn.softmax(scores, axis=-1)
    return jnp.einsum("beij,bejd->beid", p, v * r)


if __name__ == "__main__":
    B, S, E, D = 2, 128, 4, 32  # batch, seq, n_experts, d_head  (E*D = 128 lane-dense)
    key = jax.random.PRNGKey(0)
    kq, kk, kv, kr = jax.random.split(key, 4)

    Q = jax.random.normal(kq, (B, S, E * D), dtype=jnp.float32)
    K = jax.random.normal(kk, (B, S, E * D), dtype=jnp.float32)
    V = jax.random.normal(kv, (B, S, E * D), dtype=jnp.float32)
    route_mat = jax.nn.softmax(
        jax.random.normal(kr, (B, S, E), dtype=jnp.float32), axis=-1)
    # causal mask (1 = masked out), oversized then sliced like the PyTorch code
    mask = jnp.triu(jnp.ones((S + 16, S + 16), dtype=jnp.float32), k=1)

    out = sparse_attention(Q, K, V, route_mat, mask, d_head=D, n_experts=E, dropout=0.0)
    out = jax.block_until_ready(out)

    ref = _reference(Q, K, V, route_mat, mask, d_head=D, n_experts=E)
    assert out.shape == (B, E, S, D)
    # bf16 MXU operands + approx EUP reciprocal -> compare with a correspondingly
    # looser (but still tight for attention) tolerance against the f32 reference.
    assert jnp.allclose(out, ref, atol=2e-2, rtol=2e-2), "mismatch vs reference"

    print("KERNEL_OK")
</pallas_src>

<mosaic_0001>
module attributes {stable_mosaic.version = 11 : i64} {
  func.func @_sparse_flash_kernel(%arg0: i32, %arg1: i32, %arg2: i32, %arg3: memref<1x128x128xf32, #tpu.memory_space<vmem>>, %arg4: memref<1x128x128xf32, #tpu.memory_space<vmem>>, %arg5: memref<1x128x128xf32, #tpu.memory_space<vmem>>, %arg6: memref<1x128x4xf32, #tpu.memory_space<vmem>>, %arg7: memref<1x128x4xf32, #tpu.memory_space<vmem>>, %arg8: memref<128x128xf32, #tpu.memory_space<vmem>>, %arg9: memref<1x128x128xf32, #tpu.memory_space<vmem>>, %arg10: memref<128x128xf32, #tpu.memory_space<vmem>>, %arg11: memref<128x4xf32, #tpu.memory_space<vmem>>, %arg12: memref<128x4xf32, #tpu.memory_space<vmem>>) attributes {dimension_semantics = [#tpu.dimension_semantics<parallel>, #tpu.dimension_semantics<parallel>, #tpu.dimension_semantics<arbitrary>], iteration_bounds = array<i64: 2, 1, 1>, scalar_prefetch = 0 : i64, scratch_operands = 3 : i64, tpu.core_type = #tpu.core_type<tc>, window_params = [{transform_indices = @transform_0, window_bounds = array<i64: 1, 128, 128>}, {transform_indices = @transform_1, window_bounds = array<i64: 1, 128, 128>}, {transform_indices = @transform_2, window_bounds = array<i64: 1, 128, 128>}, {transform_indices = @transform_3, window_bounds = array<i64: 1, 128, 4>}, {transform_indices = @transform_4, window_bounds = array<i64: 1, 128, 4>}, {transform_indices = @transform_5, window_bounds = array<i64: 128, 128>}, {transform_indices = @transform_6, window_bounds = array<i64: 1, 128, 128>}]} {
    %c0_i32 = arith.constant 0 : i32
    %0 = arith.cmpi eq, %arg2, %c0_i32 : i32
    %1 = arith.extui %0 : i1 to i32
    %c0_i32_0 = arith.constant 0 : i32
    %2 = arith.cmpi ne, %1, %c0_i32_0 : i32
    scf.if %2 {
      %cst_80 = arith.constant 0xFF800000 : f32
      %173 = vector.broadcast %cst_80 : f32 to vector<128x4xf32>
      %c0_81 = arith.constant 0 : index
      %c0_82 = arith.constant 0 : index
      %174 = vector.load %arg11[%c0_81, %c0_82] : memref<128x4xf32, #tpu.memory_space<vmem>>, vector<128x4xf32>
      tpu.vector_store %arg11[%c0_81, %c0_82], %173 {strides = array<i32>} : memref<128x4xf32, #tpu.memory_space<vmem>>, vector<128x4xf32>,
      %cst_83 = arith.constant 0.000000e+00 : f32
      %175 = vector.broadcast %cst_83 : f32 to vector<128x4xf32>
      %c0_84 = arith.constant 0 : index
      %c0_85 = arith.constant 0 : index
      %176 = vector.load %arg12[%c0_84, %c0_85] : memref<128x4xf32, #tpu.memory_space<vmem>>, vector<128x4xf32>
      tpu.vector_store %arg12[%c0_84, %c0_85], %175 {strides = array<i32>} : memref<128x4xf32, #tpu.memory_space<vmem>>, vector<128x4xf32>,
      %cst_86 = arith.constant 0.000000e+00 : f32
      %177 = vector.broadcast %cst_86 : f32 to vector<128x128xf32>
      %c0_87 = arith.constant 0 : index
      %c0_88 = arith.constant 0 : index
      %178 = vector.load %arg10[%c0_87, %c0_88] : memref<128x128xf32, #tpu.memory_space<vmem>>, vector<128x128xf32>
      tpu.vector_store %arg10[%c0_87, %c0_88], %177 {strides = array<i32>} : memref<128x128xf32, #tpu.memory_space<vmem>>, vector<128x128xf32>,
    } else {
    }
    %c0 = arith.constant 0 : index
    %c0_1 = arith.constant 0 : index
    %c0_2 = arith.constant 0 : index
    %3 = vector.load %arg3[%c0, %c0_1, %c0_2] : memref<1x128x128xf32, #tpu.memory_space<vmem>>, vector<1x128x128xf32>
    %4 = vector.shape_cast %3 : vector<1x128x128xf32> to vector<128x128xf32>
    %c0_3 = arith.constant 0 : index
    %c0_4 = arith.constant 0 : index
    %c0_5 = arith.constant 0 : index
    %5 = vector.load %arg4[%c0_3, %c0_4, %c0_5] : memref<1x128x128xf32, #tpu.memory_space<vmem>>, vector<1x128x128xf32>
    %6 = vector.shape_cast %5 : vector<1x128x128xf32> to vector<128x128xf32>
    %c0_6 = arith.constant 0 : index
    %c0_7 = arith.constant 0 : index
    %c0_8 = arith.constant 0 : index
    %7 = vector.load %arg5[%c0_6, %c0_7, %c0_8] : memref<1x128x128xf32, #tpu.memory_space<vmem>>, vector<1x128x128xf32>
    %8 = vector.shape_cast %7 : vector<1x128x128xf32> to vector<128x128xf32>
    %c0_9 = arith.constant 0 : index
    %c0_10 = arith.constant 0 : index
    %c0_11 = arith.constant 0 : index
    %9 = vector.load %arg6[%c0_9, %c0_10, %c0_11] : memref<1x128x4xf32, #tpu.memory_space<vmem>>, vector<1x128x4xf32>
    %10 = vector.shape_cast %9 : vector<1x128x4xf32> to vector<128x4xf32>
    %c0_12 = arith.constant 0 : index
    %c0_13 = arith.constant 0 : index
    %c0_14 = arith.constant 0 : index
    %11 = vector.load %arg7[%c0_12, %c0_13, %c0_14] : memref<1x128x4xf32, #tpu.memory_space<vmem>>, vector<1x128x4xf32>
    %12 = vector.shape_cast %11 : vector<1x128x4xf32> to vector<128x4xf32>
    %c0_15 = arith.constant 0 : index
    %c0_16 = arith.constant 0 : index
    %13 = vector.load %arg8[%c0_15, %c0_16] : memref<128x128xf32, #tpu.memory_space<vmem>>, vector<128x128xf32>
    %14 = vector.extract_strided_slice %4 {offsets = [0, 0], sizes = [128, 32], strides = [1, 1]} : vector<128x128xf32> to vector<128x32xf32>
    %15 = vector.extract_strided_slice %10 {offsets = [0, 0], sizes = [128, 1], strides = [1, 1]} : vector<128x4xf32> to vector<128x1xf32>
    %cst = arith.constant 0.176776692 : f32
    %16 = vector.broadcast %cst : f32 to vector<128x1xf32>
    %17 = arith.mulf %15, %16 : vector<128x1xf32>
    %18 = vector.broadcast %17 : vector<128x1xf32> to vector<128x32xf32>
    %19 = arith.mulf %14, %18 : vector<128x32xf32>
    %20 = arith.truncf %19 : vector<128x32xf32> to vector<128x32xbf16>
    %21 = vector.extract_strided_slice %6 {offsets = [0, 0], sizes = [128, 32], strides = [1, 1]} : vector<128x128xf32> to vector<128x32xf32>
    %22 = arith.truncf %21 : vector<128x32xf32> to vector<128x32xbf16>
    %cst_17 = arith.constant dense<0.000000e+00> : vector<128x128xf32>
    %23 = tpu.matmul %20, %22, %cst_17 {dimension_numbers = #tpu.dot_dimension_numbers<[1], [1], [0], [0], [0, 0, 1, 0], [], []>} : vector<128x32xbf16>, vector<128x32xbf16>, vector<128x128xf32> -> vector<128x128xf32>
    %24 = arith.addf %23, %13 : vector<128x128xf32>
    %c0_18 = arith.constant 0 : index
    %c0_19 = arith.constant 0 : index
    %25 = vector.load %arg11[%c0_18, %c0_19] : memref<128x4xf32, #tpu.memory_space<vmem>>, vector<128x1xf32>
    %c0_20 = arith.constant 0 : index
    %c0_21 = arith.constant 0 : index
    %26 = vector.load %arg12[%c0_20, %c0_21] : memref<128x4xf32, #tpu.memory_space<vmem>>, vector<128x1xf32>
    %cst_22 = arith.constant dense<0xFF800000> : vector<128xf32>
    %27 = vector.multi_reduction <maximumf>, %24, %cst_22 [1] : vector<128x128xf32> to vector<128xf32>
    %28 = vector.shape_cast %27 : vector<128xf32> to vector<128x1xf32>
    %29 = arith.maximumf %25, %28 : vector<128x1xf32>
    %30 = arith.subf %25, %29 : vector<128x1xf32>
    %31 = math.exp %30 : vector<128x1xf32>
    %32 = vector.broadcast %29 : vector<128x1xf32> to vector<128x128xf32>
    %33 = arith.subf %24, %32 : vector<128x128xf32>
    %34 = math.exp %33 : vector<128x128xf32>
    %35 = arith.mulf %31, %26 : vector<128x1xf32>
    %cst_23 = arith.constant dense<0.000000e+00> : vector<128xf32>
    %36 = vector.multi_reduction <add>, %34, %cst_23 [1] : vector<128x128xf32> to vector<128xf32>
    %37 = vector.shape_cast %36 : vector<128xf32> to vector<128x1xf32>
    %38 = arith.addf %35, %37 : vector<128x1xf32>
    %c0_24 = arith.constant 0 : index
    %c0_25 = arith.constant 0 : index
    %39 = vector.load %arg12[%c0_24, %c0_25] : memref<128x4xf32, #tpu.memory_space<vmem>>, vector<128x1xf32>
    tpu.vector_store %arg12[%c0_24, %c0_25], %38 {strides = array<i32>} : memref<128x4xf32, #tpu.memory_space<vmem>>, vector<128x1xf32>,
    %c0_26 = arith.constant 0 : index
    %c0_27 = arith.constant 0 : index
    %40 = vector.load %arg11[%c0_26, %c0_27] : memref<128x4xf32, #tpu.memory_space<vmem>>, vector<128x1xf32>
    tpu.vector_store %arg11[%c0_26, %c0_27], %29 {strides = array<i32>} : memref<128x4xf32, #tpu.memory_space<vmem>>, vector<128x1xf32>,
    %41 = vector.extract_strided_slice %8 {offsets = [0, 0], sizes = [128, 32], strides = [1, 1]} : vector<128x128xf32> to vector<128x32xf32>
    %42 = vector.extract_strided_slice %12 {offsets = [0, 0], sizes = [128, 1], strides = [1, 1]} : vector<128x4xf32> to vector<128x1xf32>
    %43 = vector.broadcast %42 : vector<128x1xf32> to vector<128x32xf32>
    %44 = arith.mulf %41, %43 : vector<128x32xf32>
    %45 = arith.truncf %44 : vector<128x32xf32> to vector<128x32xbf16>
    %46 = arith.truncf %34 : vector<128x128xf32> to vector<128x128xbf16>
    %cst_28 = arith.constant dense<0.000000e+00> : vector<128x32xf32>
    %47 = tpu.matmul %46, %45, %cst_28 {dimension_numbers = #tpu.dot_dimension_numbers<[1], [0], [0], [1], [0, 0, 1, 1], [], []>} : vector<128x128xbf16>, vector<128x32xbf16>, vector<128x32xf32> -> vector<128x32xf32>
    %c0_29 = arith.constant 0 : index
    %c0_30 = arith.constant 0 : index
    %48 = vector.load %arg10[%c0_29, %c0_30] : memref<128x128xf32, #tpu.memory_space<vmem>>, vector<128x32xf32>
    %49 = vector.broadcast %31 : vector<128x1xf32> to vector<128x32xf32>
    %50 = arith.mulf %49, %48 : vector<128x32xf32>
    %51 = arith.addf %50, %47 : vector<128x32xf32>
    %c0_31 = arith.constant 0 : index
    %c0_32 = arith.constant 0 : index
    %52 = vector.load %arg10[%c0_31, %c0_32] : memref<128x128xf32, #tpu.memory_space<vmem>>, vector<128x32xf32>
    tpu.vector_store %arg10[%c0_31, %c0_32], %51 {strides = array<i32>} : memref<128x128xf32, #tpu.memory_space<vmem>>, vector<128x32xf32>,
    %53 = vector.extract_strided_slice %4 {offsets = [0, 32], sizes = [128, 32], strides = [1, 1]} : vector<128x128xf32> to vector<128x32xf32>
    %54 = vector.extract_strided_slice %10 {offsets = [0, 1], sizes = [128, 1], strides = [1, 1]} : vector<128x4xf32> to vector<128x1xf32>
    %cst_33 = arith.constant 0.176776692 : f32
    %55 = vector.broadcast %cst_33 : f32 to vector<128x1xf32>
    %56 = arith.mulf %54, %55 : vector<128x1xf32>
    %57 = vector.broadcast %56 : vector<128x1xf32> to vector<128x32xf32>
    %58 = arith.mulf %53, %57 : vector<128x32xf32>
    %59 = arith.truncf %58 : vector<128x32xf32> to vector<128x32xbf16>
    %60 = vector.extract_strided_slice %6 {offsets = [0, 32], sizes = [128, 32], strides = [1, 1]} : vector<128x128xf32> to vector<128x32xf32>
    %61 = arith.truncf %60 : vector<128x32xf32> to vector<128x32xbf16>
    %cst_34 = arith.constant dense<0.000000e+00> : vector<128x128xf32>
    %62 = tpu.matmul %59, %61, %cst_34 {dimension_numbers = #tpu.dot_dimension_numbers<[1], [1], [0], [0], [0, 0, 1, 0], [], []>} : vector<128x32xbf16>, vector<128x32xbf16>, vector<128x128xf32> -> vector<128x128xf32>
    %63 = arith.addf %62, %13 : vector<128x128xf32>
    %c0_35 = arith.constant 0 : index
    %c1 = arith.constant 1 : index
    %64 = vector.load %arg11[%c0_35, %c1] : memref<128x4xf32, #tpu.memory_space<vmem>>, vector<128x1xf32>
    %c0_36 = arith.constant 0 : index
    %c1_37 = arith.constant 1 : index
    %65 = vector.load %arg12[%c0_36, %c1_37] : memref<128x4xf32, #tpu.memory_space<vmem>>, vector<128x1xf32>
    %cst_38 = arith.constant dense<0xFF800000> : vector<128xf32>
    %66 = vector.multi_reduction <maximumf>, %63, %cst_38 [1] : vector<128x128xf32> to vector<128xf32>
    %67 = vector.shape_cast %66 : vector<128xf32> to vector<128x1xf32>
    %68 = arith.maximumf %64, %67 : vector<128x1xf32>
    %69 = arith.subf %64, %68 : vector<128x1xf32>
    %70 = math.exp %69 : vector<128x1xf32>
    %71 = vector.broadcast %68 : vector<128x1xf32> to vector<128x128xf32>
    %72 = arith.subf %63, %71 : vector<128x128xf32>
    %73 = math.exp %72 : vector<128x128xf32>
    %74 = arith.mulf %70, %65 : vector<128x1xf32>
    %cst_39 = arith.constant dense<0.000000e+00> : vector<128xf32>
    %75 = vector.multi_reduction <add>, %73, %cst_39 [1] : vector<128x128xf32> to vector<128xf32>
    %76 = vector.shape_cast %75 : vector<128xf32> to vector<128x1xf32>
    %77 = arith.addf %74, %76 : vector<128x1xf32>
    %c0_40 = arith.constant 0 : index
    %c1_41 = arith.constant 1 : index
    %78 = vector.load %arg12[%c0_40, %c1_41] : memref<128x4xf32, #tpu.memory_space<vmem>>, vector<128x1xf32>
    tpu.vector_store %arg12[%c0_40, %c1_41], %77 {strides = array<i32>} : memref<128x4xf32, #tpu.memory_space<vmem>>, vector<128x1xf32>,
    %c0_42 = arith.constant 0 : index
    %c1_43 = arith.constant 1 : index
    %79 = vector.load %arg11[%c0_42, %c1_43] : memref<128x4xf32, #tpu.memory_space<vmem>>, vector<128x1xf32>
    tpu.vector_store %arg11[%c0_42, %c1_43], %68 {strides = array<i32>} : memref<128x4xf32, #tpu.memory_space<vmem>>, vector<128x1xf32>,
    %80 = vector.extract_strided_slice %8 {offsets = [0, 32], sizes = [128, 32], strides = [1, 1]} : vector<128x128xf32> to vector<128x32xf32>
    %81 = vector.extract_strided_slice %12 {offsets = [0, 1], sizes = [128, 1], strides = [1, 1]} : vector<128x4xf32> to vector<128x1xf32>
    %82 = vector.broadcast %81 : vector<128x1xf32> to vector<128x32xf32>
    %83 = arith.mulf %80, %82 : vector<128x32xf32>
    %84 = arith.truncf %83 : vector<128x32xf32> to vector<128x32xbf16>
    %85 = arith.truncf %73 : vector<128x128xf32> to vector<128x128xbf16>
    %cst_44 = arith.constant dense<0.000000e+00> : vector<128x32xf32>
    %86 = tpu.matmul %85, %84, %cst_44 {dimension_numbers = #tpu.dot_dimension_numbers<[1], [0], [0], [1], [0, 0, 1, 1], [], []>} : vector<128x128xbf16>, vector<128x32xbf16>, vector<128x32xf32> -> vector<128x32xf32>
    %c0_45 = arith.constant 0 : index
    %c32 = arith.constant 32 : index
    %87 = vector.load %arg10[%c0_45, %c32] : memref<128x128xf32, #tpu.memory_space<vmem>>, vector<128x32xf32>
    %88 = vector.broadcast %70 : vector<128x1xf32> to vector<128x32xf32>
    %89 = arith.mulf %88, %87 : vector<128x32xf32>
    %90 = arith.addf %89, %86 : vector<128x32xf32>
    %c0_46 = arith.constant 0 : index
    %c32_47 = arith.constant 32 : index
    %91 = vector.load %arg10[%c0_46, %c32_47] : memref<128x128xf32, #tpu.memory_space<vmem>>, vector<128x32xf32>
    tpu.vector_store %arg10[%c0_46, %c32_47], %90 {strides = array<i32>} : memref<128x128xf32, #tpu.memory_space<vmem>>, vector<128x32xf32>,
    %92 = vector.extract_strided_slice %4 {offsets = [0, 64], sizes = [128, 32], strides = [1, 1]} : vector<128x128xf32> to vector<128x32xf32>
    %93 = vector.extract_strided_slice %10 {offsets = [0, 2], sizes = [128, 1], strides = [1, 1]} : vector<128x4xf32> to vector<128x1xf32>
    %cst_48 = arith.constant 0.176776692 : f32
    %94 = vector.broadcast %cst_48 : f32 to vector<128x1xf32>
    %95 = arith.mulf %93, %94 : vector<128x1xf32>
    %96 = vector.broadcast %95 : vector<128x1xf32> to vector<128x32xf32>
    %97 = arith.mulf %92, %96 : vector<128x32xf32>
    %98 = arith.truncf %97 : vector<128x32xf32> to vector<128x32xbf16>
    %99 = vector.extract_strided_slice %6 {offsets = [0, 64], sizes = [128, 32], strides = [1, 1]} : vector<128x128xf32> to vector<128x32xf32>
    %100 = arith.truncf %99 : vector<128x32xf32> to vector<128x32xbf16>
    %cst_49 = arith.constant dense<0.000000e+00> : vector<128x128xf32>
    %101 = tpu.matmul %98, %100, %cst_49 {dimension_numbers = #tpu.dot_dimension_numbers<[1], [1], [0], [0], [0, 0, 1, 0], [], []>} : vector<128x32xbf16>, vector<128x32xbf16>, vector<128x128xf32> -> vector<128x128xf32>
    %102 = arith.addf %101, %13 : vector<128x128xf32>
    %c0_50 = arith.constant 0 : index
    %c2 = arith.constant 2 : index
    %103 = vector.load %arg11[%c0_50, %c2] : memref<128x4xf32, #tpu.memory_space<vmem>>, vector<128x1xf32>
    %c0_51 = arith.constant 0 : index
    %c2_52 = arith.constant 2 : index
    %104 = vector.load %arg12[%c0_51, %c2_52] : memref<128x4xf32, #tpu.memory_space<vmem>>, vector<128x1xf32>
    %cst_53 = arith.constant dense<0xFF800000> : vector<128xf32>
    %105 = vector.multi_reduction <maximumf>, %102, %cst_53 [1] : vector<128x128xf32> to vector<128xf32>
    %106 = vector.shape_cast %105 : vector<128xf32> to vector<128x1xf32>
    %107 = arith.maximumf %103, %106 : vector<128x1xf32>
    %108 = arith.subf %103, %107 : vector<128x1xf32>
    %109 = math.exp %108 : vector<128x1xf32>
    %110 = vector.broadcast %107 : vector<128x1xf32> to vector<128x128xf32>
    %111 = arith.subf %102, %110 : vector<128x128xf32>
    %112 = math.exp %111 : vector<128x128xf32>
    %113 = arith.mulf %109, %104 : vector<128x1xf32>
    %cst_54 = arith.constant dense<0.000000e+00> : vector<128xf32>
    %114 = vector.multi_reduction <add>, %112, %cst_54 [1] : vector<128x128xf32> to vector<128xf32>
    %115 = vector.shape_cast %114 : vector<128xf32> to vector<128x1xf32>
    %116 = arith.addf %113, %115 : vector<128x1xf32>
    %c0_55 = arith.constant 0 : index
    %c2_56 = arith.constant 2 : index
    %117 = vector.load %arg12[%c0_55, %c2_56] : memref<128x4xf32, #tpu.memory_space<vmem>>, vector<128x1xf32>
    tpu.vector_store %arg12[%c0_55, %c2_56], %116 {strides = array<i32>} : memref<128x4xf32, #tpu.memory_space<vmem>>, vector<128x1xf32>,
    %c0_57 = arith.constant 0 : index
    %c2_58 = arith.constant 2 : index
    %118 = vector.load %arg11[%c0_57, %c2_58] : memref<128x4xf32, #tpu.memory_space<vmem>>, vector<128x1xf32>
    tpu.vector_store %arg11[%c0_57, %c2_58], %107 {strides = array<i32>} : memref<128x4xf32, #tpu.memory_space<vmem>>, vector<128x1xf32>,
    %119 = vector.extract_strided_slice %8 {offsets = [0, 64], sizes = [128, 32], strides = [1, 1]} : vector<128x128xf32> to vector<128x32xf32>
    %120 = vector.extract_strided_slice %12 {offsets = [0, 2], sizes = [128, 1], strides = [1, 1]} : vector<128x4xf32> to vector<128x1xf32>
    %121 = vector.broadcast %120 : vector<128x1xf32> to vector<128x32xf32>
    %122 = arith.mulf %119, %121 : vector<128x32xf32>
    %123 = arith.truncf %122 : vector<128x32xf32> to vector<128x32xbf16>
    %124 = arith.truncf %112 : vector<128x128xf32> to vector<128x128xbf16>
    %cst_59 = arith.constant dense<0.000000e+00> : vector<128x32xf32>
    %125 = tpu.matmul %124, %123, %cst_59 {dimension_numbers = #tpu.dot_dimension_numbers<[1], [0], [0], [1], [0, 0, 1, 1], [], []>} : vector<128x128xbf16>, vector<128x32xbf16>, vector<128x32xf32> -> vector<128x32xf32>
    %c0_60 = arith.constant 0 : index
    %c64 = arith.constant 64 : index
    %126 = vector.load %arg10[%c0_60, %c64] : memref<128x128xf32, #tpu.memory_space<vmem>>, vector<128x32xf32>
    %127 = vector.broadcast %109 : vector<128x1xf32> to vector<128x32xf32>
    %128 = arith.mulf %127, %126 : vector<128x32xf32>
    %129 = arith.addf %128, %125 : vector<128x32xf32>
    %c0_61 = arith.constant 0 : index
    %c64_62 = arith.constant 64 : index
    %130 = vector.load %arg10[%c0_61, %c64_62] : memref<128x128xf32, #tpu.memory_space<vmem>>, vector<128x32xf32>
    tpu.vector_store %arg10[%c0_61, %c64_62], %129 {strides = array<i32>} : memref<128x128xf32, #tpu.memory_space<vmem>>, vector<128x32xf32>,
    %131 = vector.extract_strided_slice %4 {offsets = [0, 96], sizes = [128, 32], strides = [1, 1]} : vector<128x128xf32> to vector<128x32xf32>
    %132 = vector.extract_strided_slice %10 {offsets = [0, 3], sizes = [128, 1], strides = [1, 1]} : vector<128x4xf32> to vector<128x1xf32>
    %cst_63 = arith.constant 0.176776692 : f32
    %133 = vector.broadcast %cst_63 : f32 to vector<128x1xf32>
    %134 = arith.mulf %132, %133 : vector<128x1xf32>
    %135 = vector.broadcast %134 : vector<128x1xf32> to vector<128x32xf32>
    %136 = arith.mulf %131, %135 : vector<128x32xf32>
    %137 = arith.truncf %136 : vector<128x32xf32> to vector<128x32xbf16>
    %138 = vector.extract_strided_slice %6 {offsets = [0, 96], sizes = [128, 32], strides = [1, 1]} : vector<128x128xf32> to vector<128x32xf32>
    %139 = arith.truncf %138 : vector<128x32xf32> to vector<128x32xbf16>
    %cst_64 = arith.constant dense<0.000000e+00> : vector<128x128xf32>
    %140 = tpu.matmul %137, %139, %cst_64 {dimension_numbers = #tpu.dot_dimension_numbers<[1], [1], [0], [0], [0, 0, 1, 0], [], []>} : vector<128x32xbf16>, vector<128x32xbf16>, vector<128x128xf32> -> vector<128x128xf32>
    %141 = arith.addf %140, %13 : vector<128x128xf32>
    %c0_65 = arith.constant 0 : index
    %c3 = arith.constant 3 : index
    %142 = vector.load %arg11[%c0_65, %c3] : memref<128x4xf32, #tpu.memory_space<vmem>>, vector<128x1xf32>
    %c0_66 = arith.constant 0 : index
    %c3_67 = arith.constant 3 : index
    %143 = vector.load %arg12[%c0_66, %c3_67] : memref<128x4xf32, #tpu.memory_space<vmem>>, vector<128x1xf32>
    %cst_68 = arith.constant dense<0xFF800000> : vector<128xf32>
    %144 = vector.multi_reduction <maximumf>, %141, %cst_68 [1] : vector<128x128xf32> to vector<128xf32>
    %145 = vector.shape_cast %144 : vector<128xf32> to vector<128x1xf32>
    %146 = arith.maximumf %142, %145 : vector<128x1xf32>
    %147 = arith.subf %142, %146 : vector<128x1xf32>
    %148 = math.exp %147 : vector<128x1xf32>
    %149 = vector.broadcast %146 : vector<128x1xf32> to vector<128x128xf32>
    %150 = arith.subf %141, %149 : vector<128x128xf32>
    %151 = math.exp %150 : vector<128x128xf32>
    %152 = arith.mulf %148, %143 : vector<128x1xf32>
    %cst_69 = arith.constant dense<0.000000e+00> : vector<128xf32>
    %153 = vector.multi_reduction <add>, %151, %cst_69 [1] : vector<128x128xf32> to vector<128xf32>
    %154 = vector.shape_cast %153 : vector<128xf32> to vector<128x1xf32>
    %155 = arith.addf %152, %154 : vector<128x1xf32>
    %c0_70 = arith.constant 0 : index
    %c3_71 = arith.constant 3 : index
    %156 = vector.load %arg12[%c0_70, %c3_71] : memref<128x4xf32, #tpu.memory_space<vmem>>, vector<128x1xf32>
    tpu.vector_store %arg12[%c0_70, %c3_71], %155 {strides = array<i32>} : memref<128x4xf32, #tpu.memory_space<vmem>>, vector<128x1xf32>,
    %c0_72 = arith.constant 0 : index
    %c3_73 = arith.constant 3 : index
    %157 = vector.load %arg11[%c0_72, %c3_73] : memref<128x4xf32, #tpu.memory_space<vmem>>, vector<128x1xf32>
    tpu.vector_store %arg11[%c0_72, %c3_73], %146 {strides = array<i32>} : memref<128x4xf32, #tpu.memory_space<vmem>>, vector<128x1xf32>,
    %158 = vector.extract_strided_slice %8 {offsets = [0, 96], sizes = [128, 32], strides = [1, 1]} : vector<128x128xf32> to vector<128x32xf32>
    %159 = vector.extract_strided_slice %12 {offsets = [0, 3], sizes = [128, 1], strides = [1, 1]} : vector<128x4xf32> to vector<128x1xf32>
    %160 = vector.broadcast %159 : vector<128x1xf32> to vector<128x32xf32>
    %161 = arith.mulf %158, %160 : vector<128x32xf32>
    %162 = arith.truncf %161 : vector<128x32xf32> to vector<128x32xbf16>
    %163 = arith.truncf %151 : vector<128x128xf32> to vector<128x128xbf16>
    %cst_74 = arith.constant dense<0.000000e+00> : vector<128x32xf32>
    %164 = tpu.matmul %163, %162, %cst_74 {dimension_numbers = #tpu.dot_dimension_numbers<[1], [0], [0], [1], [0, 0, 1, 1], [], []>} : vector<128x128xbf16>, vector<128x32xbf16>, vector<128x32xf32> -> vector<128x32xf32>
    %c0_75 = arith.constant 0 : index
    %c96 = arith.constant 96 : index
    %165 = vector.load %arg10[%c0_75, %c96] : memref<128x128xf32, #tpu.memory_space<vmem>>, vector<128x32xf32>
    %166 = vector.broadcast %148 : vector<128x1xf32> to vector<128x32xf32>
    %167 = arith.mulf %166, %165 : vector<128x32xf32>
    %168 = arith.addf %167, %164 : vector<128x32xf32>
    %c0_76 = arith.constant 0 : index
    %c96_77 = arith.constant 96 : index
    %169 = vector.load %arg10[%c0_76, %c96_77] : memref<128x128xf32, #tpu.memory_space<vmem>>, vector<128x32xf32>
    tpu.vector_store %arg10[%c0_76, %c96_77], %168 {strides = array<i32>} : memref<128x128xf32, #tpu.memory_space<vmem>>, vector<128x32xf32>,
    %c0_i32_78 = arith.constant 0 : i32
    %170 = arith.cmpi eq, %arg2, %c0_i32_78 : i32
    %171 = arith.extui %170 : i1 to i32
    %c0_i32_79 = arith.constant 0 : i32
    %172 = arith.cmpi ne, %171, %c0_i32_79 : i32
    scf.if %172 {
      %c0_80 = arith.constant 0 : index
      %c0_81 = arith.constant 0 : index
      %173 = vector.load %arg12[%c0_80, %c0_81] : memref<128x4xf32, #tpu.memory_space<vmem>>, vector<128x1xf32>
      %174 = tpu.reciprocal %173 {approx = true} : vector<128x1xf32> -> vector<128x1xf32>
      %c0_82 = arith.constant 0 : index
      %c0_83 = arith.constant 0 : index
      %175 = vector.load %arg10[%c0_82, %c0_83] : memref<128x128xf32, #tpu.memory_space<vmem>>, vector<128x32xf32>
      %176 = vector.broadcast %174 : vector<128x1xf32> to vector<128x32xf32>
      %177 = arith.mulf %175, %176 : vector<128x32xf32>
      %c0_84 = arith.constant 0 : index
      %c0_85 = arith.constant 0 : index
      %c0_86 = arith.constant 0 : index
      %178 = vector.load %arg9[%c0_84, %c0_85, %c0_86] : memref<1x128x128xf32, #tpu.memory_space<vmem>>, vector<1x128x32xf32>
      %179 = vector.shape_cast %178 : vector<1x128x32xf32> to vector<128x32xf32>
      %180 = vector.shape_cast %177 : vector<128x32xf32> to vector<1x128x32xf32>
      tpu.vector_store %arg9[%c0_84, %c0_85, %c0_86], %180 {strides = array<i32>} : memref<1x128x128xf32, #tpu.memory_space<vmem>>, vector<1x128x32xf32>,
      %c0_87 = arith.constant 0 : index
      %c1_88 = arith.constant 1 : index
      %181 = vector.load %arg12[%c0_87, %c1_88] : memref<128x4xf32, #tpu.memory_space<vmem>>, vector<128x1xf32>
      %182 = tpu.reciprocal %181 {approx = true} : vector<128x1xf32> -> vector<128x1xf32>
      %c0_89 = arith.constant 0 : index
      %c32_90 = arith.constant 32 : index
      %183 = vector.load %arg10[%c0_89, %c32_90] : memref<128x128xf32, #tpu.memory_space<vmem>>, vector<128x32xf32>
      %184 = vector.broadcast %182 : vector<128x1xf32> to vector<128x32xf32>
      %185 = arith.mulf %183, %184 : vector<128x32xf32>
      %c0_91 = arith.constant 0 : index
      %c0_92 = arith.constant 0 : index
      %c32_93 = arith.constant 32 : index
      %186 = vector.load %arg9[%c0_91, %c0_92, %c32_93] : memref<1x128x128xf32, #tpu.memory_space<vmem>>, vector<1x128x32xf32>
      %187 = vector.shape_cast %186 : vector<1x128x32xf32> to vector<128x32xf32>
      %188 = vector.shape_cast %185 : vector<128x32xf32> to vector<1x128x32xf32>
      tpu.vector_store %arg9[%c0_91, %c0_92, %c32_93], %188 {strides = array<i32>} : memref<1x128x128xf32, #tpu.memory_space<vmem>>, vector<1x128x32xf32>,
      %c0_94 = arith.constant 0 : index
      %c2_95 = arith.constant 2 : index
      %189 = vector.load %arg12[%c0_94, %c2_95] : memref<128x4xf32, #tpu.memory_space<vmem>>, vector<128x1xf32>
      %190 = tpu.reciprocal %189 {approx = true} : vector<128x1xf32> -> vector<128x1xf32>
      %c0_96 = arith.constant 0 : index
      %c64_97 = arith.constant 64 : index
      %191 = vector.load %arg10[%c0_96, %c64_97] : memref<128x128xf32, #tpu.memory_space<vmem>>, vector<128x32xf32>
      %192 = vector.broadcast %190 : vector<128x1xf32> to vector<128x32xf32>
      %193 = arith.mulf %191, %192 : vector<128x32xf32>
      %c0_98 = arith.constant 0 : index
      %c0_99 = arith.constant 0 : index
      %c64_100 = arith.constant 64 : index
      %194 = vector.load %arg9[%c0_98, %c0_99, %c64_100] : memref<1x128x128xf32, #tpu.memory_space<vmem>>, vector<1x128x32xf32>
      %195 = vector.shape_cast %194 : vector<1x128x32xf32> to vector<128x32xf32>
      %196 = vector.shape_cast %193 : vector<128x32xf32> to vector<1x128x32xf32>
      tpu.vector_store %arg9[%c0_98, %c0_99, %c64_100], %196 {strides = array<i32>} : memref<1x128x128xf32, #tpu.memory_space<vmem>>, vector<1x128x32xf32>,
      %c0_101 = arith.constant 0 : index
      %c3_102 = arith.constant 3 : index
      %197 = vector.load %arg12[%c0_101, %c3_102] : memref<128x4xf32, #tpu.memory_space<vmem>>, vector<128x1xf32>
      %198 = tpu.reciprocal %197 {approx = true} : vector<128x1xf32> -> vector<128x1xf32>
      %c0_103 = arith.constant 0 : index
      %c96_104 = arith.constant 96 : index
      %199 = vector.load %arg10[%c0_103, %c96_104] : memref<128x128xf32, #tpu.memory_space<vmem>>, vector<128x32xf32>
      %200 = vector.broadcast %198 : vector<128x1xf32> to vector<128x32xf32>
      %201 = arith.mulf %199, %200 : vector<128x32xf32>
      %c0_105 = arith.constant 0 : index
      %c0_106 = arith.constant 0 : index
      %c96_107 = arith.constant 96 : index
      %202 = vector.load %arg9[%c0_105, %c0_106, %c96_107] : memref<1x128x128xf32, #tpu.memory_space<vmem>>, vector<1x128x32xf32>
      %203 = vector.shape_cast %202 : vector<1x128x32xf32> to vector<128x32xf32>
      %204 = vector.shape_cast %201 : vector<128x32xf32> to vector<1x128x32xf32>
      tpu.vector_store %arg9[%c0_105, %c0_106, %c96_107], %204 {strides = array<i32>} : memref<1x128x128xf32, #tpu.memory_space<vmem>>, vector<1x128x32xf32>,
    } else {
    }
    return
  }
  func.func @transform_0(%arg0: i32, %arg1: i32, %arg2: i32) -> (i32, i32, i32) {
    %c0_i32 = arith.constant 0 : i32
    %c0_i32_0 = arith.constant 0 : i32
    return %arg0, %arg1, %c0_i32 : i32, i32, i32
  }
  func.func @transform_1(%arg0: i32, %arg1: i32, %arg2: i32) -> (i32, i32, i32) {
    %c0_i32 = arith.constant 0 : i32
    %c0_i32_0 = arith.constant 0 : i32
    return %arg0, %arg2, %c0_i32 : i32, i32, i32
  }
  func.func @transform_2(%arg0: i32, %arg1: i32, %arg2: i32) -> (i32, i32, i32) {
    %c0_i32 = arith.constant 0 : i32
    %c0_i32_0 = arith.constant 0 : i32
    return %arg0, %arg2, %c0_i32 : i32, i32, i32
  }
  func.func @transform_3(%arg0: i32, %arg1: i32, %arg2: i32) -> (i32, i32, i32) {
    %c0_i32 = arith.constant 0 : i32
    %c0_i32_0 = arith.constant 0 : i32
    return %arg0, %arg1, %c0_i32 : i32, i32, i32
  }
  func.func @transform_4(%arg0: i32, %arg1: i32, %arg2: i32) -> (i32, i32, i32) {
    %c0_i32 = arith.constant 0 : i32
    %c0_i32_0 = arith.constant 0 : i32
    return %arg0, %arg2, %c0_i32 : i32, i32, i32
  }
  func.func @transform_5(%arg0: i32, %arg1: i32, %arg2: i32) -> (i32, i32) {
    %c0_i32 = arith.constant 0 : i32
    return %arg1, %arg2 : i32, i32
  }
  func.func @transform_6(%arg0: i32, %arg1: i32, %arg2: i32) -> (i32, i32, i32) {
    %c0_i32 = arith.constant 0 : i32
    %c0_i32_0 = arith.constant 0 : i32
    return %arg0, %arg1, %c0_i32 : i32, i32, i32
  }
}

</mosaic_0001>

<llo_original>
// kernel: tpu_custom_call.1
$region0: #{tpu_custom_call.1}
  #allocation0 [shape = 'u32[]', space=smem, size = 0x4, offset = 0x4, fixed_abs, tag = 'smem constant byte address 0x4 - core index']
  #allocation1 [shape = 'u32[144,128]{1,0:T(1,128)}', space=vmem, size = 0x12000, scoped, tag = 'internal scratch']
  #allocation2 [shape = 'f32[128,128]{1,0:T(8,128)}', space=vmem, size = 0x10000, scoped, tag = 'scratch operand']
  #allocation3 [shape = 'f32[128,4]{1,0:T(8,128)}', space=vmem, size = 0x10000, scoped, tag = 'scratch operand']
  #allocation4 [shape = 'f32[128,4]{1,0:T(8,128)}', space=vmem, size = 0x10000, scoped, tag = 'scratch operand']
  %s0 = inlined_call_operand.vmem [shape: f32[2,128,128], index: 0, kind: input, shape index: {}]
  %s1 = inlined_call_operand.vmem [shape: f32[2,128,128], index: 1, kind: input, shape index: {}]
  %s2 = inlined_call_operand.hbm [shape: f32[2,128,128], index: 2, kind: input, shape index: {}]
  %s3 = inlined_call_operand.vmem [shape: f32[2,128,4], index: 3, kind: input, shape index: {}]
  %s4 = inlined_call_operand.vmem [shape: f32[2,128,4], index: 4, kind: input, shape index: {}]
  %s5 = inlined_call_operand.hbm [shape: f32[128,128], index: 5, kind: input, shape index: {}]
  %s6 = inlined_call_operand.hbm [shape: f32[2,128,128], index: 6, kind: output, shape index: {}]
  %s7 = sld [smem:[#allocation0]]
  $region73: #{tpu_custom_call.1} parent=0
    _
  %s9 = ssub.s32 1, %s7
  %s10 = scalar_select 0, %s9, %s7
  $region1: #{tpu_custom_call.1} parent=0
    #allocation5 [shape = 'u8[131072]{0}', space=vmem, size = 0x20000, scoped, tag = 'input window, operand 2']
    #allocation6 [shape = 's32[2]{0}', space=sflag, size = 0x8, scoped, tag = 'scoped memory for tpu_custom_call.1']
    #allocation7 [shape = 's32[2]{0}', space=sflag, size = 0x8, scoped, tag = 'scoped memory for tpu_custom_call.1']
    #allocation8 [shape = 'u8[65536]{0}', space=vmem, size = 0x10000, scoped, tag = 'input window, operand 5, single buffered']
    #allocation9 [shape = 's32[1]{0}', space=sflag, size = 0x4, scoped, tag = 'scoped memory for tpu_custom_call.1']
    #allocation10 [shape = 'u8[131072]{0}', space=vmem, size = 0x20000, scoped, tag = 'output window, operand 0']
    %11 = vsyncpa [#allocation6], 0
    %s12 = scalar_lea.sflag [#allocation6], 1
    %13 = vsyncpa %s12, 0
    %14 = vsyncpa [#allocation9], 0
    %15 = vsyncpa [#allocation7], 0
    %s16 = scalar_lea.sflag [#allocation7], 1
    %17 = vsyncpa %s16, 0
    loop: start=0, step=1, limit=4
    $region2: #{tpu_custom_call.1} parent=1 // loop_pre_header
      _
    $region3: #{tpu_custom_call.1} parent=1 // loop_header
      %s19 = sphi 0, %s23
      %p20 = scmp.ge.s32.totalorder %s19, 4
      %s26 = sphi 0, %s45
      %s27 = sphi 0, %s41
      %s28 = sphi 0, %s37
      %s29 = sphi 0, %s26
      %s30 = sphi 0, %s27
      %s31 = sphi 0, %s28
      %s32 = sphi 0, %s29
      %s33 = sphi 0, %s30
      %s34 = sphi 0, %s31
      %s50 = sphi 0, %s52
      %s53 = sphi 0, %s50
      %s54 = sphi 0, %s53
      %s70 = sphi 0, %s54
      %s78 = sphi 0, %s80
      %s81 = sphi 0, %s78
      %s82 = sphi 0, %s81
      %s98 = sphi 0, %s82
      %s106 = sphi 0, %s108
      %s109 = sphi 0, %s106
      %s110 = sphi 0, %s109
      %s126 = sphi 0, %s110
      %s134 = sphi 0, %s136
      %s137 = sphi 0, %s134
      %s138 = sphi 0, %s137
      %s154 = sphi 0, %s138
      %s162 = sphi 0, %s164
      %s165 = sphi 0, %s162
      %s166 = sphi 0, %s165
      %s182 = sphi 0, %s166
      %s190 = sphi 0, %s192
      %s193 = sphi 0, %s190
      %s194 = sphi 0, %s193
      %s210 = sphi 0, %s194
      %s218 = sphi 0, %s220
      %s221 = sphi 0, %s218
      %s222 = sphi 0, %s221
      %s238 = sphi 0, %s222
    $region4: #{tpu_custom_call.1} parent=1 // loop_header_branch
      %22 = sbr.rel (%p20) target = $region8
    $region5: #{tpu_custom_call.1} parent=1 // loop_body
      %s24 = ssub.s32 %s19, 1
      %s25 = ssub.s32 %s19, 2
      %s35 = sadd.s32 1, %s28
      %p36 = scmp.ge.s32.totalorder %s35, 1
      %s37 = scalar_select %p36, 0, %s35
      %s38 = sadd.s32 1, %s27
      %s39 = scalar_select %p36, %s38, %s27
      %p40 = scmp.ge.s32.totalorder %s39, 1
      %s41 = scalar_select %p40, 0, %s39
      %s42 = sadd.s32 1, %s26
      %s43 = scalar_select %p40, %s42, %s26
      %p44 = scmp.ge.s32.totalorder %s43, 2
      %s45 = scalar_select %p44, 0, %s43
      %s46 = ssub.s32 %s26, %s45
      %s47 = ssub.s32 %s27, %s41
      %s48 = sor.u32 %s46, %s47
      %p49 = scmp.eq.s32.totalorder %s48, 0
      %s51 = sadd.s32 %s50, 1
      %s52 = scalar_select %p49, %s50, %s51
      %p55 = pneg %p49
      %p56 = scmp.eq.s32.totalorder %s19, 1
      %p57 = por %p55, %p56
      %p58 = scmp.ne.s32.totalorder %s50, %s53
      %p59 = scmp.eq.s32.totalorder %s19, 0
      %p60 = por %p58, %p59
      %p61 = scmp.ne.s32.totalorder %s50, %s53
      %p62 = scmp.eq.s32.totalorder %s24, 1
      %p63 = por %p61, %p62
      %p64 = scmp.ne.s32.totalorder %s53, %s54
      %p65 = scmp.eq.s32.totalorder %s24, 0
      %p66 = por %p64, %p65
      %p67 = scmp.ne.s32.totalorder %s53, %s54
      %p68 = scmp.eq.s32.totalorder %s25, 1
      %p69 = por %p67, %p68
      %p71 = scmp.ne.s32.totalorder %s54, %s70
      %p72 = scmp.eq.s32.totalorder %s25, 0
      %p73 = por %p71, %p72
      %s74 = ssub.s32 %s26, %s45
      %s75 = ssub.s32 %s28, %s37
      %s76 = sor.u32 %s74, %s75
      %p77 = scmp.eq.s32.totalorder %s76, 0
      %s79 = sadd.s32 %s78, 1
      %s80 = scalar_select %p77, %s78, %s79
      %p83 = pneg %p77
      %p84 = scmp.eq.s32.totalorder %s19, 1
      %p85 = por %p83, %p84
      %p86 = scmp.ne.s32.totalorder %s78, %s81
      %p87 = scmp.eq.s32.totalorder %s19, 0
      %p88 = por %p86, %p87
      %p89 = scmp.ne.s32.totalorder %s78, %s81
      %p90 = scmp.eq.s32.totalorder %s24, 1
      %p91 = por %p89, %p90
      %p92 = scmp.ne.s32.totalorder %s81, %s82
      %p93 = scmp.eq.s32.totalorder %s24, 0
      %p94 = por %p92, %p93
      %p95 = scmp.ne.s32.totalorder %s81, %s82
      %p96 = scmp.eq.s32.totalorder %s25, 1
      %p97 = por %p95, %p96
      %p99 = scmp.ne.s32.totalorder %s82, %s98
      %p100 = scmp.eq.s32.totalorder %s25, 0
      %p101 = por %p99, %p100
      %s102 = ssub.s32 %s26, %s45
      %s103 = ssub.s32 %s28, %s37
      %s104 = sor.u32 %s102, %s103
      %p105 = scmp.eq.s32.totalorder %s104, 0
      %s107 = sadd.s32 %s106, 1
      %s108 = scalar_select %p105, %s106, %s107
      %p111 = pneg %p105
      %p112 = scmp.eq.s32.totalorder %s19, 1
      %p113 = por %p111, %p112
      %p114 = scmp.ne.s32.totalorder %s106, %s109
      %p115 = scmp.eq.s32.totalorder %s19, 0
      %p116 = por %p114, %p115
      %p117 = scmp.ne.s32.totalorder %s106, %s109
      %p118 = scmp.eq.s32.totalorder %s24, 1
      %p119 = por %p117, %p118
      %p120 = scmp.ne.s32.totalorder %s109, %s110
      %p121 = scmp.eq.s32.totalorder %s24, 0
      %p122 = por %p120, %p121
      %p123 = scmp.ne.s32.totalorder %s109, %s110
      %p124 = scmp.eq.s32.totalorder %s25, 1
      %p125 = por %p123, %p124
      %p127 = scmp.ne.s32.totalorder %s110, %s126
      %p128 = scmp.eq.s32.totalorder %s25, 0
      %p129 = por %p127, %p128
      %s130 = ssub.s32 %s26, %s45
      %s131 = ssub.s32 %s27, %s41
      %s132 = sor.u32 %s130, %s131
      %p133 = scmp.eq.s32.totalorder %s132, 0
      %s135 = sadd.s32 %s134, 1
      %s136 = scalar_select %p133, %s134, %s135
      %p139 = pneg %p133
      %p140 = scmp.eq.s32.totalorder %s19, 1
      %p141 = por %p139, %p140
      %p142 = scmp.ne.s32.totalorder %s134, %s137
      %p143 = scmp.eq.s32.totalorder %s19, 0
      %p144 = por %p142, %p143
      %p145 = scmp.ne.s32.totalorder %s134, %s137
      %p146 = scmp.eq.s32.totalorder %s24, 1
      %p147 = por %p145, %p146
      %p148 = scmp.ne.s32.totalorder %s137, %s138
      %p149 = scmp.eq.s32.totalorder %s24, 0
      %p150 = por %p148, %p149
      %p151 = scmp.ne.s32.totalorder %s137, %s138
      %p152 = scmp.eq.s32.totalorder %s25, 1
      %p153 = por %p151, %p152
      %p155 = scmp.ne.s32.totalorder %s138, %s154
      %p156 = scmp.eq.s32.totalorder %s25, 0
      %p157 = por %p155, %p156
      %s158 = ssub.s32 %s26, %s45
      %s159 = ssub.s32 %s28, %s37
      %s160 = sor.u32 %s158, %s159
      %p161 = scmp.eq.s32.totalorder %s160, 0
      %s163 = sadd.s32 %s162, 1
      %s164 = scalar_select %p161, %s162, %s163
      %p167 = pneg %p161
      %p168 = scmp.eq.s32.totalorder %s19, 1
      %p169 = por %p167, %p168
      %p170 = scmp.ne.s32.totalorder %s162, %s165
      %p171 = scmp.eq.s32.totalorder %s19, 0
      %p172 = por %p170, %p171
      %p173 = scmp.ne.s32.totalorder %s162, %s165
      %p174 = scmp.eq.s32.totalorder %s24, 1
      %p175 = por %p173, %p174
      %p176 = scmp.ne.s32.totalorder %s165, %s166
      %p177 = scmp.eq.s32.totalorder %s24, 0
      %p178 = por %p176, %p177
      %p179 = scmp.ne.s32.totalorder %s165, %s166
      %p180 = scmp.eq.s32.totalorder %s25, 1
      %p181 = por %p179, %p180
      %p183 = scmp.ne.s32.totalorder %s166, %s182
      %p184 = scmp.eq.s32.totalorder %s25, 0
      %p185 = por %p183, %p184
      %s186 = ssub.s32 %s27, %s41
      %s187 = ssub.s32 %s28, %s37
      %s188 = sor.u32 %s186, %s187
      %p189 = scmp.eq.s32.totalorder %s188, 0
      %s191 = sadd.s32 %s190, 1
      %s192 = scalar_select %p189, %s190, %s191
      %p195 = pneg %p189
      %p196 = scmp.eq.s32.totalorder %s19, 1
      %p197 = por %p195, %p196
      %p198 = scmp.ne.s32.totalorder %s190, %s193
      %p199 = scmp.eq.s32.totalorder %s19, 0
      %p200 = por %p198, %p199
      %p201 = scmp.ne.s32.totalorder %s190, %s193
      %p202 = scmp.eq.s32.totalorder %s24, 1
      %p203 = por %p201, %p202
      %p204 = scmp.ne.s32.totalorder %s193, %s194
      %p205 = scmp.eq.s32.totalorder %s24, 0
      %p206 = por %p204, %p205
      %p207 = scmp.ne.s32.totalorder %s193, %s194
      %p208 = scmp.eq.s32.totalorder %s25, 1
      %p209 = por %p207, %p208
      %p211 = scmp.ne.s32.totalorder %s194, %s210
      %p212 = scmp.eq.s32.totalorder %s25, 0
      %p213 = por %p211, %p212
      %s214 = ssub.s32 %s26, %s45
      %s215 = ssub.s32 %s27, %s41
      %s216 = sor.u32 %s214, %s215
      %p217 = scmp.eq.s32.totalorder %s216, 0
      %s219 = sadd.s32 %s218, 1
      %s220 = scalar_select %p217, %s218, %s219
      %p223 = pneg %p217
      %p224 = scmp.eq.s32.totalorder %s19, 1
      %p225 = por %p223, %p224
      %p226 = scmp.ne.s32.totalorder %s218, %s221
      %p227 = scmp.eq.s32.totalorder %s19, 0
      %p228 = por %p226, %p227
      %p229 = scmp.ne.s32.totalorder %s218, %s221
      %p230 = scmp.eq.s32.totalorder %s24, 1
      %p231 = por %p229, %p230
      %p232 = scmp.ne.s32.totalorder %s221, %s222
      %p233 = scmp.eq.s32.totalorder %s24, 0
      %p234 = por %p232, %p233
      %p235 = scmp.ne.s32.totalorder %s221, %s222
      %p236 = scmp.eq.s32.totalorder %s25, 1
      %p237 = por %p235, %p236
      %p239 = scmp.ne.s32.totalorder %s222, %s238
      %p240 = scmp.eq.s32.totalorder %s25, 0
      %p241 = por %p239, %p240
      %p242 = scmp.le.s32.totalorder 1, %s19
      %p243 = scmp.lt.s32.totalorder %s19, 3
      %p244 = pnand %p242, %p243
      %p245 = pneg %p244
      // Predicated region
      $region9: #{tpu_custom_call.1} parent=5 // pred_check
        _
      $region10: #{tpu_custom_call.1} parent=5 // pred_check_branch
        %247 = sbr.rel (%p244) target = $region12
      $region11: #{tpu_custom_call.1} parent=5 // pred_region
        %s248 = ssub.s32 %s19, 1
        // Predicated region
        $region13: #{tpu_custom_call.1} parent=11 // pred_check
          %p249 = pneg %p206
        $region14: #{tpu_custom_call.1} parent=11 // pred_check_branch
          %251 = sbr.rel (%p249) target = $region16
        $region15: #{tpu_custom_call.1} parent=11 // pred_region
          %s252 = smul.u32 16, %s30
          %s254 = ssub.s32 2048, 2048
          %255 = vsyncadd [#allocation9], %s254
          %s256 = sadd.s32 %s31, %s252
          %s257 = smul.addr %s256, 128
          %s258 = scalar_lea.hbm %s5, %s257
          %s259 = sshll.u32 [#allocation8], 4
          %s260 = int_to_ptr.vmem [resolvable:$true] %s259
          %265 = dma.hbm_to_vmem [thread:$0]  %s258, 2048, %s260, [#allocation9], 128, 128, 8
        $region16: #{tpu_custom_call.1} parent=11 // pred_fallthru
          _
      $region12: #{tpu_custom_call.1} parent=5 // pred_fallthru
        _
      %p266 = scmp.lt.s32.totalorder %s19, 2
      // Predicated region
      $region17: #{tpu_custom_call.1} parent=5 // pred_check
        %p267 = pneg %p266
      $region18: #{tpu_custom_call.1} parent=5 // pred_check_branch
        %269 = sbr.rel (%p267) target = $region20
      $region19: #{tpu_custom_call.1} parent=5 // pred_region
        // Predicated region
        $region21: #{tpu_custom_call.1} parent=19 // pred_check
          %p270 = pneg %p60
        $region22: #{tpu_custom_call.1} parent=19 // pred_check_branch
          %272 = sbr.rel (%p270) target = $region24
        $region23: #{tpu_custom_call.1} parent=19 // pred_region
          %s273 = smul.u32 16, %s27
          %p274 = scmp.lt.s32.totalorder %s26, 1
          %s275 = scalar_select %p274, %s26, 1
          %p276 = scmp.lt.s32.totalorder %s273, 15
          %s277 = scalar_select %p276, %s273, 15
          %s278 = smul.addr %s275, 16
          %s279 = sadd.s32 %s277, %s278
          %s280 = smul.addr %s279, 8
          %s281 = scalar_lea.vmem %s0, %s280
          %s282 = smul.u32 16, %s27
        $region24: #{tpu_custom_call.1} parent=19 // pred_fallthru
          _
        // Predicated region
        $region25: #{tpu_custom_call.1} parent=19 // pred_check
          %p283 = pneg %p88
        $region26: #{tpu_custom_call.1} parent=19 // pred_check_branch
          %285 = sbr.rel (%p283) target = $region28
        $region27: #{tpu_custom_call.1} parent=19 // pred_region
          %s286 = smul.u32 16, %s28
          %p287 = scmp.lt.s32.totalorder %s26, 1
          %s288 = scalar_select %p287, %s26, 1
          %p289 = scmp.lt.s32.totalorder %s286, 15
          %s290 = scalar_select %p289, %s286, 15
          %s291 = smul.addr %s288, 16
          %s292 = sadd.s32 %s290, %s291
          %s293 = smul.addr %s292, 8
          %s294 = scalar_lea.vmem %s1, %s293
          %s295 = smul.u32 16, %s28
        $region28: #{tpu_custom_call.1} parent=19 // pred_fallthru
          _
        // Predicated region
        $region29: #{tpu_custom_call.1} parent=19 // pred_check
          %p296 = pneg %p116
        $region30: #{tpu_custom_call.1} parent=19 // pred_check_branch
          %298 = sbr.rel (%p296) target = $region32
        $region31: #{tpu_custom_call.1} parent=19 // pred_region
          %s299 = sand.u32 %s106, 1
          %s300 = scalar_lea.sflag [#allocation6], %s299
          %s301 = sand.u32 %s106, 1
          %s302 = smul.addr %s301, 128
          %s303 = scalar_lea.vmem [#allocation5], %s302
          %s304 = smul.u32 16, %s28
          %s306 = ssub.s32 2048, 2048
          %307 = vsyncadd %s300, %s306
          %s308 = smul.addr %s26, 16
          %s309 = sadd.s32 %s304, %s308
          %s310 = smul.addr %s309, 128
          %s311 = scalar_lea.hbm %s2, %s310
          %s312 = sshll.u32 %s303, 4
          %s313 = int_to_ptr.vmem [resolvable:$true] %s312
          %318 = dma.hbm_to_vmem [thread:$0]  %s311, 2048, %s313, %s300, 128, 128, 8
        $region32: #{tpu_custom_call.1} parent=19 // pred_fallthru
          _
        // Predicated region
        $region33: #{tpu_custom_call.1} parent=19 // pred_check
          %p319 = pneg %p144
        $region34: #{tpu_custom_call.1} parent=19 // pred_check_branch
          %321 = sbr.rel (%p319) target = $region36
        $region35: #{tpu_custom_call.1} parent=19 // pred_region
          %s322 = smul.u32 16, %s27
          %p323 = scmp.lt.s32.totalorder %s26, 1
          %s324 = scalar_select %p323, %s26, 1
          %p325 = scmp.lt.s32.totalorder %s322, 15
          %s326 = scalar_select %p325, %s322, 15
          %s327 = smul.addr %s324, 16
          %s328 = sadd.s32 %s326, %s327
          %s329 = smul.addr %s328, 8
          %s330 = scalar_lea.vmem %s3, %s329
          %s331 = smul.u32 16, %s27
        $region36: #{tpu_custom_call.1} parent=19 // pred_fallthru
          _
        // Predicated region
        $region37: #{tpu_custom_call.1} parent=19 // pred_check
          %p332 = pneg %p172
        $region38: #{tpu_custom_call.1} parent=19 // pred_check_branch
          %334 = sbr.rel (%p332) target = $region40
        $region39: #{tpu_custom_call.1} parent=19 // pred_region
          %s335 = smul.u32 16, %s28
          %p336 = scmp.lt.s32.totalorder %s26, 1
          %s337 = scalar_select %p336, %s26, 1
          %p338 = scmp.lt.s32.totalorder %s335, 15
          %s339 = scalar_select %p338, %s335, 15
          %s340 = smul.addr %s337, 16
          %s341 = sadd.s32 %s339, %s340
          %s342 = smul.addr %s341, 8
          %s343 = scalar_lea.vmem %s4, %s342
          %s344 = smul.u32 16, %s28
        $region40: #{tpu_custom_call.1} parent=19 // pred_fallthru
          _
      $region20: #{tpu_custom_call.1} parent=5 // pred_fallthru
        _
      %p345 = scmp.le.s32.totalorder 1, %s19
      %p346 = scmp.lt.s32.totalorder %s19, 3
      %p347 = pnand %p345, %p346
      %p348 = pneg %p347
      // Predicated region
      $region41: #{tpu_custom_call.1} parent=5 // pred_check
        _
      $region42: #{tpu_custom_call.1} parent=5 // pred_check_branch
        %350 = sbr.rel (%p347) target = $region44
      $region43: #{tpu_custom_call.1} parent=5 // pred_region
        %s351 = ssub.s32 %s19, 1
        %s352 = sand.u32 %s109, 1
        %s353 = scalar_lea.sflag [#allocation6], %s352
        %s354 = sand.u32 %s109, 1
        %s355 = smul.addr %s354, 128
        %s356 = scalar_lea.vmem [#allocation5], %s355
        // Predicated region
        $region45: #{tpu_custom_call.1} parent=43 // pred_check
          %p357 = pneg %p122
        $region46: #{tpu_custom_call.1} parent=43 // pred_check_branch
          %359 = sbr.rel (%p357) target = $region48
        $region47: #{tpu_custom_call.1} parent=43 // pred_region
          %360 = dma.done %s353, 2048
        $region48: #{tpu_custom_call.1} parent=43 // pred_fallthru
          _
        // Predicated region
        $region49: #{tpu_custom_call.1} parent=43 // pred_check
          %p361 = pneg %p206
        $region50: #{tpu_custom_call.1} parent=43 // pred_check_branch
          %363 = sbr.rel (%p361) target = $region52
        $region51: #{tpu_custom_call.1} parent=43 // pred_region
          %364 = dma.done [#allocation9], 2048
        $region52: #{tpu_custom_call.1} parent=43 // pred_fallthru
          _
        %s365 = smul.u32 16, %s30
        %p366 = scmp.lt.s32.totalorder %s29, 1
        %s367 = scalar_select %p366, %s29, 1
        %p368 = scmp.lt.s32.totalorder %s365, 15
        %s369 = scalar_select %p368, %s365, 15
        %s370 = smul.addr %s367, 16
        %s371 = sadd.s32 %s369, %s370
        %s372 = smul.addr %s371, 8
        %s373 = scalar_lea.vmem %s0, %s372
        %p374 = pneg %p66
        %p375 = pneg %p63
        %s376 = smul.u32 16, %s31
        %p377 = scmp.lt.s32.totalorder %s29, 1
        %s378 = scalar_select %p377, %s29, 1
        %p379 = scmp.lt.s32.totalorder %s376, 15
        %s380 = scalar_select %p379, %s376, 15
        %s381 = smul.addr %s378, 16
        %s382 = sadd.s32 %s380, %s381
        %s383 = smul.addr %s382, 8
        %s384 = scalar_lea.vmem %s1, %s383
        %p385 = pneg %p94
        %p386 = pneg %p91
        %s387 = sand.u32 %s109, 1
        %s388 = scalar_lea.sflag [#allocation6], %s387
        %s389 = sand.u32 %s109, 1
        %s390 = smul.addr %s389, 128
        %s391 = scalar_lea.vmem [#allocation5], %s390
        %p392 = pneg %p122
        %p393 = pneg %p119
        %s394 = smul.u32 16, %s30
        %p395 = scmp.lt.s32.totalorder %s29, 1
        %s396 = scalar_select %p395, %s29, 1
        %p397 = scmp.lt.s32.totalorder %s394, 15
        %s398 = scalar_select %p397, %s394, 15
        %s399 = smul.addr %s396, 16
        %s400 = sadd.s32 %s398, %s399
        %s401 = smul.addr %s400, 8
        %s402 = scalar_lea.vmem %s3, %s401
        %p403 = pneg %p150
        %p404 = pneg %p147
        %s405 = smul.u32 16, %s31
        %p406 = scmp.lt.s32.totalorder %s29, 1
        %s407 = scalar_select %p406, %s29, 1
        %p408 = scmp.lt.s32.totalorder %s405, 15
        %s409 = scalar_select %p408, %s405, 15
        %s410 = smul.addr %s407, 16
        %s411 = sadd.s32 %s409, %s410
        %s412 = smul.addr %s411, 8
        %s413 = scalar_lea.vmem %s4, %s412
        %p414 = pneg %p178
        %p415 = pneg %p175
        %p416 = pneg %p206
        %p417 = pneg %p203
        %p418 = pneg %p234
        %p419 = pneg %p231
        %s420 = sand.u32 %s221, 1
        %s421 = scalar_lea.sflag [#allocation7], %s420
        %s422 = sand.u32 %s221, 1
        %s423 = smul.addr %s422, 128
        %s424 = scalar_lea.vmem [#allocation10], %s423
        %s425 = smul.u32 16, %s30
        %p426 = scmp.lt.s32.totalorder %s29, 1
        %s427 = scalar_select %p426, %s29, 1
        %p428 = scmp.lt.s32.totalorder %s425, 15
        %s429 = scalar_select %p428, %s425, 15
        %s430 = smul.addr %s427, 16
        %s431 = sadd.s32 %s429, %s430
        %s432 = smul.addr %s431, 8
        %s433 = scalar_lea.vmem %s0, %s432
        %s434 = smul.u32 16, %s30
        %s435 = smul.u32 16, %s31
        %p436 = scmp.lt.s32.totalorder %s29, 1
        %s437 = scalar_select %p436, %s29, 1
        %p438 = scmp.lt.s32.totalorder %s435, 15
        %s439 = scalar_select %p438, %s435, 15
        %s440 = smul.addr %s437, 16
        %s441 = sadd.s32 %s439, %s440
        %s442 = smul.addr %s441, 8
        %s443 = scalar_lea.vmem %s1, %s442
        %s444 = smul.u32 16, %s31
        %s445 = smul.u32 16, %s31
        %s446 = smul.u32 16, %s30
        %p447 = scmp.lt.s32.totalorder %s29, 1
        %s448 = scalar_select %p447, %s29, 1
        %p449 = scmp.lt.s32.totalorder %s446, 15
        %s450 = scalar_select %p449, %s446, 15
        %s451 = smul.addr %s448, 16
        %s452 = sadd.s32 %s450, %s451
        %s453 = smul.addr %s452, 8
        %s454 = scalar_lea.vmem %s3, %s453
        %s455 = smul.u32 16, %s30
        %s456 = smul.u32 16, %s31
        %p457 = scmp.lt.s32.totalorder %s29, 1
        %s458 = scalar_select %p457, %s29, 1
        %p459 = scmp.lt.s32.totalorder %s456, 15
        %s460 = scalar_select %p459, %s456, 15
        %s461 = smul.addr %s458, 16
        %s462 = sadd.s32 %s460, %s461
        %s463 = smul.addr %s462, 8
        %s464 = scalar_lea.vmem %s4, %s463
        %s465 = smul.u32 16, %s31
        %s466 = smul.u32 16, %s30
        %s467 = smul.u32 16, %s30
        %p469 = scmp.eq.s32.totalorder %s31, 0
        // Predicated region
        $region53: #{tpu_custom_call.1} parent=43 // pred_check
          %p470 = pneg %p469
        $region54: #{tpu_custom_call.1} parent=43 // pred_check_branch
          %472 = sbr.rel (%p470) target = $region56
        $region55: #{tpu_custom_call.1} parent=43 // pred_region
          %vm473 = vcmask 31744
          %474 = vst.msk [vmem:[#allocation3] sm:$0xff] %vm473, -inf
          %475 = vst.msk [vmem:[#allocation3 + $0x8] sm:$0xff] %vm473, -inf
          %476 = vst.msk [vmem:[#allocation3 + $0x10] sm:$0xff] %vm473, -inf
          %477 = vst.msk [vmem:[#allocation3 + $0x18] sm:$0xff] %vm473, -inf
          %478 = vst.msk [vmem:[#allocation3 + $0x20] sm:$0xff] %vm473, -inf
          %479 = vst.msk [vmem:[#allocation3 + $0x28] sm:$0xff] %vm473, -inf
          %480 = vst.msk [vmem:[#allocation3 + $0x30] sm:$0xff] %vm473, -inf
          %481 = vst.msk [vmem:[#allocation3 + $0x38] sm:$0xff] %vm473, -inf
          %482 = vst.msk [vmem:[#allocation3 + $0x40] sm:$0xff] %vm473, -inf
          %483 = vst.msk [vmem:[#allocation3 + $0x48] sm:$0xff] %vm473, -inf
          %484 = vst.msk [vmem:[#allocation3 + $0x50] sm:$0xff] %vm473, -inf
          %485 = vst.msk [vmem:[#allocation3 + $0x58] sm:$0xff] %vm473, -inf
          %486 = vst.msk [vmem:[#allocation3 + $0x60] sm:$0xff] %vm473, -inf
          %487 = vst.msk [vmem:[#allocation3 + $0x68] sm:$0xff] %vm473, -inf
          %488 = vst.msk [vmem:[#allocation3 + $0x70] sm:$0xff] %vm473, -inf
          %489 = vst.msk [vmem:[#allocation3 + $0x78] sm:$0xff] %vm473, -inf
          %490 = vst.msk [vmem:[#allocation4] sm:$0xff] %vm473, 0.0
          %491 = vst.msk [vmem:[#allocation4 + $0x8] sm:$0xff] %vm473, 0.0
          %492 = vst.msk [vmem:[#allocation4 + $0x10] sm:$0xff] %vm473, 0.0
          %493 = vst.msk [vmem:[#allocation4 + $0x18] sm:$0xff] %vm473, 0.0
          %494 = vst.msk [vmem:[#allocation4 + $0x20] sm:$0xff] %vm473, 0.0
          %495 = vst.msk [vmem:[#allocation4 + $0x28] sm:$0xff] %vm473, 0.0
          %496 = vst.msk [vmem:[#allocation4 + $0x30] sm:$0xff] %vm473, 0.0
          %497 = vst.msk [vmem:[#allocation4 + $0x38] sm:$0xff] %vm473, 0.0
          %498 = vst.msk [vmem:[#allocation4 + $0x40] sm:$0xff] %vm473, 0.0
          %499 = vst.msk [vmem:[#allocation4 + $0x48] sm:$0xff] %vm473, 0.0
          %500 = vst.msk [vmem:[#allocation4 + $0x50] sm:$0xff] %vm473, 0.0
          %501 = vst.msk [vmem:[#allocation4 + $0x58] sm:$0xff] %vm473, 0.0
          %502 = vst.msk [vmem:[#allocation4 + $0x60] sm:$0xff] %vm473, 0.0
          %503 = vst.msk [vmem:[#allocation4 + $0x68] sm:$0xff] %vm473, 0.0
          %504 = vst.msk [vmem:[#allocation4 + $0x70] sm:$0xff] %vm473, 0.0
          %505 = vst.msk [vmem:[#allocation4 + $0x78] sm:$0xff] %vm473, 0.0
          %506 = vst [vmem:[#allocation2] sm:$0xff] 0.0
          %507 = vst [vmem:[#allocation2 + $0x8] sm:$0xff] 0.0
          %508 = vst [vmem:[#allocation2 + $0x10] sm:$0xff] 0.0
          %509 = vst [vmem:[#allocation2 + $0x18] sm:$0xff] 0.0
          %510 = vst [vmem:[#allocation2 + $0x20] sm:$0xff] 0.0
          %511 = vst [vmem:[#allocation2 + $0x28] sm:$0xff] 0.0
          %512 = vst [vmem:[#allocation2 + $0x30] sm:$0xff] 0.0
          %513 = vst [vmem:[#allocation2 + $0x38] sm:$0xff] 0.0
          %514 = vst [vmem:[#allocation2 + $0x40] sm:$0xff] 0.0
          %515 = vst [vmem:[#allocation2 + $0x48] sm:$0xff] 0.0
          %516 = vst [vmem:[#allocation2 + $0x50] sm:$0xff] 0.0
          %517 = vst [vmem:[#allocation2 + $0x58] sm:$0xff] 0.0
          %518 = vst [vmem:[#allocation2 + $0x60] sm:$0xff] 0.0
          %519 = vst [vmem:[#allocation2 + $0x68] sm:$0xff] 0.0
          %520 = vst [vmem:[#allocation2 + $0x70] sm:$0xff] 0.0
          %521 = vst [vmem:[#allocation2 + $0x78] sm:$0xff] 0.0
        $region56: #{tpu_custom_call.1} parent=43 // pred_fallthru
          _
        %v522 = vld [vmem:[%s433] sm:$0xff]
        %v523 = vld [vmem:[%s433 + $0x8] sm:$0xff]
        %v524 = vld [vmem:[%s433 + $0x10] sm:$0xff]
        %v525 = vld [vmem:[%s433 + $0x18] sm:$0xff]
        %v526 = vld [vmem:[%s433 + $0x20] sm:$0xff]
        %v527 = vld [vmem:[%s433 + $0x28] sm:$0xff]
        %v528 = vld [vmem:[%s433 + $0x30] sm:$0xff]
        %v529 = vld [vmem:[%s433 + $0x38] sm:$0xff]
        %v530 = vld [vmem:[%s433 + $0x40] sm:$0xff]
        %v531 = vld [vmem:[%s433 + $0x48] sm:$0xff]
        %v532 = vld [vmem:[%s433 + $0x50] sm:$0xff]
        %v533 = vld [vmem:[%s433 + $0x58] sm:$0xff]
        %v534 = vld [vmem:[%s433 + $0x60] sm:$0xff]
        %v535 = vld [vmem:[%s433 + $0x68] sm:$0xff]
        %v536 = vld [vmem:[%s433 + $0x70] sm:$0xff]
        %v537 = vld [vmem:[%s433 + $0x78] sm:$0xff]
        %v538 = vld [vmem:[%s443] sm:$0xff]
        %v539 = vld [vmem:[%s443 + $0x8] sm:$0xff]
        %v540 = vld [vmem:[%s443 + $0x10] sm:$0xff]
        %v541 = vld [vmem:[%s443 + $0x18] sm:$0xff]
        %v542 = vld [vmem:[%s443 + $0x20] sm:$0xff]
        %v543 = vld [vmem:[%s443 + $0x28] sm:$0xff]
        %v544 = vld [vmem:[%s443 + $0x30] sm:$0xff]
        %v545 = vld [vmem:[%s443 + $0x38] sm:$0xff]
        %v546 = vld [vmem:[%s443 + $0x40] sm:$0xff]
        %v547 = vld [vmem:[%s443 + $0x48] sm:$0xff]
        %v548 = vld [vmem:[%s443 + $0x50] sm:$0xff]
        %v549 = vld [vmem:[%s443 + $0x58] sm:$0xff]
        %v550 = vld [vmem:[%s443 + $0x60] sm:$0xff]
        %v551 = vld [vmem:[%s443 + $0x68] sm:$0xff]
        %v552 = vld [vmem:[%s443 + $0x70] sm:$0xff]
        %v553 = vld [vmem:[%s443 + $0x78] sm:$0xff]
        %v554 = vld [vmem:[%s356] sm:$0xff]
        %v555 = vld [vmem:[%s356 + $0x8] sm:$0xff]
        %v556 = vld [vmem:[%s356 + $0x10] sm:$0xff]
        %v557 = vld [vmem:[%s356 + $0x18] sm:$0xff]
        %v558 = vld [vmem:[%s356 + $0x20] sm:$0xff]
        %v559 = vld [vmem:[%s356 + $0x28] sm:$0xff]
        %v560 = vld [vmem:[%s356 + $0x30] sm:$0xff]
        %v561 = vld [vmem:[%s356 + $0x38] sm:$0xff]
        %v562 = vld [vmem:[%s356 + $0x40] sm:$0xff]
        %v563 = vld [vmem:[%s356 + $0x48] sm:$0xff]
        %v564 = vld [vmem:[%s356 + $0x50] sm:$0xff]
        %v565 = vld [vmem:[%s356 + $0x58] sm:$0xff]
        %v566 = vld [vmem:[%s356 + $0x60] sm:$0xff]
        %v567 = vld [vmem:[%s356 + $0x68] sm:$0xff]
        %v568 = vld [vmem:[%s356 + $0x70] sm:$0xff]
        %v569 = vld [vmem:[%s356 + $0x78] sm:$0xff]
        %v570 = vld [vmem:[%s454] sm:$0xff]
        %v571 = vld [vmem:[%s454 + $0x8] sm:$0xff]
        %v572 = vld [vmem:[%s454 + $0x10] sm:$0xff]
        %v573 = vld [vmem:[%s454 + $0x18] sm:$0xff]
        %v574 = vld [vmem:[%s454 + $0x20] sm:$0xff]
        %v575 = vld [vmem:[%s454 + $0x28] sm:$0xff]
        %v576 = vld [vmem:[%s454 + $0x30] sm:$0xff]
        %v577 = vld [vmem:[%s454 + $0x38] sm:$0xff]
        %v578 = vld [vmem:[%s454 + $0x40] sm:$0xff]
        %v579 = vld [vmem:[%s454 + $0x48] sm:$0xff]
        %v580 = vld [vmem:[%s454 + $0x50] sm:$0xff]
        %v581 = vld [vmem:[%s454 + $0x58] sm:$0xff]
        %v582 = vld [vmem:[%s454 + $0x60] sm:$0xff]
        %v583 = vld [vmem:[%s454 + $0x68] sm:$0xff]
        %v584 = vld [vmem:[%s454 + $0x70] sm:$0xff]
        %v585 = vld [vmem:[%s454 + $0x78] sm:$0xff]
        %v586 = vld [vmem:[%s464] sm:$0xff]
        %v587 = vld [vmem:[%s464 + $0x8] sm:$0xff]
        %v588 = vld [vmem:[%s464 + $0x10] sm:$0xff]
        %v589 = vld [vmem:[%s464 + $0x18] sm:$0xff]
        %v590 = vld [vmem:[%s464 + $0x20] sm:$0xff]
        %v591 = vld [vmem:[%s464 + $0x28] sm:$0xff]
        %v592 = vld [vmem:[%s464 + $0x30] sm:$0xff]
        %v593 = vld [vmem:[%s464 + $0x38] sm:$0xff]
        %v594 = vld [vmem:[%s464 + $0x40] sm:$0xff]
        %v595 = vld [vmem:[%s464 + $0x48] sm:$0xff]
        %v596 = vld [vmem:[%s464 + $0x50] sm:$0xff]
        %v597 = vld [vmem:[%s464 + $0x58] sm:$0xff]
        %v598 = vld [vmem:[%s464 + $0x60] sm:$0xff]
        %v599 = vld [vmem:[%s464 + $0x68] sm:$0xff]
        %v600 = vld [vmem:[%s464 + $0x70] sm:$0xff]
        %v601 = vld [vmem:[%s464 + $0x78] sm:$0xff]
        %v602 = vld [vmem:[#allocation8] sm:$0xff]
        %v603 = vld [vmem:[#allocation8 + $0x8] sm:$0xff]
        %v604 = vld [vmem:[#allocation8 + $0x10] sm:$0xff]
        %v605 = vld [vmem:[#allocation8 + $0x18] sm:$0xff]
        %v606 = vld [vmem:[#allocation8 + $0x20] sm:$0xff]
        %v607 = vld [vmem:[#allocation8 + $0x28] sm:$0xff]
        %v608 = vld [vmem:[#allocation8 + $0x30] sm:$0xff]
        %v609 = vld [vmem:[#allocation8 + $0x38] sm:$0xff]
        %v610 = vld [vmem:[#allocation8 + $0x40] sm:$0xff]
        %v611 = vld [vmem:[#allocation8 + $0x48] sm:$0xff]
        %v612 = vld [vmem:[#allocation8 + $0x50] sm:$0xff]
        %v613 = vld [vmem:[#allocation8 + $0x58] sm:$0xff]
        %v614 = vld [vmem:[#allocation8 + $0x60] sm:$0xff]
        %v615 = vld [vmem:[#allocation8 + $0x68] sm:$0xff]
        %v616 = vld [vmem:[#allocation8 + $0x70] sm:$0xff]
        %v617 = vld [vmem:[#allocation8 + $0x78] sm:$0xff]
        %v618 = vmul.f32 %v570, 0.17677669
        %v619 = vmul.f32 %v571, 0.17677669
        %v620 = vmul.f32 %v572, 0.17677669
        %v621 = vmul.f32 %v573, 0.17677669
        %v622 = vmul.f32 %v574, 0.17677669
        %v623 = vmul.f32 %v575, 0.17677669
        %v624 = vmul.f32 %v576, 0.17677669
        %v625 = vmul.f32 %v577, 0.17677669
        %v626 = vmul.f32 %v578, 0.17677669
        %v627 = vmul.f32 %v579, 0.17677669
        %v628 = vmul.f32 %v580, 0.17677669
        %v629 = vmul.f32 %v581, 0.17677669
        %v630 = vmul.f32 %v582, 0.17677669
        %v631 = vmul.f32 %v583, 0.17677669
        %v632 = vmul.f32 %v584, 0.17677669
        %v633 = vmul.f32 %v585, 0.17677669
        %635 = vset.pattern.permute.xlu0 0
        %636 = vperm.xlu0 %635, %v618
        %v637 = vpop.permute.xlu0 %636
        %640 = vset.pattern.permute.xlu0 0
        %641 = vperm.xlu0 %640, %v619
        %v642 = vpop.permute.xlu0 %641
        %645 = vset.pattern.permute.xlu0 0
        %646 = vperm.xlu0 %645, %v620
        %v647 = vpop.permute.xlu0 %646
        %650 = vset.pattern.permute.xlu0 0
        %651 = vperm.xlu0 %650, %v621
        %v652 = vpop.permute.xlu0 %651
        %655 = vset.pattern.permute.xlu0 0
        %656 = vperm.xlu0 %655, %v622
        %v657 = vpop.permute.xlu0 %656
        %660 = vset.pattern.permute.xlu0 0
        %661 = vperm.xlu0 %660, %v623
        %v662 = vpop.permute.xlu0 %661
        %665 = vset.pattern.permute.xlu0 0
        %666 = vperm.xlu0 %665, %v624
        %v667 = vpop.permute.xlu0 %666
        %670 = vset.pattern.permute.xlu0 0
        %671 = vperm.xlu0 %670, %v625
        %v672 = vpop.permute.xlu0 %671
        %675 = vset.pattern.permute.xlu0 0
        %676 = vperm.xlu0 %675, %v626
        %v677 = vpop.permute.xlu0 %676
        %680 = vset.pattern.permute.xlu0 0
        %681 = vperm.xlu0 %680, %v627
        %v682 = vpop.permute.xlu0 %681
        %685 = vset.pattern.permute.xlu0 0
        %686 = vperm.xlu0 %685, %v628
        %v687 = vpop.permute.xlu0 %686
        %690 = vset.pattern.permute.xlu0 0
        %691 = vperm.xlu0 %690, %v629
        %v692 = vpop.permute.xlu0 %691
        %695 = vset.pattern.permute.xlu0 0
        %696 = vperm.xlu0 %695, %v630
        %v697 = vpop.permute.xlu0 %696
        %700 = vset.pattern.permute.xlu0 0
        %701 = vperm.xlu0 %700, %v631
        %v702 = vpop.permute.xlu0 %701
        %705 = vset.pattern.permute.xlu0 0
        %706 = vperm.xlu0 %705, %v632
        %v707 = vpop.permute.xlu0 %706
        %710 = vset.pattern.permute.xlu0 0
        %711 = vperm.xlu0 %710, %v633
        %v712 = vpop.permute.xlu0 %711
        %v714 = vmul.f32 %v522, %v637
        %v715 = vmul.f32 %v523, %v642
        %v716 = vmul.f32 %v524, %v647
        %v717 = vmul.f32 %v525, %v652
        %v718 = vmul.f32 %v526, %v657
        %v719 = vmul.f32 %v527, %v662
        %v720 = vmul.f32 %v528, %v667
        %v721 = vmul.f32 %v529, %v672
        %v722 = vmul.f32 %v530, %v677
        %v723 = vmul.f32 %v531, %v682
        %v724 = vmul.f32 %v532, %v687
        %v725 = vmul.f32 %v533, %v692
        %v726 = vmul.f32 %v534, %v697
        %v727 = vmul.f32 %v535, %v702
        %v728 = vmul.f32 %v536, %v707
        %v729 = vmul.f32 %v537, %v712
        %v730 = vpack.c.bf16 %v715, %v714
        %v731 = vpack.c.bf16 %v717, %v716
        %v732 = vpack.c.bf16 %v719, %v718
        %v733 = vpack.c.bf16 %v721, %v720
        %v734 = vpack.c.bf16 %v723, %v722
        %v735 = vpack.c.bf16 %v725, %v724
        %v736 = vpack.c.bf16 %v727, %v726
        %v737 = vpack.c.bf16 %v729, %v728
        %v738 = vpack.c.bf16 %v539, %v538
        %v739 = vpack.c.bf16 %v541, %v540
        %v740 = vpack.c.bf16 %v543, %v542
        %v741 = vpack.c.bf16 %v545, %v544
        %v742 = vpack.c.bf16 %v547, %v546
        %v743 = vpack.c.bf16 %v549, %v548
        %v744 = vpack.c.bf16 %v551, %v550
        %v745 = vpack.c.bf16 %v553, %v552
        %vm746 = vcmask 261120
        %v748 = vsel %vm746, %v730, 0
        %v751 = vsel %vm746, %v731, 0
        %v754 = vsel %vm746, %v732, 0
        %v757 = vsel %vm746, %v733, 0
        %v760 = vsel %vm746, %v734, 0
        %v763 = vsel %vm746, %v735, 0
        %v766 = vsel %vm746, %v736, 0
        %v769 = vsel %vm746, %v737, 0
        %v772 = vsel %vm746, %v738, 0
        %v775 = vsel %vm746, %v739, 0
        %v778 = vsel %vm746, %v740, 0
        %v781 = vsel %vm746, %v741, 0
        %v784 = vsel %vm746, %v742, 0
        %v787 = vsel %vm746, %v743, 0
        %v790 = vsel %vm746, %v744, 0
        %v793 = vsel %vm746, %v745, 0
        %795 = vmatprep.subr.bf16.mxu0 0
        %796 = vmatpush1.bf16.xpose.msra.mxu0 %v793
        %797 = vmatprep.subr.bf16.mxu0 0
        %798 = vmatpush1.bf16.xpose.msra.mxu0 %v790
        %799 = vmatprep.subr.bf16.mxu0 0
        %800 = vmatpush1.bf16.xpose.msra.mxu0 %v787
        %801 = vmatprep.subr.bf16.mxu0 0
        %802 = vmatpush1.bf16.xpose.msra.mxu0 %v784
        %803 = vmatprep.subr.bf16.mxu0 0
        %804 = vmatpush1.bf16.xpose.msra.mxu0 %v781
        %805 = vmatprep.subr.bf16.mxu0 0
        %806 = vmatpush1.bf16.xpose.msra.mxu0 %v778
        %807 = vmatprep.subr.bf16.mxu0 0
        %808 = vmatpush1.bf16.xpose.msra.mxu0 %v775
        %809 = vmatprep.subr.bf16.mxu0 0
        %810 = vmatpush1.bf16.xpose.msra.mxu0 %v772
        %811 = vmatprep.subr.bf16.mxu0 0
        %812 = vmatpush2.bf16.xpose.msra.mxu0 0
        %813 = vmatprep.subr.bf16.mxu0 0
        %814 = vmatpush2.bf16.xpose.msra.mxu0 0
        %815 = vmatprep.subr.bf16.mxu0 0
        %816 = vmatpush2.bf16.xpose.msra.mxu0 0
        %817 = vmatprep.subr.bf16.mxu0 0
        %818 = vmatpush2.bf16.xpose.msra.mxu0 0
        %819 = vmatprep.subr.bf16.mxu0 0
        %820 = vmatpush2.bf16.xpose.msra.mxu0 0
        %821 = vmatprep.subr.bf16.mxu0 0
        %822 = vmatpush2.bf16.xpose.msra.mxu0 0
        %823 = vmatprep.subr.bf16.mxu0 0
        %824 = vmatpush2.bf16.xpose.msra.mxu0 0
        %825 = vmatprep.subr.bf16.mxu0 0
        %826 = vmatpush2.bf16.xpose.msra.mxu0 0
        %827 = vmatprep.mubr.bf16.mxu0 0
        %828 = vmatmul.mubr.bf16.gmra.mxu0 %v748
        %v829 = vpop.f32.mrf.mxu0
        %v830 = vadd.f32 %v602, %v829
        %v831 = vpop.f32.mrf.mxu0
        %v832 = vpop.f32.mrf.mxu0
        %v833 = vadd.f32 %v603, %v832
        %v834 = vpop.f32.mrf.mxu0
        %835 = vmatprep.mubr.bf16.mxu0 0
        %836 = vmatmul.mubr.bf16.gmra.mxu0 %v751
        %v837 = vpop.f32.mrf.mxu0
        %v838 = vadd.f32 %v604, %v837
        %v839 = vpop.f32.mrf.mxu0
        %v840 = vpop.f32.mrf.mxu0
        %v841 = vadd.f32 %v605, %v840
        %v842 = vpop.f32.mrf.mxu0
        %843 = vmatprep.mubr.bf16.mxu0 0
        %844 = vmatmul.mubr.bf16.gmra.mxu0 %v754
        %v845 = vpop.f32.mrf.mxu0
        %v846 = vadd.f32 %v606, %v845
        %v847 = vpop.f32.mrf.mxu0
        %v848 = vpop.f32.mrf.mxu0
        %v849 = vadd.f32 %v607, %v848
        %v850 = vpop.f32.mrf.mxu0
        %851 = vmatprep.mubr.bf16.mxu0 0
        %852 = vmatmul.mubr.bf16.gmra.mxu0 %v757
        %v853 = vpop.f32.mrf.mxu0
        %v854 = vadd.f32 %v608, %v853
        %v855 = vpop.f32.mrf.mxu0
        %v856 = vpop.f32.mrf.mxu0
        %v857 = vadd.f32 %v609, %v856
        %v858 = vpop.f32.mrf.mxu0
        %859 = vmatprep.mubr.bf16.mxu0 0
        %860 = vmatmul.mubr.bf16.gmra.mxu0 %v760
        %v861 = vpop.f32.mrf.mxu0
        %v862 = vadd.f32 %v610, %v861
        %v863 = vpop.f32.mrf.mxu0
        %v864 = vpop.f32.mrf.mxu0
        %v865 = vadd.f32 %v611, %v864
        %v866 = vpop.f32.mrf.mxu0
        %867 = vmatprep.mubr.bf16.mxu0 0
        %868 = vmatmul.mubr.bf16.gmra.mxu0 %v763
        %v869 = vpop.f32.mrf.mxu0
        %v870 = vadd.f32 %v612, %v869
        %v871 = vpop.f32.mrf.mxu0
        %v872 = vpop.f32.mrf.mxu0
        %v873 = vadd.f32 %v613, %v872
        %v874 = vpop.f32.mrf.mxu0
        %875 = vmatprep.mubr.bf16.mxu0 0
        %876 = vmatmul.mubr.bf16.gmra.mxu0 %v766
        %v877 = vpop.f32.mrf.mxu0
        %v878 = vadd.f32 %v614, %v877
        %v879 = vpop.f32.mrf.mxu0
        %v880 = vpop.f32.mrf.mxu0
        %v881 = vadd.f32 %v615, %v880
        %v882 = vpop.f32.mrf.mxu0
        %883 = vmatprep.mubr.bf16.mxu0 0
        %884 = vmatmul.mubr.bf16.gmra.mxu0 %v769
        %v885 = vpop.f32.mrf.mxu0
        %v886 = vadd.f32 %v616, %v885
        %v887 = vpop.f32.mrf.mxu0
        %v888 = vpop.f32.mrf.mxu0
        %v889 = vadd.f32 %v617, %v888
        %v890 = vpop.f32.mrf.mxu0
        %891 = vdwg.mxu0
        %v892 = vld [vmem:[#allocation3] sm:$0xff]
        %v893 = vld [vmem:[#allocation3 + $0x8] sm:$0xff]
        %v894 = vld [vmem:[#allocation3 + $0x10] sm:$0xff]
        %v895 = vld [vmem:[#allocation3 + $0x18] sm:$0xff]
        %v896 = vld [vmem:[#allocation3 + $0x20] sm:$0xff]
        %v897 = vld [vmem:[#allocation3 + $0x28] sm:$0xff]
        %v898 = vld [vmem:[#allocation3 + $0x30] sm:$0xff]
        %v899 = vld [vmem:[#allocation3 + $0x38] sm:$0xff]
        %v900 = vld [vmem:[#allocation3 + $0x40] sm:$0xff]
        %v901 = vld [vmem:[#allocation3 + $0x48] sm:$0xff]
        %v902 = vld [vmem:[#allocation3 + $0x50] sm:$0xff]
        %v903 = vld [vmem:[#allocation3 + $0x58] sm:$0xff]
        %v904 = vld [vmem:[#allocation3 + $0x60] sm:$0xff]
        %v905 = vld [vmem:[#allocation3 + $0x68] sm:$0xff]
        %v906 = vld [vmem:[#allocation3 + $0x70] sm:$0xff]
        %v907 = vld [vmem:[#allocation3 + $0x78] sm:$0xff]
        %v908 = vld [vmem:[#allocation4] sm:$0xff]
        %v909 = vld [vmem:[#allocation4 + $0x8] sm:$0xff]
        %v910 = vld [vmem:[#allocation4 + $0x10] sm:$0xff]
        %v911 = vld [vmem:[#allocation4 + $0x18] sm:$0xff]
        %v912 = vld [vmem:[#allocation4 + $0x20] sm:$0xff]
        %v913 = vld [vmem:[#allocation4 + $0x28] sm:$0xff]
        %v914 = vld [vmem:[#allocation4 + $0x30] sm:$0xff]
        %v915 = vld [vmem:[#allocation4 + $0x38] sm:$0xff]
        %v916 = vld [vmem:[#allocation4 + $0x40] sm:$0xff]
        %v917 = vld [vmem:[#allocation4 + $0x48] sm:$0xff]
        %v918 = vld [vmem:[#allocation4 + $0x50] sm:$0xff]
        %v919 = vld [vmem:[#allocation4 + $0x58] sm:$0xff]
        %v920 = vld [vmem:[#allocation4 + $0x60] sm:$0xff]
        %v921 = vld [vmem:[#allocation4 + $0x68] sm:$0xff]
        %v922 = vld [vmem:[#allocation4 + $0x70] sm:$0xff]
        %v923 = vld [vmem:[#allocation4 + $0x78] sm:$0xff]
        %924 = vmax.xlane.f32.xlu0 %v830
        %v925 = vpop.xlane.xlu0 %924
        %926 = vmax.xlane.f32.xlu0 %v833
        %v927 = vpop.xlane.xlu0 %926
        %928 = vmax.xlane.f32.xlu0 %v838
        %v929 = vpop.xlane.xlu0 %928
        %930 = vmax.xlane.f32.xlu0 %v841
        %v931 = vpop.xlane.xlu0 %930
        %932 = vmax.xlane.f32.xlu0 %v846
        %v933 = vpop.xlane.xlu0 %932
        %934 = vmax.xlane.f32.xlu0 %v849
        %v935 = vpop.xlane.xlu0 %934
        %936 = vmax.xlane.f32.xlu0 %v854
        %v937 = vpop.xlane.xlu0 %936
        %938 = vmax.xlane.f32.xlu0 %v857
        %v939 = vpop.xlane.xlu0 %938
        %940 = vmax.xlane.f32.xlu0 %v862
        %v941 = vpop.xlane.xlu0 %940
        %942 = vmax.xlane.f32.xlu0 %v865
        %v943 = vpop.xlane.xlu0 %942
        %944 = vmax.xlane.f32.xlu0 %v870
        %v945 = vpop.xlane.xlu0 %944
        %946 = vmax.xlane.f32.xlu0 %v873
        %v947 = vpop.xlane.xlu0 %946
        %948 = vmax.xlane.f32.xlu0 %v878
        %v949 = vpop.xlane.xlu0 %948
        %950 = vmax.xlane.f32.xlu0 %v881
        %v951 = vpop.xlane.xlu0 %950
        %952 = vmax.xlane.f32.xlu0 %v886
        %v953 = vpop.xlane.xlu0 %952
        %954 = vmax.xlane.f32.xlu0 %v889
        %v955 = vpop.xlane.xlu0 %954
        %v956 = vmax.f32 %v892, %v925
        %v957 = vmax.f32 %v893, %v927
        %v958 = vmax.f32 %v894, %v929
        %v959 = vmax.f32 %v895, %v931
        %v960 = vmax.f32 %v896, %v933
        %v961 = vmax.f32 %v897, %v935
        %v962 = vmax.f32 %v898, %v937
        %v963 = vmax.f32 %v899, %v939
        %v964 = vmax.f32 %v900, %v941
        %v965 = vmax.f32 %v901, %v943
        %v966 = vmax.f32 %v902, %v945
        %v967 = vmax.f32 %v903, %v947
        %v968 = vmax.f32 %v904, %v949
        %v969 = vmax.f32 %v905, %v951
        %v970 = vmax.f32 %v906, %v953
        %v971 = vmax.f32 %v907, %v955
        %v972 = vsub.f32 %v892, %v956
        %v973 = vsub.f32 %v893, %v957
        %v974 = vsub.f32 %v894, %v958
        %v975 = vsub.f32 %v895, %v959
        %v976 = vsub.f32 %v896, %v960
        %v977 = vsub.f32 %v897, %v961
        %v978 = vsub.f32 %v898, %v962
        %v979 = vsub.f32 %v899, %v963
        %v980 = vsub.f32 %v900, %v964
        %v981 = vsub.f32 %v901, %v965
        %v982 = vsub.f32 %v902, %v966
        %v983 = vsub.f32 %v903, %v967
        %v984 = vsub.f32 %v904, %v968
        %v985 = vsub.f32 %v905, %v969
        %v986 = vsub.f32 %v906, %v970
        %v987 = vsub.f32 %v907, %v971
        %v988 = vmul.f32 %v972, 1.442695
        %v989 = vpow.pop %v988
        %v990 = vmul.f32 %v973, 1.442695
        %v991 = vpow.pop %v990
        %v992 = vmul.f32 %v974, 1.442695
        %v993 = vpow.pop %v992
        %v994 = vmul.f32 %v975, 1.442695
        %v995 = vpow.pop %v994
        %v996 = vmul.f32 %v976, 1.442695
        %v997 = vpow.pop %v996
        %v998 = vmul.f32 %v977, 1.442695
        %v999 = vpow.pop %v998
        %v1000 = vmul.f32 %v978, 1.442695
        %v1001 = vpow.pop %v1000
        %v1002 = vmul.f32 %v979, 1.442695
        %v1003 = vpow.pop %v1002
        %v1004 = vmul.f32 %v980, 1.442695
        %v1005 = vpow.pop %v1004
        %v1006 = vmul.f32 %v981, 1.442695
        %v1007 = vpow.pop %v1006
        %v1008 = vmul.f32 %v982, 1.442695
        %v1009 = vpow.pop %v1008
        %v1010 = vmul.f32 %v983, 1.442695
        %v1011 = vpow.pop %v1010
        %v1012 = vmul.f32 %v984, 1.442695
        %v1013 = vpow.pop %v1012
        %v1014 = vmul.f32 %v985, 1.442695
        %v1015 = vpow.pop %v1014
        %v1016 = vmul.f32 %v986, 1.442695
        %v1017 = vpow.pop %v1016
        %v1018 = vmul.f32 %v987, 1.442695
        %v1019 = vpow.pop %v1018
        %1021 = vset.pattern.permute.xlu0 0
        %1022 = vperm.xlu0 %1021, %v956
        %v1023 = vpop.permute.xlu0 %1022
        %1026 = vset.pattern.permute.xlu0 0
        %1027 = vperm.xlu0 %1026, %v957
        %v1028 = vpop.permute.xlu0 %1027
        %1031 = vset.pattern.permute.xlu0 0
        %1032 = vperm.xlu0 %1031, %v958
        %v1033 = vpop.permute.xlu0 %1032
        %1036 = vset.pattern.permute.xlu0 0
        %1037 = vperm.xlu0 %1036, %v959
        %v1038 = vpop.permute.xlu0 %1037
        %1041 = vset.pattern.permute.xlu0 0
        %1042 = vperm.xlu0 %1041, %v960
        %v1043 = vpop.permute.xlu0 %1042
        %1046 = vset.pattern.permute.xlu0 0
        %1047 = vperm.xlu0 %1046, %v961
        %v1048 = vpop.permute.xlu0 %1047
        %1051 = vset.pattern.permute.xlu0 0
        %1052 = vperm.xlu0 %1051, %v962
        %v1053 = vpop.permute.xlu0 %1052
        %1056 = vset.pattern.permute.xlu0 0
        %1057 = vperm.xlu0 %1056, %v963
        %v1058 = vpop.permute.xlu0 %1057
        %1061 = vset.pattern.permute.xlu0 0
        %1062 = vperm.xlu0 %1061, %v964
        %v1063 = vpop.permute.xlu0 %1062
        %1066 = vset.pattern.permute.xlu0 0
        %1067 = vperm.xlu0 %1066, %v965
        %v1068 = vpop.permute.xlu0 %1067
        %1071 = vset.pattern.permute.xlu0 0
        %1072 = vperm.xlu0 %1071, %v966
        %v1073 = vpop.permute.xlu0 %1072
        %1076 = vset.pattern.permute.xlu0 0
        %1077 = vperm.xlu0 %1076, %v967
        %v1078 = vpop.permute.xlu0 %1077
        %1081 = vset.pattern.permute.xlu0 0
        %1082 = vperm.xlu0 %1081, %v968
        %v1083 = vpop.permute.xlu0 %1082
        %1086 = vset.pattern.permute.xlu0 0
        %1087 = vperm.xlu0 %1086, %v969
        %v1088 = vpop.permute.xlu0 %1087
        %1091 = vset.pattern.permute.xlu0 0
        %1092 = vperm.xlu0 %1091, %v970
        %v1093 = vpop.permute.xlu0 %1092
        %1096 = vset.pattern.permute.xlu0 0
        %1097 = vperm.xlu0 %1096, %v971
        %v1098 = vpop.permute.xlu0 %1097
        %v1100 = vsub.f32 %v830, %v1023
        %v1101 = vsub.f32 %v833, %v1028
        %v1102 = vsub.f32 %v838, %v1033
        %v1103 = vsub.f32 %v841, %v1038
        %v1104 = vsub.f32 %v846, %v1043
        %v1105 = vsub.f32 %v849, %v1048
        %v1106 = vsub.f32 %v854, %v1053
        %v1107 = vsub.f32 %v857, %v1058
        %v1108 = vsub.f32 %v862, %v1063
        %v1109 = vsub.f32 %v865, %v1068
        %v1110 = vsub.f32 %v870, %v1073
        %v1111 = vsub.f32 %v873, %v1078
        %v1112 = vsub.f32 %v878, %v1083
        %v1113 = vsub.f32 %v881, %v1088
        %v1114 = vsub.f32 %v886, %v1093
        %v1115 = vsub.f32 %v889, %v1098
        %v1116 = vmul.f32 %v1100, 1.442695
        %v1117 = vpow.pop %v1116
        %v1118 = vmul.f32 %v1101, 1.442695
        %v1119 = vpow.pop %v1118
        %v1120 = vmul.f32 %v1102, 1.442695
        %v1121 = vpow.pop %v1120
        %v1122 = vmul.f32 %v1103, 1.442695
        %v1123 = vpow.pop %v1122
        %v1124 = vmul.f32 %v1104, 1.442695
        %v1125 = vpow.pop %v1124
        %v1126 = vmul.f32 %v1105, 1.442695
        %v1127 = vpow.pop %v1126
        %v1128 = vmul.f32 %v1106, 1.442695
        %v1129 = vpow.pop %v1128
        %v1130 = vmul.f32 %v1107, 1.442695
        %v1131 = vpow.pop %v1130
        %v1132 = vmul.f32 %v1108, 1.442695
        %v1133 = vpow.pop %v1132
        %v1134 = vmul.f32 %v1109, 1.442695
        %v1135 = vpow.pop %v1134
        %v1136 = vmul.f32 %v1110, 1.442695
        %v1137 = vpow.pop %v1136
        %v1138 = vmul.f32 %v1111, 1.442695
        %v1139 = vpow.pop %v1138
        %v1140 = vmul.f32 %v1112, 1.442695
        %v1141 = vpow.pop %v1140
        %v1142 = vmul.f32 %v1113, 1.442695
        %v1143 = vpow.pop %v1142
        %v1144 = vmul.f32 %v1114, 1.442695
        %v1145 = vpow.pop %v1144
        %v1146 = vmul.f32 %v1115, 1.442695
        %v1147 = vpow.pop %v1146
        %v1148 = vmul.f32 %v989, %v908
        %v1149 = vmul.f32 %v991, %v909
        %v1150 = vmul.f32 %v993, %v910
        %v1151 = vmul.f32 %v995, %v911
        %v1152 = vmul.f32 %v997, %v912
        %v1153 = vmul.f32 %v999, %v913
        %v1154 = vmul.f32 %v1001, %v914
        %v1155 = vmul.f32 %v1003, %v915
        %v1156 = vmul.f32 %v1005, %v916
        %v1157 = vmul.f32 %v1007, %v917
        %v1158 = vmul.f32 %v1009, %v918
        %v1159 = vmul.f32 %v1011, %v919
        %v1160 = vmul.f32 %v1013, %v920
        %v1161 = vmul.f32 %v1015, %v921
        %v1162 = vmul.f32 %v1017, %v922
        %v1163 = vmul.f32 %v1019, %v923
        %1164 = vadd.xlane.f32.xlu0 %v1117
        %v1165 = vpop.xlane.xlu0 %1164
        %1166 = vadd.xlane.f32.xlu0 %v1119
        %v1167 = vpop.xlane.xlu0 %1166
        %1168 = vadd.xlane.f32.xlu0 %v1121
        %v1169 = vpop.xlane.xlu0 %1168
        %1170 = vadd.xlane.f32.xlu0 %v1123
        %v1171 = vpop.xlane.xlu0 %1170
        %1172 = vadd.xlane.f32.xlu0 %v1125
        %v1173 = vpop.xlane.xlu0 %1172
        %1174 = vadd.xlane.f32.xlu0 %v1127
        %v1175 = vpop.xlane.xlu0 %1174
        %1176 = vadd.xlane.f32.xlu0 %v1129
        %v1177 = vpop.xlane.xlu0 %1176
        %1178 = vadd.xlane.f32.xlu0 %v1131
        %v1179 = vpop.xlane.xlu0 %1178
        %1180 = vadd.xlane.f32.xlu0 %v1133
        %v1181 = vpop.xlane.xlu0 %1180
        %1182 = vadd.xlane.f32.xlu0 %v1135
        %v1183 = vpop.xlane.xlu0 %1182
        %1184 = vadd.xlane.f32.xlu0 %v1137
        %v1185 = vpop.xlane.xlu0 %1184
        %1186 = vadd.xlane.f32.xlu0 %v1139
        %v1187 = vpop.xlane.xlu0 %1186
        %1188 = vadd.xlane.f32.xlu0 %v1141
        %v1189 = vpop.xlane.xlu0 %1188
        %1190 = vadd.xlane.f32.xlu0 %v1143
        %v1191 = vpop.xlane.xlu0 %1190
        %1192 = vadd.xlane.f32.xlu0 %v1145
        %v1193 = vpop.xlane.xlu0 %1192
        %1194 = vadd.xlane.f32.xlu0 %v1147
        %v1195 = vpop.xlane.xlu0 %1194
        %v1196 = vadd.f32 %v1148, %v1165
        %v1197 = vadd.f32 %v1149, %v1167
        %v1198 = vadd.f32 %v1150, %v1169
        %v1199 = vadd.f32 %v1151, %v1171
        %v1200 = vadd.f32 %v1152, %v1173
        %v1201 = vadd.f32 %v1153, %v1175
        %v1202 = vadd.f32 %v1154, %v1177
        %v1203 = vadd.f32 %v1155, %v1179
        %v1204 = vadd.f32 %v1156, %v1181
        %v1205 = vadd.f32 %v1157, %v1183
        %v1206 = vadd.f32 %v1158, %v1185
        %v1207 = vadd.f32 %v1159, %v1187
        %v1208 = vadd.f32 %v1160, %v1189
        %v1209 = vadd.f32 %v1161, %v1191
        %v1210 = vadd.f32 %v1162, %v1193
        %v1211 = vadd.f32 %v1163, %v1195
        %vm1212 = vcmask 7168
        %1213 = vst.msk [vmem:[#allocation4] sm:$0xff] %vm1212, %v1196
        %1214 = vst.msk [vmem:[#allocation4 + $0x8] sm:$0xff] %vm1212, %v1197
        %1215 = vst.msk [vmem:[#allocation4 + $0x10] sm:$0xff] %vm1212, %v1198
        %1216 = vst.msk [vmem:[#allocation4 + $0x18] sm:$0xff] %vm1212, %v1199
        %1217 = vst.msk [vmem:[#allocation4 + $0x20] sm:$0xff] %vm1212, %v1200
        %1218 = vst.msk [vmem:[#allocation4 + $0x28] sm:$0xff] %vm1212, %v1201
        %1219 = vst.msk [vmem:[#allocation4 + $0x30] sm:$0xff] %vm1212, %v1202
        %1220 = vst.msk [vmem:[#allocation4 + $0x38] sm:$0xff] %vm1212, %v1203
        %1221 = vst.msk [vmem:[#allocation4 + $0x40] sm:$0xff] %vm1212, %v1204
        %1222 = vst.msk [vmem:[#allocation4 + $0x48] sm:$0xff] %vm1212, %v1205
        %1223 = vst.msk [vmem:[#allocation4 + $0x50] sm:$0xff] %vm1212, %v1206
        %1224 = vst.msk [vmem:[#allocation4 + $0x58] sm:$0xff] %vm1212, %v1207
        %1225 = vst.msk [vmem:[#allocation4 + $0x60] sm:$0xff] %vm1212, %v1208
        %1226 = vst.msk [vmem:[#allocation4 + $0x68] sm:$0xff] %vm1212, %v1209
        %1227 = vst.msk [vmem:[#allocation4 + $0x70] sm:$0xff] %vm1212, %v1210
        %1228 = vst.msk [vmem:[#allocation4 + $0x78] sm:$0xff] %vm1212, %v1211
        %1229 = vst.msk [vmem:[#allocation3] sm:$0xff] %vm1212, %v956
        %1230 = vst.msk [vmem:[#allocation3 + $0x8] sm:$0xff] %vm1212, %v957
        %1231 = vst.msk [vmem:[#allocation3 + $0x10] sm:$0xff] %vm1212, %v958
        %1232 = vst.msk [vmem:[#allocation3 + $0x18] sm:$0xff] %vm1212, %v959
        %1233 = vst.msk [vmem:[#allocation3 + $0x20] sm:$0xff] %vm1212, %v960
        %1234 = vst.msk [vmem:[#allocation3 + $0x28] sm:$0xff] %vm1212, %v961
        %1235 = vst.msk [vmem:[#allocation3 + $0x30] sm:$0xff] %vm1212, %v962
        %1236 = vst.msk [vmem:[#allocation3 + $0x38] sm:$0xff] %vm1212, %v963
        %1237 = vst.msk [vmem:[#allocation3 + $0x40] sm:$0xff] %vm1212, %v964
        %1238 = vst.msk [vmem:[#allocation3 + $0x48] sm:$0xff] %vm1212, %v965
        %1239 = vst.msk [vmem:[#allocation3 + $0x50] sm:$0xff] %vm1212, %v966
        %1240 = vst.msk [vmem:[#allocation3 + $0x58] sm:$0xff] %vm1212, %v967
        %1241 = vst.msk [vmem:[#allocation3 + $0x60] sm:$0xff] %vm1212, %v968
        %1242 = vst.msk [vmem:[#allocation3 + $0x68] sm:$0xff] %vm1212, %v969
        %1243 = vst.msk [vmem:[#allocation3 + $0x70] sm:$0xff] %vm1212, %v970
        %1244 = vst.msk [vmem:[#allocation3 + $0x78] sm:$0xff] %vm1212, %v971
        %1246 = vset.pattern.permute.xlu0 0
        %1247 = vperm.xlu0 %1246, %v586
        %v1248 = vpop.permute.xlu0 %1247
        %1251 = vset.pattern.permute.xlu0 0
        %1252 = vperm.xlu0 %1251, %v587
        %v1253 = vpop.permute.xlu0 %1252
        %1256 = vset.pattern.permute.xlu0 0
        %1257 = vperm.xlu0 %1256, %v588
        %v1258 = vpop.permute.xlu0 %1257
        %1261 = vset.pattern.permute.xlu0 0
        %1262 = vperm.xlu0 %1261, %v589
        %v1263 = vpop.permute.xlu0 %1262
        %1266 = vset.pattern.permute.xlu0 0
        %1267 = vperm.xlu0 %1266, %v590
        %v1268 = vpop.permute.xlu0 %1267
        %1271 = vset.pattern.permute.xlu0 0
        %1272 = vperm.xlu0 %1271, %v591
        %v1273 = vpop.permute.xlu0 %1272
        %1276 = vset.pattern.permute.xlu0 0
        %1277 = vperm.xlu0 %1276, %v592
        %v1278 = vpop.permute.xlu0 %1277
        %1281 = vset.pattern.permute.xlu0 0
        %1282 = vperm.xlu0 %1281, %v593
        %v1283 = vpop.permute.xlu0 %1282
        %1286 = vset.pattern.permute.xlu0 0
        %1287 = vperm.xlu0 %1286, %v594
        %v1288 = vpop.permute.xlu0 %1287
        %1291 = vset.pattern.permute.xlu0 0
        %1292 = vperm.xlu0 %1291, %v595
        %v1293 = vpop.permute.xlu0 %1292
        %1296 = vset.pattern.permute.xlu0 0
        %1297 = vperm.xlu0 %1296, %v596
        %v1298 = vpop.permute.xlu0 %1297
        %1301 = vset.pattern.permute.xlu0 0
        %1302 = vperm.xlu0 %1301, %v597
        %v1303 = vpop.permute.xlu0 %1302
        %1306 = vset.pattern.permute.xlu0 0
        %1307 = vperm.xlu0 %1306, %v598
        %v1308 = vpop.permute.xlu0 %1307
        %1311 = vset.pattern.permute.xlu0 0
        %1312 = vperm.xlu0 %1311, %v599
        %v1313 = vpop.permute.xlu0 %1312
        %1316 = vset.pattern.permute.xlu0 0
        %1317 = vperm.xlu0 %1316, %v600
        %v1318 = vpop.permute.xlu0 %1317
        %1321 = vset.pattern.permute.xlu0 0
        %1322 = vperm.xlu0 %1321, %v601
        %v1323 = vpop.permute.xlu0 %1322
        %v1325 = vmul.f32 %v554, %v1248
        %v1326 = vmul.f32 %v555, %v1253
        %v1327 = vmul.f32 %v556, %v1258
        %v1328 = vmul.f32 %v557, %v1263
        %v1329 = vmul.f32 %v558, %v1268
        %v1330 = vmul.f32 %v559, %v1273
        %v1331 = vmul.f32 %v560, %v1278
        %v1332 = vmul.f32 %v561, %v1283
        %v1333 = vmul.f32 %v562, %v1288
        %v1334 = vmul.f32 %v563, %v1293
        %v1335 = vmul.f32 %v564, %v1298
        %v1336 = vmul.f32 %v565, %v1303
        %v1337 = vmul.f32 %v566, %v1308
        %v1338 = vmul.f32 %v567, %v1313
        %v1339 = vmul.f32 %v568, %v1318
        %v1340 = vmul.f32 %v569, %v1323
        %v1341 = vpack.c.bf16 %v1326, %v1325
        %v1342 = vpack.c.bf16 %v1328, %v1327
        %v1343 = vpack.c.bf16 %v1330, %v1329
        %v1344 = vpack.c.bf16 %v1332, %v1331
        %v1345 = vpack.c.bf16 %v1334, %v1333
        %v1346 = vpack.c.bf16 %v1336, %v1335
        %v1347 = vpack.c.bf16 %v1338, %v1337
        %v1348 = vpack.c.bf16 %v1340, %v1339
        %v1349 = vpack.c.bf16 %v1119, %v1117
        %v1350 = vpack.c.bf16 %v1123, %v1121
        %v1351 = vpack.c.bf16 %v1127, %v1125
        %v1352 = vpack.c.bf16 %v1131, %v1129
        %v1353 = vpack.c.bf16 %v1135, %v1133
        %v1354 = vpack.c.bf16 %v1139, %v1137
        %v1355 = vpack.c.bf16 %v1143, %v1141
        %v1356 = vpack.c.bf16 %v1147, %v1145
        %1357 = vmatprep.subr.bf16.mxu0 0
        %1358 = vmatpush1.bf16.msra.mxu0 %v1348
        %1359 = vmatprep.subr.bf16.mxu0 0
        %1360 = vmatpush1.bf16.msra.mxu0 %v1347
        %1361 = vmatprep.subr.bf16.mxu0 0
        %1362 = vmatpush1.bf16.msra.mxu0 %v1346
        %1363 = vmatprep.subr.bf16.mxu0 0
        %1364 = vmatpush1.bf16.msra.mxu0 %v1345
        %1365 = vmatprep.subr.bf16.mxu0 0
        %1366 = vmatpush1.bf16.msra.mxu0 %v1344
        %1367 = vmatprep.subr.bf16.mxu0 0
        %1368 = vmatpush1.bf16.msra.mxu0 %v1343
        %1369 = vmatprep.subr.bf16.mxu0 0
        %1370 = vmatpush1.bf16.msra.mxu0 %v1342
        %1371 = vmatprep.subr.bf16.mxu0 0
        %1372 = vmatpush1.bf16.msra.mxu0 %v1341
        %1373 = vmatprep.subr.bf16.mxu0 0
        %1374 = vmatpush2.bf16.msra.mxu0 0
        %1375 = vmatprep.subr.bf16.mxu0 0
        %1376 = vmatpush2.bf16.msra.mxu0 0
        %1377 = vmatprep.subr.bf16.mxu0 0
        %1378 = vmatpush2.bf16.msra.mxu0 0
        %1379 = vmatprep.subr.bf16.mxu0 0
        %1380 = vmatpush2.bf16.msra.mxu0 0
        %1381 = vmatprep.subr.bf16.mxu0 0
        %1382 = vmatpush2.bf16.msra.mxu0 0
        %1383 = vmatprep.subr.bf16.mxu0 0
        %1384 = vmatpush2.bf16.msra.mxu0 0
        %1385 = vmatprep.subr.bf16.mxu0 0
        %1386 = vmatpush2.bf16.msra.mxu0 0
        %1387 = vmatprep.subr.bf16.mxu0 0
        %1388 = vmatpush2.bf16.msra.mxu0 0
        %1389 = vmatprep.mubr.bf16.mxu0 0
        %1390 = vmatmul.mubr.bf16.gmra.mxu0 %v1349
        %v1391 = vpop.f32.mrf.mxu0
        %v1392 = vadd.f32 0.0, %v1391
        %v1393 = vpop.f32.mrf.mxu0
        %v1394 = vpop.f32.mrf.mxu0
        %v1395 = vadd.f32 0.0, %v1394
        %v1396 = vpop.f32.mrf.mxu0
        %1397 = vmatprep.mubr.bf16.mxu0 0
        %1398 = vmatmul.mubr.bf16.gmra.mxu0 %v1350
        %v1399 = vpop.f32.mrf.mxu0
        %v1400 = vadd.f32 0.0, %v1399
        %v1401 = vpop.f32.mrf.mxu0
        %v1402 = vpop.f32.mrf.mxu0
        %v1403 = vadd.f32 0.0, %v1402
        %v1404 = vpop.f32.mrf.mxu0
        %1405 = vmatprep.mubr.bf16.mxu0 0
        %1406 = vmatmul.mubr.bf16.gmra.mxu0 %v1351
        %v1407 = vpop.f32.mrf.mxu0
        %v1408 = vadd.f32 0.0, %v1407
        %v1409 = vpop.f32.mrf.mxu0
        %v1410 = vpop.f32.mrf.mxu0
        %v1411 = vadd.f32 0.0, %v1410
        %v1412 = vpop.f32.mrf.mxu0
        %1413 = vmatprep.mubr.bf16.mxu0 0
        %1414 = vmatmul.mubr.bf16.gmra.mxu0 %v1352
        %v1415 = vpop.f32.mrf.mxu0
        %v1416 = vadd.f32 0.0, %v1415
        %v1417 = vpop.f32.mrf.mxu0
        %v1418 = vpop.f32.mrf.mxu0
        %v1419 = vadd.f32 0.0, %v1418
        %v1420 = vpop.f32.mrf.mxu0
        %1421 = vmatprep.mubr.bf16.mxu0 0
        %1422 = vmatmul.mubr.bf16.gmra.mxu0 %v1353
        %v1423 = vpop.f32.mrf.mxu0
        %v1424 = vadd.f32 0.0, %v1423
        %v1425 = vpop.f32.mrf.mxu0
        %v1426 = vpop.f32.mrf.mxu0
        %v1427 = vadd.f32 0.0, %v1426
        %v1428 = vpop.f32.mrf.mxu0
        %1429 = vmatprep.mubr.bf16.mxu0 0
        %1430 = vmatmul.mubr.bf16.gmra.mxu0 %v1354
        %v1431 = vpop.f32.mrf.mxu0
        %v1432 = vadd.f32 0.0, %v1431
        %v1433 = vpop.f32.mrf.mxu0
        %v1434 = vpop.f32.mrf.mxu0
        %v1435 = vadd.f32 0.0, %v1434
        %v1436 = vpop.f32.mrf.mxu0
        %1437 = vmatprep.mubr.bf16.mxu0 0
        %1438 = vmatmul.mubr.bf16.gmra.mxu0 %v1355
        %v1439 = vpop.f32.mrf.mxu0
        %v1440 = vadd.f32 0.0, %v1439
        %v1441 = vpop.f32.mrf.mxu0
        %v1442 = vpop.f32.mrf.mxu0
        %v1443 = vadd.f32 0.0, %v1442
        %v1444 = vpop.f32.mrf.mxu0
        %1445 = vmatprep.mubr.bf16.mxu0 0
        %1446 = vmatmul.mubr.bf16.gmra.mxu0 %v1356
        %v1447 = vpop.f32.mrf.mxu0
        %v1448 = vadd.f32 0.0, %v1447
        %v1449 = vpop.f32.mrf.mxu0
        %v1450 = vpop.f32.mrf.mxu0
        %v1451 = vadd.f32 0.0, %v1450
        %v1452 = vpop.f32.mrf.mxu0
        %1453 = vdwg.mxu0
        %v1454 = vld [vmem:[#allocation2] sm:$0xff]
        %v1455 = vld [vmem:[#allocation2 + $0x8] sm:$0xff]
        %v1456 = vld [vmem:[#allocation2 + $0x10] sm:$0xff]
        %v1457 = vld [vmem:[#allocation2 + $0x18] sm:$0xff]
        %v1458 = vld [vmem:[#allocation2 + $0x20] sm:$0xff]
        %v1459 = vld [vmem:[#allocation2 + $0x28] sm:$0xff]
        %v1460 = vld [vmem:[#allocation2 + $0x30] sm:$0xff]
        %v1461 = vld [vmem:[#allocation2 + $0x38] sm:$0xff]
        %v1462 = vld [vmem:[#allocation2 + $0x40] sm:$0xff]
        %v1463 = vld [vmem:[#allocation2 + $0x48] sm:$0xff]
        %v1464 = vld [vmem:[#allocation2 + $0x50] sm:$0xff]
        %v1465 = vld [vmem:[#allocation2 + $0x58] sm:$0xff]
        %v1466 = vld [vmem:[#allocation2 + $0x60] sm:$0xff]
        %v1467 = vld [vmem:[#allocation2 + $0x68] sm:$0xff]
        %v1468 = vld [vmem:[#allocation2 + $0x70] sm:$0xff]
        %v1469 = vld [vmem:[#allocation2 + $0x78] sm:$0xff]
        %1471 = vset.pattern.permute.xlu0 0
        %1472 = vperm.xlu0 %1471, %v989
        %v1473 = vpop.permute.xlu0 %1472
        %1476 = vset.pattern.permute.xlu0 0
        %1477 = vperm.xlu0 %1476, %v991
        %v1478 = vpop.permute.xlu0 %1477
        %1481 = vset.pattern.permute.xlu0 0
        %1482 = vperm.xlu0 %1481, %v993
        %v1483 = vpop.permute.xlu0 %1482
        %1486 = vset.pattern.permute.xlu0 0
        %1487 = vperm.xlu0 %1486, %v995
        %v1488 = vpop.permute.xlu0 %1487
        %1491 = vset.pattern.permute.xlu0 0
        %1492 = vperm.xlu0 %1491, %v997
        %v1493 = vpop.permute.xlu0 %1492
        %1496 = vset.pattern.permute.xlu0 0
        %1497 = vperm.xlu0 %1496, %v999
        %v1498 = vpop.permute.xlu0 %1497
        %1501 = vset.pattern.permute.xlu0 0
        %1502 = vperm.xlu0 %1501, %v1001
        %v1503 = vpop.permute.xlu0 %1502
        %1506 = vset.pattern.permute.xlu0 0
        %1507 = vperm.xlu0 %1506, %v1003
        %v1508 = vpop.permute.xlu0 %1507
        %1511 = vset.pattern.permute.xlu0 0
        %1512 = vperm.xlu0 %1511, %v1005
        %v1513 = vpop.permute.xlu0 %1512
        %1516 = vset.pattern.permute.xlu0 0
        %1517 = vperm.xlu0 %1516, %v1007
        %v1518 = vpop.permute.xlu0 %1517
        %1521 = vset.pattern.permute.xlu0 0
        %1522 = vperm.xlu0 %1521, %v1009
        %v1523 = vpop.permute.xlu0 %1522
        %1526 = vset.pattern.permute.xlu0 0
        %1527 = vperm.xlu0 %1526, %v1011
        %v1528 = vpop.permute.xlu0 %1527
        %1531 = vset.pattern.permute.xlu0 0
        %1532 = vperm.xlu0 %1531, %v1013
        %v1533 = vpop.permute.xlu0 %1532
        %1536 = vset.pattern.permute.xlu0 0
        %1537 = vperm.xlu0 %1536, %v1015
        %v1538 = vpop.permute.xlu0 %1537
        %1541 = vset.pattern.permute.xlu0 0
        %1542 = vperm.xlu0 %1541, %v1017
        %v1543 = vpop.permute.xlu0 %1542
        %1546 = vset.pattern.permute.xlu0 0
        %1547 = vperm.xlu0 %1546, %v1019
        %v1548 = vpop.permute.xlu0 %1547
        %v1550 = vmul.f32 %v1473, %v1454
        %v1551 = vmul.f32 %v1478, %v1455
        %v1552 = vmul.f32 %v1483, %v1456
        %v1553 = vmul.f32 %v1488, %v1457
        %v1554 = vmul.f32 %v1493, %v1458
        %v1555 = vmul.f32 %v1498, %v1459
        %v1556 = vmul.f32 %v1503, %v1460
        %v1557 = vmul.f32 %v1508, %v1461
        %v1558 = vmul.f32 %v1513, %v1462
        %v1559 = vmul.f32 %v1518, %v1463
        %v1560 = vmul.f32 %v1523, %v1464
        %v1561 = vmul.f32 %v1528, %v1465
        %v1562 = vmul.f32 %v1533, %v1466
        %v1563 = vmul.f32 %v1538, %v1467
        %v1564 = vmul.f32 %v1543, %v1468
        %v1565 = vmul.f32 %v1548, %v1469
        %v1566 = vadd.f32 %v1550, %v1392
        %v1567 = vadd.f32 %v1551, %v1395
        %v1568 = vadd.f32 %v1552, %v1400
        %v1569 = vadd.f32 %v1553, %v1403
        %v1570 = vadd.f32 %v1554, %v1408
        %v1571 = vadd.f32 %v1555, %v1411
        %v1572 = vadd.f32 %v1556, %v1416
        %v1573 = vadd.f32 %v1557, %v1419
        %v1574 = vadd.f32 %v1558, %v1424
        %v1575 = vadd.f32 %v1559, %v1427
        %v1576 = vadd.f32 %v1560, %v1432
        %v1577 = vadd.f32 %v1561, %v1435
        %v1578 = vadd.f32 %v1562, %v1440
        %v1579 = vadd.f32 %v1563, %v1443
        %v1580 = vadd.f32 %v1564, %v1448
        %v1581 = vadd.f32 %v1565, %v1451
        %1582 = vst.msk [vmem:[#allocation2] sm:$0xff] %vm746, %v1566
        %1583 = vst.msk [vmem:[#allocation2 + $0x8] sm:$0xff] %vm746, %v1567
        %1584 = vst.msk [vmem:[#allocation2 + $0x10] sm:$0xff] %vm746, %v1568
        %1585 = vst.msk [vmem:[#allocation2 + $0x18] sm:$0xff] %vm746, %v1569
        %1586 = vst.msk [vmem:[#allocation2 + $0x20] sm:$0xff] %vm746, %v1570
        %1587 = vst.msk [vmem:[#allocation2 + $0x28] sm:$0xff] %vm746, %v1571
        %1588 = vst.msk [vmem:[#allocation2 + $0x30] sm:$0xff] %vm746, %v1572
        %1589 = vst.msk [vmem:[#allocation2 + $0x38] sm:$0xff] %vm746, %v1573
        %1590 = vst.msk [vmem:[#allocation2 + $0x40] sm:$0xff] %vm746, %v1574
        %1591 = vst.msk [vmem:[#allocation2 + $0x48] sm:$0xff] %vm746, %v1575
        %1592 = vst.msk [vmem:[#allocation2 + $0x50] sm:$0xff] %vm746, %v1576
        %1593 = vst.msk [vmem:[#allocation2 + $0x58] sm:$0xff] %vm746, %v1577
        %1594 = vst.msk [vmem:[#allocation2 + $0x60] sm:$0xff] %vm746, %v1578
        %1595 = vst.msk [vmem:[#allocation2 + $0x68] sm:$0xff] %vm746, %v1579
        %1596 = vst.msk [vmem:[#allocation2 + $0x70] sm:$0xff] %vm746, %v1580
        %1597 = vst.msk [vmem:[#allocation2 + $0x78] sm:$0xff] %vm746, %v1581
        %1598 = vset.pattern.permute.xlu0 1
        %1599 = vperm.xlu0 %1598, %v618
        %v1600 = vpop.permute.xlu0 %1599
        %1602 = vset.pattern.permute.xlu0 1
        %1603 = vperm.xlu0 %1602, %v619
        %v1604 = vpop.permute.xlu0 %1603
        %1606 = vset.pattern.permute.xlu0 1
        %1607 = vperm.xlu0 %1606, %v620
        %v1608 = vpop.permute.xlu0 %1607
        %1610 = vset.pattern.permute.xlu0 1
        %1611 = vperm.xlu0 %1610, %v621
        %v1612 = vpop.permute.xlu0 %1611
        %1614 = vset.pattern.permute.xlu0 1
        %1615 = vperm.xlu0 %1614, %v622
        %v1616 = vpop.permute.xlu0 %1615
        %1618 = vset.pattern.permute.xlu0 1
        %1619 = vperm.xlu0 %1618, %v623
        %v1620 = vpop.permute.xlu0 %1619
        %1622 = vset.pattern.permute.xlu0 1
        %1623 = vperm.xlu0 %1622, %v624
        %v1624 = vpop.permute.xlu0 %1623
        %1626 = vset.pattern.permute.xlu0 1
        %1627 = vperm.xlu0 %1626, %v625
        %v1628 = vpop.permute.xlu0 %1627
        %1630 = vset.pattern.permute.xlu0 1
        %1631 = vperm.xlu0 %1630, %v626
        %v1632 = vpop.permute.xlu0 %1631
        %1634 = vset.pattern.permute.xlu0 1
        %1635 = vperm.xlu0 %1634, %v627
        %v1636 = vpop.permute.xlu0 %1635
        %1638 = vset.pattern.permute.xlu0 1
        %1639 = vperm.xlu0 %1638, %v628
        %v1640 = vpop.permute.xlu0 %1639
        %1642 = vset.pattern.permute.xlu0 1
        %1643 = vperm.xlu0 %1642, %v629
        %v1644 = vpop.permute.xlu0 %1643
        %1646 = vset.pattern.permute.xlu0 1
        %1647 = vperm.xlu0 %1646, %v630
        %v1648 = vpop.permute.xlu0 %1647
        %1650 = vset.pattern.permute.xlu0 1
        %1651 = vperm.xlu0 %1650, %v631
        %v1652 = vpop.permute.xlu0 %1651
        %1654 = vset.pattern.permute.xlu0 1
        %1655 = vperm.xlu0 %1654, %v632
        %v1656 = vpop.permute.xlu0 %1655
        %1658 = vset.pattern.permute.xlu0 1
        %1659 = vperm.xlu0 %1658, %v633
        %v1660 = vpop.permute.xlu0 %1659
        %v1662 = vmul.f32 %v522, %v1600
        %v1663 = vmul.f32 %v523, %v1604
        %v1664 = vmul.f32 %v524, %v1608
        %v1665 = vmul.f32 %v525, %v1612
        %v1666 = vmul.f32 %v526, %v1616
        %v1667 = vmul.f32 %v527, %v1620
        %v1668 = vmul.f32 %v528, %v1624
        %v1669 = vmul.f32 %v529, %v1628
        %v1670 = vmul.f32 %v530, %v1632
        %v1671 = vmul.f32 %v531, %v1636
        %v1672 = vmul.f32 %v532, %v1640
        %v1673 = vmul.f32 %v533, %v1644
        %v1674 = vmul.f32 %v534, %v1648
        %v1675 = vmul.f32 %v535, %v1652
        %v1676 = vmul.f32 %v536, %v1656
        %v1677 = vmul.f32 %v537, %v1660
        %v1678 = vpack.c.bf16 %v1663, %v1662
        %v1679 = vpack.c.bf16 %v1665, %v1664
        %v1680 = vpack.c.bf16 %v1667, %v1666
        %v1681 = vpack.c.bf16 %v1669, %v1668
        %v1682 = vpack.c.bf16 %v1671, %v1670
        %v1683 = vpack.c.bf16 %v1673, %v1672
        %v1684 = vpack.c.bf16 %v1675, %v1674
        %v1685 = vpack.c.bf16 %v1677, %v1676
        %1694 = vrot.lane.b32.xlu0 %v1678, 96
        %v1695 = vpop.permute.xlu0 %1694
        %1696 = vrot.lane.b32.xlu0 %v1679, 96
        %v1697 = vpop.permute.xlu0 %1696
        %1698 = vrot.lane.b32.xlu0 %v1680, 96
        %v1699 = vpop.permute.xlu0 %1698
        %1700 = vrot.lane.b32.xlu0 %v1681, 96
        %v1701 = vpop.permute.xlu0 %1700
        %1702 = vrot.lane.b32.xlu0 %v1682, 96
        %v1703 = vpop.permute.xlu0 %1702
        %1704 = vrot.lane.b32.xlu0 %v1683, 96
        %v1705 = vpop.permute.xlu0 %1704
        %1706 = vrot.lane.b32.xlu0 %v1684, 96
        %v1707 = vpop.permute.xlu0 %1706
        %1708 = vrot.lane.b32.xlu0 %v1685, 96
        %v1709 = vpop.permute.xlu0 %1708
        %1718 = vrot.lane.b32.xlu0 %v738, 96
        %v1719 = vpop.permute.xlu0 %1718
        %1720 = vrot.lane.b32.xlu0 %v739, 96
        %v1721 = vpop.permute.xlu0 %1720
        %1722 = vrot.lane.b32.xlu0 %v740, 96
        %v1723 = vpop.permute.xlu0 %1722
        %1724 = vrot.lane.b32.xlu0 %v741, 96
        %v1725 = vpop.permute.xlu0 %1724
        %1726 = vrot.lane.b32.xlu0 %v742, 96
        %v1727 = vpop.permute.xlu0 %1726
        %1728 = vrot.lane.b32.xlu0 %v743, 96
        %v1729 = vpop.permute.xlu0 %1728
        %1730 = vrot.lane.b32.xlu0 %v744, 96
        %v1731 = vpop.permute.xlu0 %1730
        %1732 = vrot.lane.b32.xlu0 %v745, 96
        %v1733 = vpop.permute.xlu0 %1732
        %v1735 = vsel %vm746, %v1695, 0
        %v1738 = vsel %vm746, %v1697, 0
        %v1741 = vsel %vm746, %v1699, 0
        %v1744 = vsel %vm746, %v1701, 0
        %v1747 = vsel %vm746, %v1703, 0
        %v1750 = vsel %vm746, %v1705, 0
        %v1753 = vsel %vm746, %v1707, 0
        %v1756 = vsel %vm746, %v1709, 0
        %v1759 = vsel %vm746, %v1719, 0
        %v1762 = vsel %vm746, %v1721, 0
        %v1765 = vsel %vm746, %v1723, 0
        %v1768 = vsel %vm746, %v1725, 0
        %v1771 = vsel %vm746, %v1727, 0
        %v1774 = vsel %vm746, %v1729, 0
        %v1777 = vsel %vm746, %v1731, 0
        %v1780 = vsel %vm746, %v1733, 0
        %1782 = vmatprep.subr.bf16.mxu0 0
        %1783 = vmatpush1.bf16.xpose.msra.mxu0 %v1780
        %1784 = vmatprep.subr.bf16.mxu0 0
        %1785 = vmatpush1.bf16.xpose.msra.mxu0 %v1777
        %1786 = vmatprep.subr.bf16.mxu0 0
        %1787 = vmatpush1.bf16.xpose.msra.mxu0 %v1774
        %1788 = vmatprep.subr.bf16.mxu0 0
        %1789 = vmatpush1.bf16.xpose.msra.mxu0 %v1771
        %1790 = vmatprep.subr.bf16.mxu0 0
        %1791 = vmatpush1.bf16.xpose.msra.mxu0 %v1768
        %1792 = vmatprep.subr.bf16.mxu0 0
        %1793 = vmatpush1.bf16.xpose.msra.mxu0 %v1765
        %1794 = vmatprep.subr.bf16.mxu0 0
        %1795 = vmatpush1.bf16.xpose.msra.mxu0 %v1762
        %1796 = vmatprep.subr.bf16.mxu0 0
        %1797 = vmatpush1.bf16.xpose.msra.mxu0 %v1759
        %1798 = vmatprep.subr.bf16.mxu0 0
        %1799 = vmatpush2.bf16.xpose.msra.mxu0 0
        %1800 = vmatprep.subr.bf16.mxu0 0
        %1801 = vmatpush2.bf16.xpose.msra.mxu0 0
        %1802 = vmatprep.subr.bf16.mxu0 0
        %1803 = vmatpush2.bf16.xpose.msra.mxu0 0
        %1804 = vmatprep.subr.bf16.mxu0 0
        %1805 = vmatpush2.bf16.xpose.msra.mxu0 0
        %1806 = vmatprep.subr.bf16.mxu0 0
        %1807 = vmatpush2.bf16.xpose.msra.mxu0 0
        %1808 = vmatprep.subr.bf16.mxu0 0
        %1809 = vmatpush2.bf16.xpose.msra.mxu0 0
        %1810 = vmatprep.subr.bf16.mxu0 0
        %1811 = vmatpush2.bf16.xpose.msra.mxu0 0
        %1812 = vmatprep.subr.bf16.mxu0 0
        %1813 = vmatpush2.bf16.xpose.msra.mxu0 0
        %1814 = vmatprep.mubr.bf16.mxu0 0
        %1815 = vmatmul.mubr.bf16.gmra.mxu0 %v1735
        %v1816 = vpop.f32.mrf.mxu0
        %v1817 = vadd.f32 %v602, %v1816
        %v1818 = vpop.f32.mrf.mxu0
        %v1819 = vpop.f32.mrf.mxu0
        %v1820 = vadd.f32 %v603, %v1819
        %v1821 = vpop.f32.mrf.mxu0
        %1822 = vmatprep.mubr.bf16.mxu0 0
        %1823 = vmatmul.mubr.bf16.gmra.mxu0 %v1738
        %v1824 = vpop.f32.mrf.mxu0
        %v1825 = vadd.f32 %v604, %v1824
        %v1826 = vpop.f32.mrf.mxu0
        %v1827 = vpop.f32.mrf.mxu0
        %v1828 = vadd.f32 %v605, %v1827
        %v1829 = vpop.f32.mrf.mxu0
        %1830 = vmatprep.mubr.bf16.mxu0 0
        %1831 = vmatmul.mubr.bf16.gmra.mxu0 %v1741
        %v1832 = vpop.f32.mrf.mxu0
        %v1833 = vadd.f32 %v606, %v1832
        %v1834 = vpop.f32.mrf.mxu0
        %v1835 = vpop.f32.mrf.mxu0
        %v1836 = vadd.f32 %v607, %v1835
        %v1837 = vpop.f32.mrf.mxu0
        %1838 = vmatprep.mubr.bf16.mxu0 0
        %1839 = vmatmul.mubr.bf16.gmra.mxu0 %v1744
        %v1840 = vpop.f32.mrf.mxu0
        %v1841 = vadd.f32 %v608, %v1840
        %v1842 = vpop.f32.mrf.mxu0
        %v1843 = vpop.f32.mrf.mxu0
        %v1844 = vadd.f32 %v609, %v1843
        %v1845 = vpop.f32.mrf.mxu0
        %1846 = vmatprep.mubr.bf16.mxu0 0
        %1847 = vmatmul.mubr.bf16.gmra.mxu0 %v1747
        %v1848 = vpop.f32.mrf.mxu0
        %v1849 = vadd.f32 %v610, %v1848
        %v1850 = vpop.f32.mrf.mxu0
        %v1851 = vpop.f32.mrf.mxu0
        %v1852 = vadd.f32 %v611, %v1851
        %v1853 = vpop.f32.mrf.mxu0
        %1854 = vmatprep.mubr.bf16.mxu0 0
        %1855 = vmatmul.mubr.bf16.gmra.mxu0 %v1750
        %v1856 = vpop.f32.mrf.mxu0
        %v1857 = vadd.f32 %v612, %v1856
        %v1858 = vpop.f32.mrf.mxu0
        %v1859 = vpop.f32.mrf.mxu0
        %v1860 = vadd.f32 %v613, %v1859
        %v1861 = vpop.f32.mrf.mxu0
        %1862 = vmatprep.mubr.bf16.mxu0 0
        %1863 = vmatmul.mubr.bf16.gmra.mxu0 %v1753
        %v1864 = vpop.f32.mrf.mxu0
        %v1865 = vadd.f32 %v614, %v1864
        %v1866 = vpop.f32.mrf.mxu0
        %v1867 = vpop.f32.mrf.mxu0
        %v1868 = vadd.f32 %v615, %v1867
        %v1869 = vpop.f32.mrf.mxu0
        %1870 = vmatprep.mubr.bf16.mxu0 0
        %1871 = vmatmul.mubr.bf16.gmra.mxu0 %v1756
        %v1872 = vpop.f32.mrf.mxu0
        %v1873 = vadd.f32 %v616, %v1872
        %v1874 = vpop.f32.mrf.mxu0
        %v1875 = vpop.f32.mrf.mxu0
        %v1876 = vadd.f32 %v617, %v1875
        %v1877 = vpop.f32.mrf.mxu0
        %1878 = vdwg.mxu0
        %v1879 = vld [vmem:[#allocation3] sm:$0xff]
        %v1880 = vld [vmem:[#allocation3 + $0x8] sm:$0xff]
        %v1881 = vld [vmem:[#allocation3 + $0x10] sm:$0xff]
        %v1882 = vld [vmem:[#allocation3 + $0x18] sm:$0xff]
        %v1883 = vld [vmem:[#allocation3 + $0x20] sm:$0xff]
        %v1884 = vld [vmem:[#allocation3 + $0x28] sm:$0xff]
        %v1885 = vld [vmem:[#allocation3 + $0x30] sm:$0xff]
        %v1886 = vld [vmem:[#allocation3 + $0x38] sm:$0xff]
        %v1887 = vld [vmem:[#allocation3 + $0x40] sm:$0xff]
        %v1888 = vld [vmem:[#allocation3 + $0x48] sm:$0xff]
        %v1889 = vld [vmem:[#allocation3 + $0x50] sm:$0xff]
        %v1890 = vld [vmem:[#allocation3 + $0x58] sm:$0xff]
        %v1891 = vld [vmem:[#allocation3 + $0x60] sm:$0xff]
        %v1892 = vld [vmem:[#allocation3 + $0x68] sm:$0xff]
        %v1893 = vld [vmem:[#allocation3 + $0x70] sm:$0xff]
        %v1894 = vld [vmem:[#allocation3 + $0x78] sm:$0xff]
        %v1895 = vld [vmem:[#allocation4] sm:$0xff]
        %v1896 = vld [vmem:[#allocation4 + $0x8] sm:$0xff]
        %v1897 = vld [vmem:[#allocation4 + $0x10] sm:$0xff]
        %v1898 = vld [vmem:[#allocation4 + $0x18] sm:$0xff]
        %v1899 = vld [vmem:[#allocation4 + $0x20] sm:$0xff]
        %v1900 = vld [vmem:[#allocation4 + $0x28] sm:$0xff]
        %v1901 = vld [vmem:[#allocation4 + $0x30] sm:$0xff]
        %v1902 = vld [vmem:[#allocation4 + $0x38] sm:$0xff]
        %v1903 = vld [vmem:[#allocation4 + $0x40] sm:$0xff]
        %v1904 = vld [vmem:[#allocation4 + $0x48] sm:$0xff]
        %v1905 = vld [vmem:[#allocation4 + $0x50] sm:$0xff]
        %v1906 = vld [vmem:[#allocation4 + $0x58] sm:$0xff]
        %v1907 = vld [vmem:[#allocation4 + $0x60] sm:$0xff]
        %v1908 = vld [vmem:[#allocation4 + $0x68] sm:$0xff]
        %v1909 = vld [vmem:[#allocation4 + $0x70] sm:$0xff]
        %v1910 = vld [vmem:[#allocation4 + $0x78] sm:$0xff]
        %1911 = vmax.xlane.f32.xlu0 %v1817
        %v1912 = vpop.xlane.xlu0 %1911
        %1913 = vmax.xlane.f32.xlu0 %v1820
        %v1914 = vpop.xlane.xlu0 %1913
        %1915 = vmax.xlane.f32.xlu0 %v1825
        %v1916 = vpop.xlane.xlu0 %1915
        %1917 = vmax.xlane.f32.xlu0 %v1828
        %v1918 = vpop.xlane.xlu0 %1917
        %1919 = vmax.xlane.f32.xlu0 %v1833
        %v1920 = vpop.xlane.xlu0 %1919
        %1921 = vmax.xlane.f32.xlu0 %v1836
        %v1922 = vpop.xlane.xlu0 %1921
        %1923 = vmax.xlane.f32.xlu0 %v1841
        %v1924 = vpop.xlane.xlu0 %1923
        %1925 = vmax.xlane.f32.xlu0 %v1844
        %v1926 = vpop.xlane.xlu0 %1925
        %1927 = vmax.xlane.f32.xlu0 %v1849
        %v1928 = vpop.xlane.xlu0 %1927
        %1929 = vmax.xlane.f32.xlu0 %v1852
        %v1930 = vpop.xlane.xlu0 %1929
        %1931 = vmax.xlane.f32.xlu0 %v1857
        %v1932 = vpop.xlane.xlu0 %1931
        %1933 = vmax.xlane.f32.xlu0 %v1860
        %v1934 = vpop.xlane.xlu0 %1933
        %1935 = vmax.xlane.f32.xlu0 %v1865
        %v1936 = vpop.xlane.xlu0 %1935
        %1937 = vmax.xlane.f32.xlu0 %v1868
        %v1938 = vpop.xlane.xlu0 %1937
        %1939 = vmax.xlane.f32.xlu0 %v1873
        %v1940 = vpop.xlane.xlu0 %1939
        %1941 = vmax.xlane.f32.xlu0 %v1876
        %v1942 = vpop.xlane.xlu0 %1941
        %v1943 = vmax.f32 %v1879, %v1912
        %v1944 = vmax.f32 %v1880, %v1914
        %v1945 = vmax.f32 %v1881, %v1916
        %v1946 = vmax.f32 %v1882, %v1918
        %v1947 = vmax.f32 %v1883, %v1920
        %v1948 = vmax.f32 %v1884, %v1922
        %v1949 = vmax.f32 %v1885, %v1924
        %v1950 = vmax.f32 %v1886, %v1926
        %v1951 = vmax.f32 %v1887, %v1928
        %v1952 = vmax.f32 %v1888, %v1930
        %v1953 = vmax.f32 %v1889, %v1932
        %v1954 = vmax.f32 %v1890, %v1934
        %v1955 = vmax.f32 %v1891, %v1936
        %v1956 = vmax.f32 %v1892, %v1938
        %v1957 = vmax.f32 %v1893, %v1940
        %v1958 = vmax.f32 %v1894, %v1942
        %v1959 = vsub.f32 %v1879, %v1943
        %v1960 = vsub.f32 %v1880, %v1944
        %v1961 = vsub.f32 %v1881, %v1945
        %v1962 = vsub.f32 %v1882, %v1946
        %v1963 = vsub.f32 %v1883, %v1947
        %v1964 = vsub.f32 %v1884, %v1948
        %v1965 = vsub.f32 %v1885, %v1949
        %v1966 = vsub.f32 %v1886, %v1950
        %v1967 = vsub.f32 %v1887, %v1951
        %v1968 = vsub.f32 %v1888, %v1952
        %v1969 = vsub.f32 %v1889, %v1953
        %v1970 = vsub.f32 %v1890, %v1954
        %v1971 = vsub.f32 %v1891, %v1955
        %v1972 = vsub.f32 %v1892, %v1956
        %v1973 = vsub.f32 %v1893, %v1957
        %v1974 = vsub.f32 %v1894, %v1958
        %v1975 = vmul.f32 %v1959, 1.442695
        %v1976 = vpow.pop %v1975
        %v1977 = vmul.f32 %v1960, 1.442695
        %v1978 = vpow.pop %v1977
        %v1979 = vmul.f32 %v1961, 1.442695
        %v1980 = vpow.pop %v1979
        %v1981 = vmul.f32 %v1962, 1.442695
        %v1982 = vpow.pop %v1981
        %v1983 = vmul.f32 %v1963, 1.442695
        %v1984 = vpow.pop %v1983
        %v1985 = vmul.f32 %v1964, 1.442695
        %v1986 = vpow.pop %v1985
        %v1987 = vmul.f32 %v1965, 1.442695
        %v1988 = vpow.pop %v1987
        %v1989 = vmul.f32 %v1966, 1.442695
        %v1990 = vpow.pop %v1989
        %v1991 = vmul.f32 %v1967, 1.442695
        %v1992 = vpow.pop %v1991
        %v1993 = vmul.f32 %v1968, 1.442695
        %v1994 = vpow.pop %v1993
        %v1995 = vmul.f32 %v1969, 1.442695
        %v1996 = vpow.pop %v1995
        %v1997 = vmul.f32 %v1970, 1.442695
        %v1998 = vpow.pop %v1997
        %v1999 = vmul.f32 %v1971, 1.442695
        %v2000 = vpow.pop %v1999
        %v2001 = vmul.f32 %v1972, 1.442695
        %v2002 = vpow.pop %v2001
        %v2003 = vmul.f32 %v1973, 1.442695
        %v2004 = vpow.pop %v2003
        %v2005 = vmul.f32 %v1974, 1.442695
        %v2006 = vpow.pop %v2005
        %2008 = vset.pattern.permute.xlu0 1
        %2009 = vperm.xlu0 %2008, %v1943
        %v2010 = vpop.permute.xlu0 %2009
        %2013 = vset.pattern.permute.xlu0 1
        %2014 = vperm.xlu0 %2013, %v1944
        %v2015 = vpop.permute.xlu0 %2014
        %2018 = vset.pattern.permute.xlu0 1
        %2019 = vperm.xlu0 %2018, %v1945
        %v2020 = vpop.permute.xlu0 %2019
        %2023 = vset.pattern.permute.xlu0 1
        %2024 = vperm.xlu0 %2023, %v1946
        %v2025 = vpop.permute.xlu0 %2024
        %2028 = vset.pattern.permute.xlu0 1
        %2029 = vperm.xlu0 %2028, %v1947
        %v2030 = vpop.permute.xlu0 %2029
        %2033 = vset.pattern.permute.xlu0 1
        %2034 = vperm.xlu0 %2033, %v1948
        %v2035 = vpop.permute.xlu0 %2034
        %2038 = vset.pattern.permute.xlu0 1
        %2039 = vperm.xlu0 %2038, %v1949
        %v2040 = vpop.permute.xlu0 %2039
        %2043 = vset.pattern.permute.xlu0 1
        %2044 = vperm.xlu0 %2043, %v1950
        %v2045 = vpop.permute.xlu0 %2044
        %2048 = vset.pattern.permute.xlu0 1
        %2049 = vperm.xlu0 %2048, %v1951
        %v2050 = vpop.permute.xlu0 %2049
        %2053 = vset.pattern.permute.xlu0 1
        %2054 = vperm.xlu0 %2053, %v1952
        %v2055 = vpop.permute.xlu0 %2054
        %2058 = vset.pattern.permute.xlu0 1
        %2059 = vperm.xlu0 %2058, %v1953
        %v2060 = vpop.permute.xlu0 %2059
        %2063 = vset.pattern.permute.xlu0 1
        %2064 = vperm.xlu0 %2063, %v1954
        %v2065 = vpop.permute.xlu0 %2064
        %2068 = vset.pattern.permute.xlu0 1
        %2069 = vperm.xlu0 %2068, %v1955
        %v2070 = vpop.permute.xlu0 %2069
        %2073 = vset.pattern.permute.xlu0 1
        %2074 = vperm.xlu0 %2073, %v1956
        %v2075 = vpop.permute.xlu0 %2074
        %2078 = vset.pattern.permute.xlu0 1
        %2079 = vperm.xlu0 %2078, %v1957
        %v2080 = vpop.permute.xlu0 %2079
        %2083 = vset.pattern.permute.xlu0 1
        %2084 = vperm.xlu0 %2083, %v1958
        %v2085 = vpop.permute.xlu0 %2084
        %v2087 = vsub.f32 %v1817, %v2010
        %v2088 = vsub.f32 %v1820, %v2015
        %v2089 = vsub.f32 %v1825, %v2020
        %v2090 = vsub.f32 %v1828, %v2025
        %v2091 = vsub.f32 %v1833, %v2030
        %v2092 = vsub.f32 %v1836, %v2035
        %v2093 = vsub.f32 %v1841, %v2040
        %v2094 = vsub.f32 %v1844, %v2045
        %v2095 = vsub.f32 %v1849, %v2050
        %v2096 = vsub.f32 %v1852, %v2055
        %v2097 = vsub.f32 %v1857, %v2060
        %v2098 = vsub.f32 %v1860, %v2065
        %v2099 = vsub.f32 %v1865, %v2070
        %v2100 = vsub.f32 %v1868, %v2075
        %v2101 = vsub.f32 %v1873, %v2080
        %v2102 = vsub.f32 %v1876, %v2085
        %v2103 = vmul.f32 %v2087, 1.442695
        %v2104 = vpow.pop %v2103
        %v2105 = vmul.f32 %v2088, 1.442695
        %v2106 = vpow.pop %v2105
        %v2107 = vmul.f32 %v2089, 1.442695
        %v2108 = vpow.pop %v2107
        %v2109 = vmul.f32 %v2090, 1.442695
        %v2110 = vpow.pop %v2109
        %v2111 = vmul.f32 %v2091, 1.442695
        %v2112 = vpow.pop %v2111
        %v2113 = vmul.f32 %v2092, 1.442695
        %v2114 = vpow.pop %v2113
        %v2115 = vmul.f32 %v2093, 1.442695
        %v2116 = vpow.pop %v2115
        %v2117 = vmul.f32 %v2094, 1.442695
        %v2118 = vpow.pop %v2117
        %v2119 = vmul.f32 %v2095, 1.442695
        %v2120 = vpow.pop %v2119
        %v2121 = vmul.f32 %v2096, 1.442695
        %v2122 = vpow.pop %v2121
        %v2123 = vmul.f32 %v2097, 1.442695
        %v2124 = vpow.pop %v2123
        %v2125 = vmul.f32 %v2098, 1.442695
        %v2126 = vpow.pop %v2125
        %v2127 = vmul.f32 %v2099, 1.442695
        %v2128 = vpow.pop %v2127
        %v2129 = vmul.f32 %v2100, 1.442695
        %v2130 = vpow.pop %v2129
        %v2131 = vmul.f32 %v2101, 1.442695
        %v2132 = vpow.pop %v2131
        %v2133 = vmul.f32 %v2102, 1.442695
        %v2134 = vpow.pop %v2133
        %v2135 = vmul.f32 %v1976, %v1895
        %v2136 = vmul.f32 %v1978, %v1896
        %v2137 = vmul.f32 %v1980, %v1897
        %v2138 = vmul.f32 %v1982, %v1898
        %v2139 = vmul.f32 %v1984, %v1899
        %v2140 = vmul.f32 %v1986, %v1900
        %v2141 = vmul.f32 %v1988, %v1901
        %v2142 = vmul.f32 %v1990, %v1902
        %v2143 = vmul.f32 %v1992, %v1903
        %v2144 = vmul.f32 %v1994, %v1904
        %v2145 = vmul.f32 %v1996, %v1905
        %v2146 = vmul.f32 %v1998, %v1906
        %v2147 = vmul.f32 %v2000, %v1907
        %v2148 = vmul.f32 %v2002, %v1908
        %v2149 = vmul.f32 %v2004, %v1909
        %v2150 = vmul.f32 %v2006, %v1910
        %2151 = vadd.xlane.f32.xlu0 %v2104
        %v2152 = vpop.xlane.xlu0 %2151
        %2153 = vadd.xlane.f32.xlu0 %v2106
        %v2154 = vpop.xlane.xlu0 %2153
        %2155 = vadd.xlane.f32.xlu0 %v2108
        %v2156 = vpop.xlane.xlu0 %2155
        %2157 = vadd.xlane.f32.xlu0 %v2110
        %v2158 = vpop.xlane.xlu0 %2157
        %2159 = vadd.xlane.f32.xlu0 %v2112
        %v2160 = vpop.xlane.xlu0 %2159
        %2161 = vadd.xlane.f32.xlu0 %v2114
        %v2162 = vpop.xlane.xlu0 %2161
        %2163 = vadd.xlane.f32.xlu0 %v2116
        %v2164 = vpop.xlane.xlu0 %2163
        %2165 = vadd.xlane.f32.xlu0 %v2118
        %v2166 = vpop.xlane.xlu0 %2165
        %2167 = vadd.xlane.f32.xlu0 %v2120
        %v2168 = vpop.xlane.xlu0 %2167
        %2169 = vadd.xlane.f32.xlu0 %v2122
        %v2170 = vpop.xlane.xlu0 %2169
        %2171 = vadd.xlane.f32.xlu0 %v2124
        %v2172 = vpop.xlane.xlu0 %2171
        %2173 = vadd.xlane.f32.xlu0 %v2126
        %v2174 = vpop.xlane.xlu0 %2173
        %2175 = vadd.xlane.f32.xlu0 %v2128
        %v2176 = vpop.xlane.xlu0 %2175
        %2177 = vadd.xlane.f32.xlu0 %v2130
        %v2178 = vpop.xlane.xlu0 %2177
        %2179 = vadd.xlane.f32.xlu0 %v2132
        %v2180 = vpop.xlane.xlu0 %2179
        %2181 = vadd.xlane.f32.xlu0 %v2134
        %v2182 = vpop.xlane.xlu0 %2181
        %v2183 = vadd.f32 %v2135, %v2152
        %v2184 = vadd.f32 %v2136, %v2154
        %v2185 = vadd.f32 %v2137, %v2156
        %v2186 = vadd.f32 %v2138, %v2158
        %v2187 = vadd.f32 %v2139, %v2160
        %v2188 = vadd.f32 %v2140, %v2162
        %v2189 = vadd.f32 %v2141, %v2164
        %v2190 = vadd.f32 %v2142, %v2166
        %v2191 = vadd.f32 %v2143, %v2168
        %v2192 = vadd.f32 %v2144, %v2170
        %v2193 = vadd.f32 %v2145, %v2172
        %v2194 = vadd.f32 %v2146, %v2174
        %v2195 = vadd.f32 %v2147, %v2176
        %v2196 = vadd.f32 %v2148, %v2178
        %v2197 = vadd.f32 %v2149, %v2180
        %v2198 = vadd.f32 %v2150, %v2182
        %vm2199 = vcmask 15368
        %2200 = vst.msk [vmem:[#allocation4] sm:$0xff] %vm2199, %v2183
        %2201 = vst.msk [vmem:[#allocation4 + $0x8] sm:$0xff] %vm2199, %v2184
        %2202 = vst.msk [vmem:[#allocation4 + $0x10] sm:$0xff] %vm2199, %v2185
        %2203 = vst.msk [vmem:[#allocation4 + $0x18] sm:$0xff] %vm2199, %v2186
        %2204 = vst.msk [vmem:[#allocation4 + $0x20] sm:$0xff] %vm2199, %v2187
        %2205 = vst.msk [vmem:[#allocation4 + $0x28] sm:$0xff] %vm2199, %v2188
        %2206 = vst.msk [vmem:[#allocation4 + $0x30] sm:$0xff] %vm2199, %v2189
        %2207 = vst.msk [vmem:[#allocation4 + $0x38] sm:$0xff] %vm2199, %v2190
        %2208 = vst.msk [vmem:[#allocation4 + $0x40] sm:$0xff] %vm2199, %v2191
        %2209 = vst.msk [vmem:[#allocation4 + $0x48] sm:$0xff] %vm2199, %v2192
        %2210 = vst.msk [vmem:[#allocation4 + $0x50] sm:$0xff] %vm2199, %v2193
        %2211 = vst.msk [vmem:[#allocation4 + $0x58] sm:$0xff] %vm2199, %v2194
        %2212 = vst.msk [vmem:[#allocation4 + $0x60] sm:$0xff] %vm2199, %v2195
        %2213 = vst.msk [vmem:[#allocation4 + $0x68] sm:$0xff] %vm2199, %v2196
        %2214 = vst.msk [vmem:[#allocation4 + $0x70] sm:$0xff] %vm2199, %v2197
        %2215 = vst.msk [vmem:[#allocation4 + $0x78] sm:$0xff] %vm2199, %v2198
        %2216 = vst.msk [vmem:[#allocation3] sm:$0xff] %vm2199, %v1943
        %2217 = vst.msk [vmem:[#allocation3 + $0x8] sm:$0xff] %vm2199, %v1944
        %2218 = vst.msk [vmem:[#allocation3 + $0x10] sm:$0xff] %vm2199, %v1945
        %2219 = vst.msk [vmem:[#allocation3 + $0x18] sm:$0xff] %vm2199, %v1946
        %2220 = vst.msk [vmem:[#allocation3 + $0x20] sm:$0xff] %vm2199, %v1947
        %2221 = vst.msk [vmem:[#allocation3 + $0x28] sm:$0xff] %vm2199, %v1948
        %2222 = vst.msk [vmem:[#allocation3 + $0x30] sm:$0xff] %vm2199, %v1949
        %2223 = vst.msk [vmem:[#allocation3 + $0x38] sm:$0xff] %vm2199, %v1950
        %2224 = vst.msk [vmem:[#allocation3 + $0x40] sm:$0xff] %vm2199, %v1951
        %2225 = vst.msk [vmem:[#allocation3 + $0x48] sm:$0xff] %vm2199, %v1952
        %2226 = vst.msk [vmem:[#allocation3 + $0x50] sm:$0xff] %vm2199, %v1953
        %2227 = vst.msk [vmem:[#allocation3 + $0x58] sm:$0xff] %vm2199, %v1954
        %2228 = vst.msk [vmem:[#allocation3 + $0x60] sm:$0xff] %vm2199, %v1955
        %2229 = vst.msk [vmem:[#allocation3 + $0x68] sm:$0xff] %vm2199, %v1956
        %2230 = vst.msk [vmem:[#allocation3 + $0x70] sm:$0xff] %vm2199, %v1957
        %2231 = vst.msk [vmem:[#allocation3 + $0x78] sm:$0xff] %vm2199, %v1958
        %2232 = vset.pattern.permute.xlu0 1
        %2233 = vperm.xlu0 %2232, %v586
        %v2234 = vpop.permute.xlu0 %2233
        %2236 = vset.pattern.permute.xlu0 1
        %2237 = vperm.xlu0 %2236, %v587
        %v2238 = vpop.permute.xlu0 %2237
        %2240 = vset.pattern.permute.xlu0 1
        %2241 = vperm.xlu0 %2240, %v588
        %v2242 = vpop.permute.xlu0 %2241
        %2244 = vset.pattern.permute.xlu0 1
        %2245 = vperm.xlu0 %2244, %v589
        %v2246 = vpop.permute.xlu0 %2245
        %2248 = vset.pattern.permute.xlu0 1
        %2249 = vperm.xlu0 %2248, %v590
        %v2250 = vpop.permute.xlu0 %2249
        %2252 = vset.pattern.permute.xlu0 1
        %2253 = vperm.xlu0 %2252, %v591
        %v2254 = vpop.permute.xlu0 %2253
        %2256 = vset.pattern.permute.xlu0 1
        %2257 = vperm.xlu0 %2256, %v592
        %v2258 = vpop.permute.xlu0 %2257
        %2260 = vset.pattern.permute.xlu0 1
        %2261 = vperm.xlu0 %2260, %v593
        %v2262 = vpop.permute.xlu0 %2261
        %2264 = vset.pattern.permute.xlu0 1
        %2265 = vperm.xlu0 %2264, %v594
        %v2266 = vpop.permute.xlu0 %2265
        %2268 = vset.pattern.permute.xlu0 1
        %2269 = vperm.xlu0 %2268, %v595
        %v2270 = vpop.permute.xlu0 %2269
        %2272 = vset.pattern.permute.xlu0 1
        %2273 = vperm.xlu0 %2272, %v596
        %v2274 = vpop.permute.xlu0 %2273
        %2276 = vset.pattern.permute.xlu0 1
        %2277 = vperm.xlu0 %2276, %v597
        %v2278 = vpop.permute.xlu0 %2277
        %2280 = vset.pattern.permute.xlu0 1
        %2281 = vperm.xlu0 %2280, %v598
        %v2282 = vpop.permute.xlu0 %2281
        %2284 = vset.pattern.permute.xlu0 1
        %2285 = vperm.xlu0 %2284, %v599
        %v2286 = vpop.permute.xlu0 %2285
        %2288 = vset.pattern.permute.xlu0 1
        %2289 = vperm.xlu0 %2288, %v600
        %v2290 = vpop.permute.xlu0 %2289
        %2292 = vset.pattern.permute.xlu0 1
        %2293 = vperm.xlu0 %2292, %v601
        %v2294 = vpop.permute.xlu0 %2293
        %v2296 = vmul.f32 %v554, %v2234
        %v2297 = vmul.f32 %v555, %v2238
        %v2298 = vmul.f32 %v556, %v2242
        %v2299 = vmul.f32 %v557, %v2246
        %v2300 = vmul.f32 %v558, %v2250
        %v2301 = vmul.f32 %v559, %v2254
        %v2302 = vmul.f32 %v560, %v2258
        %v2303 = vmul.f32 %v561, %v2262
        %v2304 = vmul.f32 %v562, %v2266
        %v2305 = vmul.f32 %v563, %v2270
        %v2306 = vmul.f32 %v564, %v2274
        %v2307 = vmul.f32 %v565, %v2278
        %v2308 = vmul.f32 %v566, %v2282
        %v2309 = vmul.f32 %v567, %v2286
        %v2310 = vmul.f32 %v568, %v2290
        %v2311 = vmul.f32 %v569, %v2294
        %v2312 = vpack.c.bf16 %v2297, %v2296
        %v2313 = vpack.c.bf16 %v2299, %v2298
        %v2314 = vpack.c.bf16 %v2301, %v2300
        %v2315 = vpack.c.bf16 %v2303, %v2302
        %v2316 = vpack.c.bf16 %v2305, %v2304
        %v2317 = vpack.c.bf16 %v2307, %v2306
        %v2318 = vpack.c.bf16 %v2309, %v2308
        %v2319 = vpack.c.bf16 %v2311, %v2310
        %v2320 = vpack.c.bf16 %v2106, %v2104
        %v2321 = vpack.c.bf16 %v2110, %v2108
        %v2322 = vpack.c.bf16 %v2114, %v2112
        %v2323 = vpack.c.bf16 %v2118, %v2116
        %v2324 = vpack.c.bf16 %v2122, %v2120
        %v2325 = vpack.c.bf16 %v2126, %v2124
        %v2326 = vpack.c.bf16 %v2130, %v2128
        %v2327 = vpack.c.bf16 %v2134, %v2132
        %2336 = vrot.lane.b32.xlu0 %v2312, 96
        %v2337 = vpop.permute.xlu0 %2336
        %2338 = vrot.lane.b32.xlu0 %v2313, 96
        %v2339 = vpop.permute.xlu0 %2338
        %2340 = vrot.lane.b32.xlu0 %v2314, 96
        %v2341 = vpop.permute.xlu0 %2340
        %2342 = vrot.lane.b32.xlu0 %v2315, 96
        %v2343 = vpop.permute.xlu0 %2342
        %2344 = vrot.lane.b32.xlu0 %v2316, 96
        %v2345 = vpop.permute.xlu0 %2344
        %2346 = vrot.lane.b32.xlu0 %v2317, 96
        %v2347 = vpop.permute.xlu0 %2346
        %2348 = vrot.lane.b32.xlu0 %v2318, 96
        %v2349 = vpop.permute.xlu0 %2348
        %2350 = vrot.lane.b32.xlu0 %v2319, 96
        %v2351 = vpop.permute.xlu0 %2350
        %2360 = vmatprep.subr.bf16.mxu0 0
        %2361 = vmatpush1.bf16.msra.mxu0 %v2351
        %2362 = vmatprep.subr.bf16.mxu0 0
        %2363 = vmatpush1.bf16.msra.mxu0 %v2349
        %2364 = vmatprep.subr.bf16.mxu0 0
        %2365 = vmatpush1.bf16.msra.mxu0 %v2347
        %2366 = vmatprep.subr.bf16.mxu0 0
        %2367 = vmatpush1.bf16.msra.mxu0 %v2345
        %2368 = vmatprep.subr.bf16.mxu0 0
        %2369 = vmatpush1.bf16.msra.mxu0 %v2343
        %2370 = vmatprep.subr.bf16.mxu0 0
        %2371 = vmatpush1.bf16.msra.mxu0 %v2341
        %2372 = vmatprep.subr.bf16.mxu0 0
        %2373 = vmatpush1.bf16.msra.mxu0 %v2339
        %2374 = vmatprep.subr.bf16.mxu0 0
        %2375 = vmatpush1.bf16.msra.mxu0 %v2337
        %2376 = vmatprep.subr.bf16.mxu0 0
        %2377 = vmatpush2.bf16.msra.mxu0 0
        %2378 = vmatprep.subr.bf16.mxu0 0
        %2379 = vmatpush2.bf16.msra.mxu0 0
        %2380 = vmatprep.subr.bf16.mxu0 0
        %2381 = vmatpush2.bf16.msra.mxu0 0
        %2382 = vmatprep.subr.bf16.mxu0 0
        %2383 = vmatpush2.bf16.msra.mxu0 0
        %2384 = vmatprep.subr.bf16.mxu0 0
        %2385 = vmatpush2.bf16.msra.mxu0 0
        %2386 = vmatprep.subr.bf16.mxu0 0
        %2387 = vmatpush2.bf16.msra.mxu0 0
        %2388 = vmatprep.subr.bf16.mxu0 0
        %2389 = vmatpush2.bf16.msra.mxu0 0
        %2390 = vmatprep.subr.bf16.mxu0 0
        %2391 = vmatpush2.bf16.msra.mxu0 0
        %2392 = vmatprep.mubr.bf16.mxu0 0
        %2393 = vmatmul.mubr.bf16.gmra.mxu0 %v2320
        %v2394 = vpop.f32.mrf.mxu0
        %v2395 = vadd.f32 0.0, %v2394
        %v2396 = vpop.f32.mrf.mxu0
        %v2397 = vpop.f32.mrf.mxu0
        %v2398 = vadd.f32 0.0, %v2397
        %v2399 = vpop.f32.mrf.mxu0
        %2400 = vmatprep.mubr.bf16.mxu0 0
        %2401 = vmatmul.mubr.bf16.gmra.mxu0 %v2321
        %v2402 = vpop.f32.mrf.mxu0
        %v2403 = vadd.f32 0.0, %v2402
        %v2404 = vpop.f32.mrf.mxu0
        %v2405 = vpop.f32.mrf.mxu0
        %v2406 = vadd.f32 0.0, %v2405
        %v2407 = vpop.f32.mrf.mxu0
        %2408 = vmatprep.mubr.bf16.mxu0 0
        %2409 = vmatmul.mubr.bf16.gmra.mxu0 %v2322
        %v2410 = vpop.f32.mrf.mxu0
        %v2411 = vadd.f32 0.0, %v2410
        %v2412 = vpop.f32.mrf.mxu0
        %v2413 = vpop.f32.mrf.mxu0
        %v2414 = vadd.f32 0.0, %v2413
        %v2415 = vpop.f32.mrf.mxu0
        %2416 = vmatprep.mubr.bf16.mxu0 0
        %2417 = vmatmul.mubr.bf16.gmra.mxu0 %v2323
        %v2418 = vpop.f32.mrf.mxu0
        %v2419 = vadd.f32 0.0, %v2418
        %v2420 = vpop.f32.mrf.mxu0
        %v2421 = vpop.f32.mrf.mxu0
        %v2422 = vadd.f32 0.0, %v2421
        %v2423 = vpop.f32.mrf.mxu0
        %2424 = vmatprep.mubr.bf16.mxu0 0
        %2425 = vmatmul.mubr.bf16.gmra.mxu0 %v2324
        %v2426 = vpop.f32.mrf.mxu0
        %v2427 = vadd.f32 0.0, %v2426
        %v2428 = vpop.f32.mrf.mxu0
        %v2429 = vpop.f32.mrf.mxu0
        %v2430 = vadd.f32 0.0, %v2429
        %v2431 = vpop.f32.mrf.mxu0
        %2432 = vmatprep.mubr.bf16.mxu0 0
        %2433 = vmatmul.mubr.bf16.gmra.mxu0 %v2325
        %v2434 = vpop.f32.mrf.mxu0
        %v2435 = vadd.f32 0.0, %v2434
        %v2436 = vpop.f32.mrf.mxu0
        %v2437 = vpop.f32.mrf.mxu0
        %v2438 = vadd.f32 0.0, %v2437
        %v2439 = vpop.f32.mrf.mxu0
        %2440 = vmatprep.mubr.bf16.mxu0 0
        %2441 = vmatmul.mubr.bf16.gmra.mxu0 %v2326
        %v2442 = vpop.f32.mrf.mxu0
        %v2443 = vadd.f32 0.0, %v2442
        %v2444 = vpop.f32.mrf.mxu0
        %v2445 = vpop.f32.mrf.mxu0
        %v2446 = vadd.f32 0.0, %v2445
        %v2447 = vpop.f32.mrf.mxu0
        %2448 = vmatprep.mubr.bf16.mxu0 0
        %2449 = vmatmul.mubr.bf16.gmra.mxu0 %v2327
        %v2450 = vpop.f32.mrf.mxu0
        %v2451 = vadd.f32 0.0, %v2450
        %v2452 = vpop.f32.mrf.mxu0
        %v2453 = vpop.f32.mrf.mxu0
        %v2454 = vadd.f32 0.0, %v2453
        %v2455 = vpop.f32.mrf.mxu0
        %2456 = vdwg.mxu0
        %v2457 = vld [vmem:[#allocation2] sm:$0xff]
        %v2458 = vld [vmem:[#allocation2 + $0x8] sm:$0xff]
        %v2459 = vld [vmem:[#allocation2 + $0x10] sm:$0xff]
        %v2460 = vld [vmem:[#allocation2 + $0x18] sm:$0xff]
        %v2461 = vld [vmem:[#allocation2 + $0x20] sm:$0xff]
        %v2462 = vld [vmem:[#allocation2 + $0x28] sm:$0xff]
        %v2463 = vld [vmem:[#allocation2 + $0x30] sm:$0xff]
        %v2464 = vld [vmem:[#allocation2 + $0x38] sm:$0xff]
        %v2465 = vld [vmem:[#allocation2 + $0x40] sm:$0xff]
        %v2466 = vld [vmem:[#allocation2 + $0x48] sm:$0xff]
        %v2467 = vld [vmem:[#allocation2 + $0x50] sm:$0xff]
        %v2468 = vld [vmem:[#allocation2 + $0x58] sm:$0xff]
        %v2469 = vld [vmem:[#allocation2 + $0x60] sm:$0xff]
        %v2470 = vld [vmem:[#allocation2 + $0x68] sm:$0xff]
        %v2471 = vld [vmem:[#allocation2 + $0x70] sm:$0xff]
        %v2472 = vld [vmem:[#allocation2 + $0x78] sm:$0xff]
        %2474 = vset.pattern.permute.xlu0 1
        %2475 = vperm.xlu0 %2474, %v1976
        %v2476 = vpop.permute.xlu0 %2475
        %2479 = vset.pattern.permute.xlu0 1
        %2480 = vperm.xlu0 %2479, %v1978
        %v2481 = vpop.permute.xlu0 %2480
        %2484 = vset.pattern.permute.xlu0 1
        %2485 = vperm.xlu0 %2484, %v1980
        %v2486 = vpop.permute.xlu0 %2485
        %2489 = vset.pattern.permute.xlu0 1
        %2490 = vperm.xlu0 %2489, %v1982
        %v2491 = vpop.permute.xlu0 %2490
        %2494 = vset.pattern.permute.xlu0 1
        %2495 = vperm.xlu0 %2494, %v1984
        %v2496 = vpop.permute.xlu0 %2495
        %2499 = vset.pattern.permute.xlu0 1
        %2500 = vperm.xlu0 %2499, %v1986
        %v2501 = vpop.permute.xlu0 %2500
        %2504 = vset.pattern.permute.xlu0 1
        %2505 = vperm.xlu0 %2504, %v1988
        %v2506 = vpop.permute.xlu0 %2505
        %2509 = vset.pattern.permute.xlu0 1
        %2510 = vperm.xlu0 %2509, %v1990
        %v2511 = vpop.permute.xlu0 %2510
        %2514 = vset.pattern.permute.xlu0 1
        %2515 = vperm.xlu0 %2514, %v1992
        %v2516 = vpop.permute.xlu0 %2515
        %2519 = vset.pattern.permute.xlu0 1
        %2520 = vperm.xlu0 %2519, %v1994
        %v2521 = vpop.permute.xlu0 %2520
        %2524 = vset.pattern.permute.xlu0 1
        %2525 = vperm.xlu0 %2524, %v1996
        %v2526 = vpop.permute.xlu0 %2525
        %2529 = vset.pattern.permute.xlu0 1
        %2530 = vperm.xlu0 %2529, %v1998
        %v2531 = vpop.permute.xlu0 %2530
        %2534 = vset.pattern.permute.xlu0 1
        %2535 = vperm.xlu0 %2534, %v2000
        %v2536 = vpop.permute.xlu0 %2535
        %2539 = vset.pattern.permute.xlu0 1
        %2540 = vperm.xlu0 %2539, %v2002
        %v2541 = vpop.permute.xlu0 %2540
        %2544 = vset.pattern.permute.xlu0 1
        %2545 = vperm.xlu0 %2544, %v2004
        %v2546 = vpop.permute.xlu0 %2545
        %2549 = vset.pattern.permute.xlu0 1
        %2550 = vperm.xlu0 %2549, %v2006
        %v2551 = vpop.permute.xlu0 %2550
        %v2553 = vmul.f32 %v2476, %v2457
        %v2554 = vmul.f32 %v2481, %v2458
        %v2555 = vmul.f32 %v2486, %v2459
        %v2556 = vmul.f32 %v2491, %v2460
        %v2557 = vmul.f32 %v2496, %v2461
        %v2558 = vmul.f32 %v2501, %v2462
        %v2559 = vmul.f32 %v2506, %v2463
        %v2560 = vmul.f32 %v2511, %v2464
        %v2561 = vmul.f32 %v2516, %v2465
        %v2562 = vmul.f32 %v2521, %v2466
        %v2563 = vmul.f32 %v2526, %v2467
        %v2564 = vmul.f32 %v2531, %v2468
        %v2565 = vmul.f32 %v2536, %v2469
        %v2566 = vmul.f32 %v2541, %v2470
        %v2567 = vmul.f32 %v2546, %v2471
        %v2568 = vmul.f32 %v2551, %v2472
        %2585 = vrot.lane.b32.xlu0 %v2395, 32
        %v2586 = vpop.permute.xlu0 %2585
        %2587 = vrot.lane.b32.xlu0 %v2398, 32
        %v2588 = vpop.permute.xlu0 %2587
        %2589 = vrot.lane.b32.xlu0 %v2403, 32
        %v2590 = vpop.permute.xlu0 %2589
        %2591 = vrot.lane.b32.xlu0 %v2406, 32
        %v2592 = vpop.permute.xlu0 %2591
        %2593 = vrot.lane.b32.xlu0 %v2411, 32
        %v2594 = vpop.permute.xlu0 %2593
        %2595 = vrot.lane.b32.xlu0 %v2414, 32
        %v2596 = vpop.permute.xlu0 %2595
        %2597 = vrot.lane.b32.xlu0 %v2419, 32
        %v2598 = vpop.permute.xlu0 %2597
        %2599 = vrot.lane.b32.xlu0 %v2422, 32
        %v2600 = vpop.permute.xlu0 %2599
        %2601 = vrot.lane.b32.xlu0 %v2427, 32
        %v2602 = vpop.permute.xlu0 %2601
        %2603 = vrot.lane.b32.xlu0 %v2430, 32
        %v2604 = vpop.permute.xlu0 %2603
        %2605 = vrot.lane.b32.xlu0 %v2435, 32
        %v2606 = vpop.permute.xlu0 %2605
        %2607 = vrot.lane.b32.xlu0 %v2438, 32
        %v2608 = vpop.permute.xlu0 %2607
        %2609 = vrot.lane.b32.xlu0 %v2443, 32
        %v2610 = vpop.permute.xlu0 %2609
        %2611 = vrot.lane.b32.xlu0 %v2446, 32
        %v2612 = vpop.permute.xlu0 %2611
        %2613 = vrot.lane.b32.xlu0 %v2451, 32
        %v2614 = vpop.permute.xlu0 %2613
        %2615 = vrot.lane.b32.xlu0 %v2454, 32
        %v2616 = vpop.permute.xlu0 %2615
        %v2633 = vadd.f32 %v2553, %v2586
        %v2634 = vadd.f32 %v2554, %v2588
        %v2635 = vadd.f32 %v2555, %v2590
        %v2636 = vadd.f32 %v2556, %v2592
        %v2637 = vadd.f32 %v2557, %v2594
        %v2638 = vadd.f32 %v2558, %v2596
        %v2639 = vadd.f32 %v2559, %v2598
        %v2640 = vadd.f32 %v2560, %v2600
        %v2641 = vadd.f32 %v2561, %v2602
        %v2642 = vadd.f32 %v2562, %v2604
        %v2643 = vadd.f32 %v2563, %v2606
        %v2644 = vadd.f32 %v2564, %v2608
        %v2645 = vadd.f32 %v2565, %v2610
        %v2646 = vadd.f32 %v2566, %v2612
        %v2647 = vadd.f32 %v2567, %v2614
        %v2648 = vadd.f32 %v2568, %v2616
        %vm2649 = vcmask 523520
        %2650 = vst.msk [vmem:[#allocation2] sm:$0xff] %vm2649, %v2633
        %2651 = vst.msk [vmem:[#allocation2 + $0x8] sm:$0xff] %vm2649, %v2634
        %2652 = vst.msk [vmem:[#allocation2 + $0x10] sm:$0xff] %vm2649, %v2635
        %2653 = vst.msk [vmem:[#allocation2 + $0x18] sm:$0xff] %vm2649, %v2636
        %2654 = vst.msk [vmem:[#allocation2 + $0x20] sm:$0xff] %vm2649, %v2637
        %2655 = vst.msk [vmem:[#allocation2 + $0x28] sm:$0xff] %vm2649, %v2638
        %2656 = vst.msk [vmem:[#allocation2 + $0x30] sm:$0xff] %vm2649, %v2639
        %2657 = vst.msk [vmem:[#allocation2 + $0x38] sm:$0xff] %vm2649, %v2640
        %2658 = vst.msk [vmem:[#allocation2 + $0x40] sm:$0xff] %vm2649, %v2641
        %2659 = vst.msk [vmem:[#allocation2 + $0x48] sm:$0xff] %vm2649, %v2642
        %2660 = vst.msk [vmem:[#allocation2 + $0x50] sm:$0xff] %vm2649, %v2643
        %2661 = vst.msk [vmem:[#allocation2 + $0x58] sm:$0xff] %vm2649, %v2644
        %2662 = vst.msk [vmem:[#allocation2 + $0x60] sm:$0xff] %vm2649, %v2645
        %2663 = vst.msk [vmem:[#allocation2 + $0x68] sm:$0xff] %vm2649, %v2646
        %2664 = vst.msk [vmem:[#allocation2 + $0x70] sm:$0xff] %vm2649, %v2647
        %2665 = vst.msk [vmem:[#allocation2 + $0x78] sm:$0xff] %vm2649, %v2648
        %2666 = vset.pattern.permute.xlu0 2
        %2667 = vperm.xlu0 %2666, %v618
        %v2668 = vpop.permute.xlu0 %2667
        %2670 = vset.pattern.permute.xlu0 2
        %2671 = vperm.xlu0 %2670, %v619
        %v2672 = vpop.permute.xlu0 %2671
        %2674 = vset.pattern.permute.xlu0 2
        %2675 = vperm.xlu0 %2674, %v620
        %v2676 = vpop.permute.xlu0 %2675
        %2678 = vset.pattern.permute.xlu0 2
        %2679 = vperm.xlu0 %2678, %v621
        %v2680 = vpop.permute.xlu0 %2679
        %2682 = vset.pattern.permute.xlu0 2
        %2683 = vperm.xlu0 %2682, %v622
        %v2684 = vpop.permute.xlu0 %2683
        %2686 = vset.pattern.permute.xlu0 2
        %2687 = vperm.xlu0 %2686, %v623
        %v2688 = vpop.permute.xlu0 %2687
        %2690 = vset.pattern.permute.xlu0 2
        %2691 = vperm.xlu0 %2690, %v624
        %v2692 = vpop.permute.xlu0 %2691
        %2694 = vset.pattern.permute.xlu0 2
        %2695 = vperm.xlu0 %2694, %v625
        %v2696 = vpop.permute.xlu0 %2695
        %2698 = vset.pattern.permute.xlu0 2
        %2699 = vperm.xlu0 %2698, %v626
        %v2700 = vpop.permute.xlu0 %2699
        %2702 = vset.pattern.permute.xlu0 2
        %2703 = vperm.xlu0 %2702, %v627
        %v2704 = vpop.permute.xlu0 %2703
        %2706 = vset.pattern.permute.xlu0 2
        %2707 = vperm.xlu0 %2706, %v628
        %v2708 = vpop.permute.xlu0 %2707
        %2710 = vset.pattern.permute.xlu0 2
        %2711 = vperm.xlu0 %2710, %v629
        %v2712 = vpop.permute.xlu0 %2711
        %2714 = vset.pattern.permute.xlu0 2
        %2715 = vperm.xlu0 %2714, %v630
        %v2716 = vpop.permute.xlu0 %2715
        %2718 = vset.pattern.permute.xlu0 2
        %2719 = vperm.xlu0 %2718, %v631
        %v2720 = vpop.permute.xlu0 %2719
        %2722 = vset.pattern.permute.xlu0 2
        %2723 = vperm.xlu0 %2722, %v632
        %v2724 = vpop.permute.xlu0 %2723
        %2726 = vset.pattern.permute.xlu0 2
        %2727 = vperm.xlu0 %2726, %v633
        %v2728 = vpop.permute.xlu0 %2727
        %v2730 = vmul.f32 %v522, %v2668
        %v2731 = vmul.f32 %v523, %v2672
        %v2732 = vmul.f32 %v524, %v2676
        %v2733 = vmul.f32 %v525, %v2680
        %v2734 = vmul.f32 %v526, %v2684
        %v2735 = vmul.f32 %v527, %v2688
        %v2736 = vmul.f32 %v528, %v2692
        %v2737 = vmul.f32 %v529, %v2696
        %v2738 = vmul.f32 %v530, %v2700
        %v2739 = vmul.f32 %v531, %v2704
        %v2740 = vmul.f32 %v532, %v2708
        %v2741 = vmul.f32 %v533, %v2712
        %v2742 = vmul.f32 %v534, %v2716
        %v2743 = vmul.f32 %v535, %v2720
        %v2744 = vmul.f32 %v536, %v2724
        %v2745 = vmul.f32 %v537, %v2728
        %v2746 = vpack.c.bf16 %v2731, %v2730
        %v2747 = vpack.c.bf16 %v2733, %v2732
        %v2748 = vpack.c.bf16 %v2735, %v2734
        %v2749 = vpack.c.bf16 %v2737, %v2736
        %v2750 = vpack.c.bf16 %v2739, %v2738
        %v2751 = vpack.c.bf16 %v2741, %v2740
        %v2752 = vpack.c.bf16 %v2743, %v2742
        %v2753 = vpack.c.bf16 %v2745, %v2744
        %2762 = vrot.lane.b32.xlu0 %v2746, 64
        %v2763 = vpop.permute.xlu0 %2762
        %2764 = vrot.lane.b32.xlu0 %v2747, 64
        %v2765 = vpop.permute.xlu0 %2764
        %2766 = vrot.lane.b32.xlu0 %v2748, 64
        %v2767 = vpop.permute.xlu0 %2766
        %2768 = vrot.lane.b32.xlu0 %v2749, 64
        %v2769 = vpop.permute.xlu0 %2768
        %2770 = vrot.lane.b32.xlu0 %v2750, 64
        %v2771 = vpop.permute.xlu0 %2770
        %2772 = vrot.lane.b32.xlu0 %v2751, 64
        %v2773 = vpop.permute.xlu0 %2772
        %2774 = vrot.lane.b32.xlu0 %v2752, 64
        %v2775 = vpop.permute.xlu0 %2774
        %2776 = vrot.lane.b32.xlu0 %v2753, 64
        %v2777 = vpop.permute.xlu0 %2776
        %2778 = vrot.lane.b32.xlu0 %v738, 64
        %v2779 = vpop.permute.xlu0 %2778
        %2780 = vrot.lane.b32.xlu0 %v739, 64
        %v2781 = vpop.permute.xlu0 %2780
        %2782 = vrot.lane.b32.xlu0 %v740, 64
        %v2783 = vpop.permute.xlu0 %2782
        %2784 = vrot.lane.b32.xlu0 %v741, 64
        %v2785 = vpop.permute.xlu0 %2784
        %2786 = vrot.lane.b32.xlu0 %v742, 64
        %v2787 = vpop.permute.xlu0 %2786
        %2788 = vrot.lane.b32.xlu0 %v743, 64
        %v2789 = vpop.permute.xlu0 %2788
        %2790 = vrot.lane.b32.xlu0 %v744, 64
        %v2791 = vpop.permute.xlu0 %2790
        %2792 = vrot.lane.b32.xlu0 %v745, 64
        %v2793 = vpop.permute.xlu0 %2792
        %v2795 = vsel %vm746, %v2763, 0
        %v2798 = vsel %vm746, %v2765, 0
        %v2801 = vsel %vm746, %v2767, 0
        %v2804 = vsel %vm746, %v2769, 0
        %v2807 = vsel %vm746, %v2771, 0
        %v2810 = vsel %vm746, %v2773, 0
        %v2813 = vsel %vm746, %v2775, 0
        %v2816 = vsel %vm746, %v2777, 0
        %v2819 = vsel %vm746, %v2779, 0
        %v2822 = vsel %vm746, %v2781, 0
        %v2825 = vsel %vm746, %v2783, 0
        %v2828 = vsel %vm746, %v2785, 0
        %v2831 = vsel %vm746, %v2787, 0
        %v2834 = vsel %vm746, %v2789, 0
        %v2837 = vsel %vm746, %v2791, 0
        %v2840 = vsel %vm746, %v2793, 0
        %2842 = vmatprep.subr.bf16.mxu0 0
        %2843 = vmatpush1.bf16.xpose.msra.mxu0 %v2840
        %2844 = vmatprep.subr.bf16.mxu0 0
        %2845 = vmatpush1.bf16.xpose.msra.mxu0 %v2837
        %2846 = vmatprep.subr.bf16.mxu0 0
        %2847 = vmatpush1.bf16.xpose.msra.mxu0 %v2834
        %2848 = vmatprep.subr.bf16.mxu0 0
        %2849 = vmatpush1.bf16.xpose.msra.mxu0 %v2831
        %2850 = vmatprep.subr.bf16.mxu0 0
        %2851 = vmatpush1.bf16.xpose.msra.mxu0 %v2828
        %2852 = vmatprep.subr.bf16.mxu0 0
        %2853 = vmatpush1.bf16.xpose.msra.mxu0 %v2825
        %2854 = vmatprep.subr.bf16.mxu0 0
        %2855 = vmatpush1.bf16.xpose.msra.mxu0 %v2822
        %2856 = vmatprep.subr.bf16.mxu0 0
        %2857 = vmatpush1.bf16.xpose.msra.mxu0 %v2819
        %2858 = vmatprep.subr.bf16.mxu0 0
        %2859 = vmatpush2.bf16.xpose.msra.mxu0 0
        %2860 = vmatprep.subr.bf16.mxu0 0
        %2861 = vmatpush2.bf16.xpose.msra.mxu0 0
        %2862 = vmatprep.subr.bf16.mxu0 0
        %2863 = vmatpush2.bf16.xpose.msra.mxu0 0
        %2864 = vmatprep.subr.bf16.mxu0 0
        %2865 = vmatpush2.bf16.xpose.msra.mxu0 0
        %2866 = vmatprep.subr.bf16.mxu0 0
        %2867 = vmatpush2.bf16.xpose.msra.mxu0 0
        %2868 = vmatprep.subr.bf16.mxu0 0
        %2869 = vmatpush2.bf16.xpose.msra.mxu0 0
        %2870 = vmatprep.subr.bf16.mxu0 0
        %2871 = vmatpush2.bf16.xpose.msra.mxu0 0
        %2872 = vmatprep.subr.bf16.mxu0 0
        %2873 = vmatpush2.bf16.xpose.msra.mxu0 0
        %2874 = vmatprep.mubr.bf16.mxu0 0
        %2875 = vmatmul.mubr.bf16.gmra.mxu0 %v2795
        %v2876 = vpop.f32.mrf.mxu0
        %v2877 = vadd.f32 %v602, %v2876
        %v2878 = vpop.f32.mrf.mxu0
        %v2879 = vpop.f32.mrf.mxu0
        %v2880 = vadd.f32 %v603, %v2879
        %v2881 = vpop.f32.mrf.mxu0
        %2882 = vmatprep.mubr.bf16.mxu0 0
        %2883 = vmatmul.mubr.bf16.gmra.mxu0 %v2798
        %v2884 = vpop.f32.mrf.mxu0
        %v2885 = vadd.f32 %v604, %v2884
        %v2886 = vpop.f32.mrf.mxu0
        %v2887 = vpop.f32.mrf.mxu0
        %v2888 = vadd.f32 %v605, %v2887
        %v2889 = vpop.f32.mrf.mxu0
        %2890 = vmatprep.mubr.bf16.mxu0 0
        %2891 = vmatmul.mubr.bf16.gmra.mxu0 %v2801
        %v2892 = vpop.f32.mrf.mxu0
        %v2893 = vadd.f32 %v606, %v2892
        %v2894 = vpop.f32.mrf.mxu0
        %v2895 = vpop.f32.mrf.mxu0
        %v2896 = vadd.f32 %v607, %v2895
        %v2897 = vpop.f32.mrf.mxu0
        %2898 = vmatprep.mubr.bf16.mxu0 0
        %2899 = vmatmul.mubr.bf16.gmra.mxu0 %v2804
        %v2900 = vpop.f32.mrf.mxu0
        %v2901 = vadd.f32 %v608, %v2900
        %v2902 = vpop.f32.mrf.mxu0
        %v2903 = vpop.f32.mrf.mxu0
        %v2904 = vadd.f32 %v609, %v2903
        %v2905 = vpop.f32.mrf.mxu0
        %2906 = vmatprep.mubr.bf16.mxu0 0
        %2907 = vmatmul.mubr.bf16.gmra.mxu0 %v2807
        %v2908 = vpop.f32.mrf.mxu0
        %v2909 = vadd.f32 %v610, %v2908
        %v2910 = vpop.f32.mrf.mxu0
        %v2911 = vpop.f32.mrf.mxu0
        %v2912 = vadd.f32 %v611, %v2911
        %v2913 = vpop.f32.mrf.mxu0
        %2914 = vmatprep.mubr.bf16.mxu0 0
        %2915 = vmatmul.mubr.bf16.gmra.mxu0 %v2810
        %v2916 = vpop.f32.mrf.mxu0
        %v2917 = vadd.f32 %v612, %v2916
        %v2918 = vpop.f32.mrf.mxu0
        %v2919 = vpop.f32.mrf.mxu0
        %v2920 = vadd.f32 %v613, %v2919
        %v2921 = vpop.f32.mrf.mxu0
        %2922 = vmatprep.mubr.bf16.mxu0 0
        %2923 = vmatmul.mubr.bf16.gmra.mxu0 %v2813
        %v2924 = vpop.f32.mrf.mxu0
        %v2925 = vadd.f32 %v614, %v2924
        %v2926 = vpop.f32.mrf.mxu0
        %v2927 = vpop.f32.mrf.mxu0
        %v2928 = vadd.f32 %v615, %v2927
        %v2929 = vpop.f32.mrf.mxu0
        %2930 = vmatprep.mubr.bf16.mxu0 0
        %2931 = vmatmul.mubr.bf16.gmra.mxu0 %v2816
        %v2932 = vpop.f32.mrf.mxu0
        %v2933 = vadd.f32 %v616, %v2932
        %v2934 = vpop.f32.mrf.mxu0
        %v2935 = vpop.f32.mrf.mxu0
        %v2936 = vadd.f32 %v617, %v2935
        %v2937 = vpop.f32.mrf.mxu0
        %2938 = vdwg.mxu0
        %v2939 = vld [vmem:[#allocation3] sm:$0xff]
        %v2940 = vld [vmem:[#allocation3 + $0x8] sm:$0xff]
        %v2941 = vld [vmem:[#allocation3 + $0x10] sm:$0xff]
        %v2942 = vld [vmem:[#allocation3 + $0x18] sm:$0xff]
        %v2943 = vld [vmem:[#allocation3 + $0x20] sm:$0xff]
        %v2944 = vld [vmem:[#allocation3 + $0x28] sm:$0xff]
        %v2945 = vld [vmem:[#allocation3 + $0x30] sm:$0xff]
        %v2946 = vld [vmem:[#allocation3 + $0x38] sm:$0xff]
        %v2947 = vld [vmem:[#allocation3 + $0x40] sm:$0xff]
        %v2948 = vld [vmem:[#allocation3 + $0x48] sm:$0xff]
        %v2949 = vld [vmem:[#allocation3 + $0x50] sm:$0xff]
        %v2950 = vld [vmem:[#allocation3 + $0x58] sm:$0xff]
        %v2951 = vld [vmem:[#allocation3 + $0x60] sm:$0xff]
        %v2952 = vld [vmem:[#allocation3 + $0x68] sm:$0xff]
        %v2953 = vld [vmem:[#allocation3 + $0x70] sm:$0xff]
        %v2954 = vld [vmem:[#allocation3 + $0x78] sm:$0xff]
        %v2955 = vld [vmem:[#allocation4] sm:$0xff]
        %v2956 = vld [vmem:[#allocation4 + $0x8] sm:$0xff]
        %v2957 = vld [vmem:[#allocation4 + $0x10] sm:$0xff]
        %v2958 = vld [vmem:[#allocation4 + $0x18] sm:$0xff]
        %v2959 = vld [vmem:[#allocation4 + $0x20] sm:$0xff]
        %v2960 = vld [vmem:[#allocation4 + $0x28] sm:$0xff]
        %v2961 = vld [vmem:[#allocation4 + $0x30] sm:$0xff]
        %v2962 = vld [vmem:[#allocation4 + $0x38] sm:$0xff]
        %v2963 = vld [vmem:[#allocation4 + $0x40] sm:$0xff]
        %v2964 = vld [vmem:[#allocation4 + $0x48] sm:$0xff]
        %v2965 = vld [vmem:[#allocation4 + $0x50] sm:$0xff]
        %v2966 = vld [vmem:[#allocation4 + $0x58] sm:$0xff]
        %v2967 = vld [vmem:[#allocation4 + $0x60] sm:$0xff]
        %v2968 = vld [vmem:[#allocation4 + $0x68] sm:$0xff]
        %v2969 = vld [vmem:[#allocation4 + $0x70] sm:$0xff]
        %v2970 = vld [vmem:[#allocation4 + $0x78] sm:$0xff]
        %2971 = vmax.xlane.f32.xlu0 %v2877
        %v2972 = vpop.xlane.xlu0 %2971
        %2973 = vmax.xlane.f32.xlu0 %v2880
        %v2974 = vpop.xlane.xlu0 %2973
        %2975 = vmax.xlane.f32.xlu0 %v2885
        %v2976 = vpop.xlane.xlu0 %2975
        %2977 = vmax.xlane.f32.xlu0 %v2888
        %v2978 = vpop.xlane.xlu0 %2977
        %2979 = vmax.xlane.f32.xlu0 %v2893
        %v2980 = vpop.xlane.xlu0 %2979
        %2981 = vmax.xlane.f32.xlu0 %v2896
        %v2982 = vpop.xlane.xlu0 %2981
        %2983 = vmax.xlane.f32.xlu0 %v2901
        %v2984 = vpop.xlane.xlu0 %2983
        %2985 = vmax.xlane.f32.xlu0 %v2904
        %v2986 = vpop.xlane.xlu0 %2985
        %2987 = vmax.xlane.f32.xlu0 %v2909
        %v2988 = vpop.xlane.xlu0 %2987
        %2989 = vmax.xlane.f32.xlu0 %v2912
        %v2990 = vpop.xlane.xlu0 %2989
        %2991 = vmax.xlane.f32.xlu0 %v2917
        %v2992 = vpop.xlane.xlu0 %2991
        %2993 = vmax.xlane.f32.xlu0 %v2920
        %v2994 = vpop.xlane.xlu0 %2993
        %2995 = vmax.xlane.f32.xlu0 %v2925
        %v2996 = vpop.xlane.xlu0 %2995
        %2997 = vmax.xlane.f32.xlu0 %v2928
        %v2998 = vpop.xlane.xlu0 %2997
        %2999 = vmax.xlane.f32.xlu0 %v2933
        %v3000 = vpop.xlane.xlu0 %2999
        %3001 = vmax.xlane.f32.xlu0 %v2936
        %v3002 = vpop.xlane.xlu0 %3001
        %v3003 = vmax.f32 %v2939, %v2972
        %v3004 = vmax.f32 %v2940, %v2974
        %v3005 = vmax.f32 %v2941, %v2976
        %v3006 = vmax.f32 %v2942, %v2978
        %v3007 = vmax.f32 %v2943, %v2980
        %v3008 = vmax.f32 %v2944, %v2982
        %v3009 = vmax.f32 %v2945, %v2984
        %v3010 = vmax.f32 %v2946, %v2986
        %v3011 = vmax.f32 %v2947, %v2988
        %v3012 = vmax.f32 %v2948, %v2990
        %v3013 = vmax.f32 %v2949, %v2992
        %v3014 = vmax.f32 %v2950, %v2994
        %v3015 = vmax.f32 %v2951, %v2996
        %v3016 = vmax.f32 %v2952, %v2998
        %v3017 = vmax.f32 %v2953, %v3000
        %v3018 = vmax.f32 %v2954, %v3002
        %v3019 = vsub.f32 %v2939, %v3003
        %v3020 = vsub.f32 %v2940, %v3004
        %v3021 = vsub.f32 %v2941, %v3005
        %v3022 = vsub.f32 %v2942, %v3006
        %v3023 = vsub.f32 %v2943, %v3007
        %v3024 = vsub.f32 %v2944, %v3008
        %v3025 = vsub.f32 %v2945, %v3009
        %v3026 = vsub.f32 %v2946, %v3010
        %v3027 = vsub.f32 %v2947, %v3011
        %v3028 = vsub.f32 %v2948, %v3012
        %v3029 = vsub.f32 %v2949, %v3013
        %v3030 = vsub.f32 %v2950, %v3014
        %v3031 = vsub.f32 %v2951, %v3015
        %v3032 = vsub.f32 %v2952, %v3016
        %v3033 = vsub.f32 %v2953, %v3017
        %v3034 = vsub.f32 %v2954, %v3018
        %v3035 = vmul.f32 %v3019, 1.442695
        %v3036 = vpow.pop %v3035
        %v3037 = vmul.f32 %v3020, 1.442695
        %v3038 = vpow.pop %v3037
        %v3039 = vmul.f32 %v3021, 1.442695
        %v3040 = vpow.pop %v3039
        %v3041 = vmul.f32 %v3022, 1.442695
        %v3042 = vpow.pop %v3041
        %v3043 = vmul.f32 %v3023, 1.442695
        %v3044 = vpow.pop %v3043
        %v3045 = vmul.f32 %v3024, 1.442695
        %v3046 = vpow.pop %v3045
        %v3047 = vmul.f32 %v3025, 1.442695
        %v3048 = vpow.pop %v3047
        %v3049 = vmul.f32 %v3026, 1.442695
        %v3050 = vpow.pop %v3049
        %v3051 = vmul.f32 %v3027, 1.442695
        %v3052 = vpow.pop %v3051
        %v3053 = vmul.f32 %v3028, 1.442695
        %v3054 = vpow.pop %v3053
        %v3055 = vmul.f32 %v3029, 1.442695
        %v3056 = vpow.pop %v3055
        %v3057 = vmul.f32 %v3030, 1.442695
        %v3058 = vpow.pop %v3057
        %v3059 = vmul.f32 %v3031, 1.442695
        %v3060 = vpow.pop %v3059
        %v3061 = vmul.f32 %v3032, 1.442695
        %v3062 = vpow.pop %v3061
        %v3063 = vmul.f32 %v3033, 1.442695
        %v3064 = vpow.pop %v3063
        %v3065 = vmul.f32 %v3034, 1.442695
        %v3066 = vpow.pop %v3065
        %3068 = vset.pattern.permute.xlu0 2
        %3069 = vperm.xlu0 %3068, %v3003
        %v3070 = vpop.permute.xlu0 %3069
        %3073 = vset.pattern.permute.xlu0 2
        %3074 = vperm.xlu0 %3073, %v3004
        %v3075 = vpop.permute.xlu0 %3074
        %3078 = vset.pattern.permute.xlu0 2
        %3079 = vperm.xlu0 %3078, %v3005
        %v3080 = vpop.permute.xlu0 %3079
        %3083 = vset.pattern.permute.xlu0 2
        %3084 = vperm.xlu0 %3083, %v3006
        %v3085 = vpop.permute.xlu0 %3084
        %3088 = vset.pattern.permute.xlu0 2
        %3089 = vperm.xlu0 %3088, %v3007
        %v3090 = vpop.permute.xlu0 %3089
        %3093 = vset.pattern.permute.xlu0 2
        %3094 = vperm.xlu0 %3093, %v3008
        %v3095 = vpop.permute.xlu0 %3094
        %3098 = vset.pattern.permute.xlu0 2
        %3099 = vperm.xlu0 %3098, %v3009
        %v3100 = vpop.permute.xlu0 %3099
        %3103 = vset.pattern.permute.xlu0 2
        %3104 = vperm.xlu0 %3103, %v3010
        %v3105 = vpop.permute.xlu0 %3104
        %3108 = vset.pattern.permute.xlu0 2
        %3109 = vperm.xlu0 %3108, %v3011
        %v3110 = vpop.permute.xlu0 %3109
        %3113 = vset.pattern.permute.xlu0 2
        %3114 = vperm.xlu0 %3113, %v3012
        %v3115 = vpop.permute.xlu0 %3114
        %3118 = vset.pattern.permute.xlu0 2
        %3119 = vperm.xlu0 %3118, %v3013
        %v3120 = vpop.permute.xlu0 %3119
        %3123 = vset.pattern.permute.xlu0 2
        %3124 = vperm.xlu0 %3123, %v3014
        %v3125 = vpop.permute.xlu0 %3124
        %3128 = vset.pattern.permute.xlu0 2
        %3129 = vperm.xlu0 %3128, %v3015
        %v3130 = vpop.permute.xlu0 %3129
        %3133 = vset.pattern.permute.xlu0 2
        %3134 = vperm.xlu0 %3133, %v3016
        %v3135 = vpop.permute.xlu0 %3134
        %3138 = vset.pattern.permute.xlu0 2
        %3139 = vperm.xlu0 %3138, %v3017
        %v3140 = vpop.permute.xlu0 %3139
        %3143 = vset.pattern.permute.xlu0 2
        %3144 = vperm.xlu0 %3143, %v3018
        %v3145 = vpop.permute.xlu0 %3144
        %v3147 = vsub.f32 %v2877, %v3070
        %v3148 = vsub.f32 %v2880, %v3075
        %v3149 = vsub.f32 %v2885, %v3080
        %v3150 = vsub.f32 %v2888, %v3085
        %v3151 = vsub.f32 %v2893, %v3090
        %v3152 = vsub.f32 %v2896, %v3095
        %v3153 = vsub.f32 %v2901, %v3100
        %v3154 = vsub.f32 %v2904, %v3105
        %v3155 = vsub.f32 %v2909, %v3110
        %v3156 = vsub.f32 %v2912, %v3115
        %v3157 = vsub.f32 %v2917, %v3120
        %v3158 = vsub.f32 %v2920, %v3125
        %v3159 = vsub.f32 %v2925, %v3130
        %v3160 = vsub.f32 %v2928, %v3135
        %v3161 = vsub.f32 %v2933, %v3140
        %v3162 = vsub.f32 %v2936, %v3145
        %v3163 = vmul.f32 %v3147, 1.442695
        %v3164 = vpow.pop %v3163
        %v3165 = vmul.f32 %v3148, 1.442695
        %v3166 = vpow.pop %v3165
        %v3167 = vmul.f32 %v3149, 1.442695
        %v3168 = vpow.pop %v3167
        %v3169 = vmul.f32 %v3150, 1.442695
        %v3170 = vpow.pop %v3169
        %v3171 = vmul.f32 %v3151, 1.442695
        %v3172 = vpow.pop %v3171
        %v3173 = vmul.f32 %v3152, 1.442695
        %v3174 = vpow.pop %v3173
        %v3175 = vmul.f32 %v3153, 1.442695
        %v3176 = vpow.pop %v3175
        %v3177 = vmul.f32 %v3154, 1.442695
        %v3178 = vpow.pop %v3177
        %v3179 = vmul.f32 %v3155, 1.442695
        %v3180 = vpow.pop %v3179
        %v3181 = vmul.f32 %v3156, 1.442695
        %v3182 = vpow.pop %v3181
        %v3183 = vmul.f32 %v3157, 1.442695
        %v3184 = vpow.pop %v3183
        %v3185 = vmul.f32 %v3158, 1.442695
        %v3186 = vpow.pop %v3185
        %v3187 = vmul.f32 %v3159, 1.442695
        %v3188 = vpow.pop %v3187
        %v3189 = vmul.f32 %v3160, 1.442695
        %v3190 = vpow.pop %v3189
        %v3191 = vmul.f32 %v3161, 1.442695
        %v3192 = vpow.pop %v3191
        %v3193 = vmul.f32 %v3162, 1.442695
        %v3194 = vpow.pop %v3193
        %v3195 = vmul.f32 %v3036, %v2955
        %v3196 = vmul.f32 %v3038, %v2956
        %v3197 = vmul.f32 %v3040, %v2957
        %v3198 = vmul.f32 %v3042, %v2958
        %v3199 = vmul.f32 %v3044, %v2959
        %v3200 = vmul.f32 %v3046, %v2960
        %v3201 = vmul.f32 %v3048, %v2961
        %v3202 = vmul.f32 %v3050, %v2962
        %v3203 = vmul.f32 %v3052, %v2963
        %v3204 = vmul.f32 %v3054, %v2964
        %v3205 = vmul.f32 %v3056, %v2965
        %v3206 = vmul.f32 %v3058, %v2966
        %v3207 = vmul.f32 %v3060, %v2967
        %v3208 = vmul.f32 %v3062, %v2968
        %v3209 = vmul.f32 %v3064, %v2969
        %v3210 = vmul.f32 %v3066, %v2970
        %3211 = vadd.xlane.f32.xlu0 %v3164
        %v3212 = vpop.xlane.xlu0 %3211
        %3213 = vadd.xlane.f32.xlu0 %v3166
        %v3214 = vpop.xlane.xlu0 %3213
        %3215 = vadd.xlane.f32.xlu0 %v3168
        %v3216 = vpop.xlane.xlu0 %3215
        %3217 = vadd.xlane.f32.xlu0 %v3170
        %v3218 = vpop.xlane.xlu0 %3217
        %3219 = vadd.xlane.f32.xlu0 %v3172
        %v3220 = vpop.xlane.xlu0 %3219
        %3221 = vadd.xlane.f32.xlu0 %v3174
        %v3222 = vpop.xlane.xlu0 %3221
        %3223 = vadd.xlane.f32.xlu0 %v3176
        %v3224 = vpop.xlane.xlu0 %3223
        %3225 = vadd.xlane.f32.xlu0 %v3178
        %v3226 = vpop.xlane.xlu0 %3225
        %3227 = vadd.xlane.f32.xlu0 %v3180
        %v3228 = vpop.xlane.xlu0 %3227
        %3229 = vadd.xlane.f32.xlu0 %v3182
        %v3230 = vpop.xlane.xlu0 %3229
        %3231 = vadd.xlane.f32.xlu0 %v3184
        %v3232 = vpop.xlane.xlu0 %3231
        %3233 = vadd.xlane.f32.xlu0 %v3186
        %v3234 = vpop.xlane.xlu0 %3233
        %3235 = vadd.xlane.f32.xlu0 %v3188
        %v3236 = vpop.xlane.xlu0 %3235
        %3237 = vadd.xlane.f32.xlu0 %v3190
        %v3238 = vpop.xlane.xlu0 %3237
        %3239 = vadd.xlane.f32.xlu0 %v3192
        %v3240 = vpop.xlane.xlu0 %3239
        %3241 = vadd.xlane.f32.xlu0 %v3194
        %v3242 = vpop.xlane.xlu0 %3241
        %v3243 = vadd.f32 %v3195, %v3212
        %v3244 = vadd.f32 %v3196, %v3214
        %v3245 = vadd.f32 %v3197, %v3216
        %v3246 = vadd.f32 %v3198, %v3218
        %v3247 = vadd.f32 %v3199, %v3220
        %v3248 = vadd.f32 %v3200, %v3222
        %v3249 = vadd.f32 %v3201, %v3224
        %v3250 = vadd.f32 %v3202, %v3226
        %v3251 = vadd.f32 %v3203, %v3228
        %v3252 = vadd.f32 %v3204, %v3230
        %v3253 = vadd.f32 %v3205, %v3232
        %v3254 = vadd.f32 %v3206, %v3234
        %v3255 = vadd.f32 %v3207, %v3236
        %v3256 = vadd.f32 %v3208, %v3238
        %v3257 = vadd.f32 %v3209, %v3240
        %v3258 = vadd.f32 %v3210, %v3242
        %vm3259 = vcmask 23568
        %3260 = vst.msk [vmem:[#allocation4] sm:$0xff] %vm3259, %v3243
        %3261 = vst.msk [vmem:[#allocation4 + $0x8] sm:$0xff] %vm3259, %v3244
        %3262 = vst.msk [vmem:[#allocation4 + $0x10] sm:$0xff] %vm3259, %v3245
        %3263 = vst.msk [vmem:[#allocation4 + $0x18] sm:$0xff] %vm3259, %v3246
        %3264 = vst.msk [vmem:[#allocation4 + $0x20] sm:$0xff] %vm3259, %v3247
        %3265 = vst.msk [vmem:[#allocation4 + $0x28] sm:$0xff] %vm3259, %v3248
        %3266 = vst.msk [vmem:[#allocation4 + $0x30] sm:$0xff] %vm3259, %v3249
        %3267 = vst.msk [vmem:[#allocation4 + $0x38] sm:$0xff] %vm3259, %v3250
        %3268 = vst.msk [vmem:[#allocation4 + $0x40] sm:$0xff] %vm3259, %v3251
        %3269 = vst.msk [vmem:[#allocation4 + $0x48] sm:$0xff] %vm3259, %v3252
        %3270 = vst.msk [vmem:[#allocation4 + $0x50] sm:$0xff] %vm3259, %v3253
        %3271 = vst.msk [vmem:[#allocation4 + $0x58] sm:$0xff] %vm3259, %v3254
        %3272 = vst.msk [vmem:[#allocation4 + $0x60] sm:$0xff] %vm3259, %v3255
        %3273 = vst.msk [vmem:[#allocation4 + $0x68] sm:$0xff] %vm3259, %v3256
        %3274 = vst.msk [vmem:[#allocation4 + $0x70] sm:$0xff] %vm3259, %v3257
        %3275 = vst.msk [vmem:[#allocation4 + $0x78] sm:$0xff] %vm3259, %v3258
        %3276 = vst.msk [vmem:[#allocation3] sm:$0xff] %vm3259, %v3003
        %3277 = vst.msk [vmem:[#allocation3 + $0x8] sm:$0xff] %vm3259, %v3004
        %3278 = vst.msk [vmem:[#allocation3 + $0x10] sm:$0xff] %vm3259, %v3005
        %3279 = vst.msk [vmem:[#allocation3 + $0x18] sm:$0xff] %vm3259, %v3006
        %3280 = vst.msk [vmem:[#allocation3 + $0x20] sm:$0xff] %vm3259, %v3007
        %3281 = vst.msk [vmem:[#allocation3 + $0x28] sm:$0xff] %vm3259, %v3008
        %3282 = vst.msk [vmem:[#allocation3 + $0x30] sm:$0xff] %vm3259, %v3009
        %3283 = vst.msk [vmem:[#allocation3 + $0x38] sm:$0xff] %vm3259, %v3010
        %3284 = vst.msk [vmem:[#allocation3 + $0x40] sm:$0xff] %vm3259, %v3011
        %3285 = vst.msk [vmem:[#allocation3 + $0x48] sm:$0xff] %vm3259, %v3012
        %3286 = vst.msk [vmem:[#allocation3 + $0x50] sm:$0xff] %vm3259, %v3013
        %3287 = vst.msk [vmem:[#allocation3 + $0x58] sm:$0xff] %vm3259, %v3014
        %3288 = vst.msk [vmem:[#allocation3 + $0x60] sm:$0xff] %vm3259, %v3015
        %3289 = vst.msk [vmem:[#allocation3 + $0x68] sm:$0xff] %vm3259, %v3016
        %3290 = vst.msk [vmem:[#allocation3 + $0x70] sm:$0xff] %vm3259, %v3017
        %3291 = vst.msk [vmem:[#allocation3 + $0x78] sm:$0xff] %vm3259, %v3018
        %3292 = vset.pattern.permute.xlu0 2
        %3293 = vperm.xlu0 %3292, %v586
        %v3294 = vpop.permute.xlu0 %3293
        %3296 = vset.pattern.permute.xlu0 2
        %3297 = vperm.xlu0 %3296, %v587
        %v3298 = vpop.permute.xlu0 %3297
        %3300 = vset.pattern.permute.xlu0 2
        %3301 = vperm.xlu0 %3300, %v588
        %v3302 = vpop.permute.xlu0 %3301
        %3304 = vset.pattern.permute.xlu0 2
        %3305 = vperm.xlu0 %3304, %v589
        %v3306 = vpop.permute.xlu0 %3305
        %3308 = vset.pattern.permute.xlu0 2
        %3309 = vperm.xlu0 %3308, %v590
        %v3310 = vpop.permute.xlu0 %3309
        %3312 = vset.pattern.permute.xlu0 2
        %3313 = vperm.xlu0 %3312, %v591
        %v3314 = vpop.permute.xlu0 %3313
        %3316 = vset.pattern.permute.xlu0 2
        %3317 = vperm.xlu0 %3316, %v592
        %v3318 = vpop.permute.xlu0 %3317
        %3320 = vset.pattern.permute.xlu0 2
        %3321 = vperm.xlu0 %3320, %v593
        %v3322 = vpop.permute.xlu0 %3321
        %3324 = vset.pattern.permute.xlu0 2
        %3325 = vperm.xlu0 %3324, %v594
        %v3326 = vpop.permute.xlu0 %3325
        %3328 = vset.pattern.permute.xlu0 2
        %3329 = vperm.xlu0 %3328, %v595
        %v3330 = vpop.permute.xlu0 %3329
        %3332 = vset.pattern.permute.xlu0 2
        %3333 = vperm.xlu0 %3332, %v596
        %v3334 = vpop.permute.xlu0 %3333
        %3336 = vset.pattern.permute.xlu0 2
        %3337 = vperm.xlu0 %3336, %v597
        %v3338 = vpop.permute.xlu0 %3337
        %3340 = vset.pattern.permute.xlu0 2
        %3341 = vperm.xlu0 %3340, %v598
        %v3342 = vpop.permute.xlu0 %3341
        %3344 = vset.pattern.permute.xlu0 2
        %3345 = vperm.xlu0 %3344, %v599
        %v3346 = vpop.permute.xlu0 %3345
        %3348 = vset.pattern.permute.xlu0 2
        %3349 = vperm.xlu0 %3348, %v600
        %v3350 = vpop.permute.xlu0 %3349
        %3352 = vset.pattern.permute.xlu0 2
        %3353 = vperm.xlu0 %3352, %v601
        %v3354 = vpop.permute.xlu0 %3353
        %v3356 = vmul.f32 %v554, %v3294
        %v3357 = vmul.f32 %v555, %v3298
        %v3358 = vmul.f32 %v556, %v3302
        %v3359 = vmul.f32 %v557, %v3306
        %v3360 = vmul.f32 %v558, %v3310
        %v3361 = vmul.f32 %v559, %v3314
        %v3362 = vmul.f32 %v560, %v3318
        %v3363 = vmul.f32 %v561, %v3322
        %v3364 = vmul.f32 %v562, %v3326
        %v3365 = vmul.f32 %v563, %v3330
        %v3366 = vmul.f32 %v564, %v3334
        %v3367 = vmul.f32 %v565, %v3338
        %v3368 = vmul.f32 %v566, %v3342
        %v3369 = vmul.f32 %v567, %v3346
        %v3370 = vmul.f32 %v568, %v3350
        %v3371 = vmul.f32 %v569, %v3354
        %v3372 = vpack.c.bf16 %v3357, %v3356
        %v3373 = vpack.c.bf16 %v3359, %v3358
        %v3374 = vpack.c.bf16 %v3361, %v3360
        %v3375 = vpack.c.bf16 %v3363, %v3362
        %v3376 = vpack.c.bf16 %v3365, %v3364
        %v3377 = vpack.c.bf16 %v3367, %v3366
        %v3378 = vpack.c.bf16 %v3369, %v3368
        %v3379 = vpack.c.bf16 %v3371, %v3370
        %v3380 = vpack.c.bf16 %v3166, %v3164
        %v3381 = vpack.c.bf16 %v3170, %v3168
        %v3382 = vpack.c.bf16 %v3174, %v3172
        %v3383 = vpack.c.bf16 %v3178, %v3176
        %v3384 = vpack.c.bf16 %v3182, %v3180
        %v3385 = vpack.c.bf16 %v3186, %v3184
        %v3386 = vpack.c.bf16 %v3190, %v3188
        %v3387 = vpack.c.bf16 %v3194, %v3192
        %3396 = vrot.lane.b32.xlu0 %v3372, 64
        %v3397 = vpop.permute.xlu0 %3396
        %3398 = vrot.lane.b32.xlu0 %v3373, 64
        %v3399 = vpop.permute.xlu0 %3398
        %3400 = vrot.lane.b32.xlu0 %v3374, 64
        %v3401 = vpop.permute.xlu0 %3400
        %3402 = vrot.lane.b32.xlu0 %v3375, 64
        %v3403 = vpop.permute.xlu0 %3402
        %3404 = vrot.lane.b32.xlu0 %v3376, 64
        %v3405 = vpop.permute.xlu0 %3404
        %3406 = vrot.lane.b32.xlu0 %v3377, 64
        %v3407 = vpop.permute.xlu0 %3406
        %3408 = vrot.lane.b32.xlu0 %v3378, 64
        %v3409 = vpop.permute.xlu0 %3408
        %3410 = vrot.lane.b32.xlu0 %v3379, 64
        %v3411 = vpop.permute.xlu0 %3410
        %3420 = vmatprep.subr.bf16.mxu0 0
        %3421 = vmatpush1.bf16.msra.mxu0 %v3411
        %3422 = vmatprep.subr.bf16.mxu0 0
        %3423 = vmatpush1.bf16.msra.mxu0 %v3409
        %3424 = vmatprep.subr.bf16.mxu0 0
        %3425 = vmatpush1.bf16.msra.mxu0 %v3407
        %3426 = vmatprep.subr.bf16.mxu0 0
        %3427 = vmatpush1.bf16.msra.mxu0 %v3405
        %3428 = vmatprep.subr.bf16.mxu0 0
        %3429 = vmatpush1.bf16.msra.mxu0 %v3403
        %3430 = vmatprep.subr.bf16.mxu0 0
        %3431 = vmatpush1.bf16.msra.mxu0 %v3401
        %3432 = vmatprep.subr.bf16.mxu0 0
        %3433 = vmatpush1.bf16.msra.mxu0 %v3399
        %3434 = vmatprep.subr.bf16.mxu0 0
        %3435 = vmatpush1.bf16.msra.mxu0 %v3397
        %3436 = vmatprep.subr.bf16.mxu0 0
        %3437 = vmatpush2.bf16.msra.mxu0 0
        %3438 = vmatprep.subr.bf16.mxu0 0
        %3439 = vmatpush2.bf16.msra.mxu0 0
        %3440 = vmatprep.subr.bf16.mxu0 0
        %3441 = vmatpush2.bf16.msra.mxu0 0
        %3442 = vmatprep.subr.bf16.mxu0 0
        %3443 = vmatpush2.bf16.msra.mxu0 0
        %3444 = vmatprep.subr.bf16.mxu0 0
        %3445 = vmatpush2.bf16.msra.mxu0 0
        %3446 = vmatprep.subr.bf16.mxu0 0
        %3447 = vmatpush2.bf16.msra.mxu0 0
        %3448 = vmatprep.subr.bf16.mxu0 0
        %3449 = vmatpush2.bf16.msra.mxu0 0
        %3450 = vmatprep.subr.bf16.mxu0 0
        %3451 = vmatpush2.bf16.msra.mxu0 0
        %3452 = vmatprep.mubr.bf16.mxu0 0
        %3453 = vmatmul.mubr.bf16.gmra.mxu0 %v3380
        %v3454 = vpop.f32.mrf.mxu0
        %v3455 = vadd.f32 0.0, %v3454
        %v3456 = vpop.f32.mrf.mxu0
        %v3457 = vpop.f32.mrf.mxu0
        %v3458 = vadd.f32 0.0, %v3457
        %v3459 = vpop.f32.mrf.mxu0
        %3460 = vmatprep.mubr.bf16.mxu0 0
        %3461 = vmatmul.mubr.bf16.gmra.mxu0 %v3381
        %v3462 = vpop.f32.mrf.mxu0
        %v3463 = vadd.f32 0.0, %v3462
        %v3464 = vpop.f32.mrf.mxu0
        %v3465 = vpop.f32.mrf.mxu0
        %v3466 = vadd.f32 0.0, %v3465
        %v3467 = vpop.f32.mrf.mxu0
        %3468 = vmatprep.mubr.bf16.mxu0 0
        %3469 = vmatmul.mubr.bf16.gmra.mxu0 %v3382
        %v3470 = vpop.f32.mrf.mxu0
        %v3471 = vadd.f32 0.0, %v3470
        %v3472 = vpop.f32.mrf.mxu0
        %v3473 = vpop.f32.mrf.mxu0
        %v3474 = vadd.f32 0.0, %v3473
        %v3475 = vpop.f32.mrf.mxu0
        %3476 = vmatprep.mubr.bf16.mxu0 0
        %3477 = vmatmul.mubr.bf16.gmra.mxu0 %v3383
        %v3478 = vpop.f32.mrf.mxu0
        %v3479 = vadd.f32 0.0, %v3478
        %v3480 = vpop.f32.mrf.mxu0
        %v3481 = vpop.f32.mrf.mxu0
        %v3482 = vadd.f32 0.0, %v3481
        %v3483 = vpop.f32.mrf.mxu0
        %3484 = vmatprep.mubr.bf16.mxu0 0
        %3485 = vmatmul.mubr.bf16.gmra.mxu0 %v3384
        %v3486 = vpop.f32.mrf.mxu0
        %v3487 = vadd.f32 0.0, %v3486
        %v3488 = vpop.f32.mrf.mxu0
        %v3489 = vpop.f32.mrf.mxu0
        %v3490 = vadd.f32 0.0, %v3489
        %v3491 = vpop.f32.mrf.mxu0
        %3492 = vmatprep.mubr.bf16.mxu0 0
        %3493 = vmatmul.mubr.bf16.gmra.mxu0 %v3385
        %v3494 = vpop.f32.mrf.mxu0
        %v3495 = vadd.f32 0.0, %v3494
        %v3496 = vpop.f32.mrf.mxu0
        %v3497 = vpop.f32.mrf.mxu0
        %v3498 = vadd.f32 0.0, %v3497
        %v3499 = vpop.f32.mrf.mxu0
        %3500 = vmatprep.mubr.bf16.mxu0 0
        %3501 = vmatmul.mubr.bf16.gmra.mxu0 %v3386
        %v3502 = vpop.f32.mrf.mxu0
        %v3503 = vadd.f32 0.0, %v3502
        %v3504 = vpop.f32.mrf.mxu0
        %v3505 = vpop.f32.mrf.mxu0
        %v3506 = vadd.f32 0.0, %v3505
        %v3507 = vpop.f32.mrf.mxu0
        %3508 = vmatprep.mubr.bf16.mxu0 0
        %3509 = vmatmul.mubr.bf16.gmra.mxu0 %v3387
        %v3510 = vpop.f32.mrf.mxu0
        %v3511 = vadd.f32 0.0, %v3510
        %v3512 = vpop.f32.mrf.mxu0
        %v3513 = vpop.f32.mrf.mxu0
        %v3514 = vadd.f32 0.0, %v3513
        %v3515 = vpop.f32.mrf.mxu0
        %3516 = vdwg.mxu0
        %v3517 = vld [vmem:[#allocation2] sm:$0xff]
        %v3518 = vld [vmem:[#allocation2 + $0x8] sm:$0xff]
        %v3519 = vld [vmem:[#allocation2 + $0x10] sm:$0xff]
        %v3520 = vld [vmem:[#allocation2 + $0x18] sm:$0xff]
        %v3521 = vld [vmem:[#allocation2 + $0x20] sm:$0xff]
        %v3522 = vld [vmem:[#allocation2 + $0x28] sm:$0xff]
        %v3523 = vld [vmem:[#allocation2 + $0x30] sm:$0xff]
        %v3524 = vld [vmem:[#allocation2 + $0x38] sm:$0xff]
        %v3525 = vld [vmem:[#allocation2 + $0x40] sm:$0xff]
        %v3526 = vld [vmem:[#allocation2 + $0x48] sm:$0xff]
        %v3527 = vld [vmem:[#allocation2 + $0x50] sm:$0xff]
        %v3528 = vld [vmem:[#allocation2 + $0x58] sm:$0xff]
        %v3529 = vld [vmem:[#allocation2 + $0x60] sm:$0xff]
        %v3530 = vld [vmem:[#allocation2 + $0x68] sm:$0xff]
        %v3531 = vld [vmem:[#allocation2 + $0x70] sm:$0xff]
        %v3532 = vld [vmem:[#allocation2 + $0x78] sm:$0xff]
        %3534 = vset.pattern.permute.xlu0 2
        %3535 = vperm.xlu0 %3534, %v3036
        %v3536 = vpop.permute.xlu0 %3535
        %3539 = vset.pattern.permute.xlu0 2
        %3540 = vperm.xlu0 %3539, %v3038
        %v3541 = vpop.permute.xlu0 %3540
        %3544 = vset.pattern.permute.xlu0 2
        %3545 = vperm.xlu0 %3544, %v3040
        %v3546 = vpop.permute.xlu0 %3545
        %3549 = vset.pattern.permute.xlu0 2
        %3550 = vperm.xlu0 %3549, %v3042
        %v3551 = vpop.permute.xlu0 %3550
        %3554 = vset.pattern.permute.xlu0 2
        %3555 = vperm.xlu0 %3554, %v3044
        %v3556 = vpop.permute.xlu0 %3555
        %3559 = vset.pattern.permute.xlu0 2
        %3560 = vperm.xlu0 %3559, %v3046
        %v3561 = vpop.permute.xlu0 %3560
        %3564 = vset.pattern.permute.xlu0 2
        %3565 = vperm.xlu0 %3564, %v3048
        %v3566 = vpop.permute.xlu0 %3565
        %3569 = vset.pattern.permute.xlu0 2
        %3570 = vperm.xlu0 %3569, %v3050
        %v3571 = vpop.permute.xlu0 %3570
        %3574 = vset.pattern.permute.xlu0 2
        %3575 = vperm.xlu0 %3574, %v3052
        %v3576 = vpop.permute.xlu0 %3575
        %3579 = vset.pattern.permute.xlu0 2
        %3580 = vperm.xlu0 %3579, %v3054
        %v3581 = vpop.permute.xlu0 %3580
        %3584 = vset.pattern.permute.xlu0 2
        %3585 = vperm.xlu0 %3584, %v3056
        %v3586 = vpop.permute.xlu0 %3585
        %3589 = vset.pattern.permute.xlu0 2
        %3590 = vperm.xlu0 %3589, %v3058
        %v3591 = vpop.permute.xlu0 %3590
        %3594 = vset.pattern.permute.xlu0 2
        %3595 = vperm.xlu0 %3594, %v3060
        %v3596 = vpop.permute.xlu0 %3595
        %3599 = vset.pattern.permute.xlu0 2
        %3600 = vperm.xlu0 %3599, %v3062
        %v3601 = vpop.permute.xlu0 %3600
        %3604 = vset.pattern.permute.xlu0 2
        %3605 = vperm.xlu0 %3604, %v3064
        %v3606 = vpop.permute.xlu0 %3605
        %3609 = vset.pattern.permute.xlu0 2
        %3610 = vperm.xlu0 %3609, %v3066
        %v3611 = vpop.permute.xlu0 %3610
        %v3613 = vmul.f32 %v3536, %v3517
        %v3614 = vmul.f32 %v3541, %v3518
        %v3615 = vmul.f32 %v3546, %v3519
        %v3616 = vmul.f32 %v3551, %v3520
        %v3617 = vmul.f32 %v3556, %v3521
        %v3618 = vmul.f32 %v3561, %v3522
        %v3619 = vmul.f32 %v3566, %v3523
        %v3620 = vmul.f32 %v3571, %v3524
        %v3621 = vmul.f32 %v3576, %v3525
        %v3622 = vmul.f32 %v3581, %v3526
        %v3623 = vmul.f32 %v3586, %v3527
        %v3624 = vmul.f32 %v3591, %v3528
        %v3625 = vmul.f32 %v3596, %v3529
        %v3626 = vmul.f32 %v3601, %v3530
        %v3627 = vmul.f32 %v3606, %v3531
        %v3628 = vmul.f32 %v3611, %v3532
        %3645 = vrot.lane.b32.xlu0 %v3455, 64
        %v3646 = vpop.permute.xlu0 %3645
        %3647 = vrot.lane.b32.xlu0 %v3458, 64
        %v3648 = vpop.permute.xlu0 %3647
        %3649 = vrot.lane.b32.xlu0 %v3463, 64
        %v3650 = vpop.permute.xlu0 %3649
        %3651 = vrot.lane.b32.xlu0 %v3466, 64
        %v3652 = vpop.permute.xlu0 %3651
        %3653 = vrot.lane.b32.xlu0 %v3471, 64
        %v3654 = vpop.permute.xlu0 %3653
        %3655 = vrot.lane.b32.xlu0 %v3474, 64
        %v3656 = vpop.permute.xlu0 %3655
        %3657 = vrot.lane.b32.xlu0 %v3479, 64
        %v3658 = vpop.permute.xlu0 %3657
        %3659 = vrot.lane.b32.xlu0 %v3482, 64
        %v3660 = vpop.permute.xlu0 %3659
        %3661 = vrot.lane.b32.xlu0 %v3487, 64
        %v3662 = vpop.permute.xlu0 %3661
        %3663 = vrot.lane.b32.xlu0 %v3490, 64
        %v3664 = vpop.permute.xlu0 %3663
        %3665 = vrot.lane.b32.xlu0 %v3495, 64
        %v3666 = vpop.permute.xlu0 %3665
        %3667 = vrot.lane.b32.xlu0 %v3498, 64
        %v3668 = vpop.permute.xlu0 %3667
        %3669 = vrot.lane.b32.xlu0 %v3503, 64
        %v3670 = vpop.permute.xlu0 %3669
        %3671 = vrot.lane.b32.xlu0 %v3506, 64
        %v3672 = vpop.permute.xlu0 %3671
        %3673 = vrot.lane.b32.xlu0 %v3511, 64
        %v3674 = vpop.permute.xlu0 %3673
        %3675 = vrot.lane.b32.xlu0 %v3514, 64
        %v3676 = vpop.permute.xlu0 %3675
        %v3693 = vadd.f32 %v3613, %v3646
        %v3694 = vadd.f32 %v3614, %v3648
        %v3695 = vadd.f32 %v3615, %v3650
        %v3696 = vadd.f32 %v3616, %v3652
        %v3697 = vadd.f32 %v3617, %v3654
        %v3698 = vadd.f32 %v3618, %v3656
        %v3699 = vadd.f32 %v3619, %v3658
        %v3700 = vadd.f32 %v3620, %v3660
        %v3701 = vadd.f32 %v3621, %v3662
        %v3702 = vadd.f32 %v3622, %v3664
        %v3703 = vadd.f32 %v3623, %v3666
        %v3704 = vadd.f32 %v3624, %v3668
        %v3705 = vadd.f32 %v3625, %v3670
        %v3706 = vadd.f32 %v3626, %v3672
        %v3707 = vadd.f32 %v3627, %v3674
        %v3708 = vadd.f32 %v3628, %v3676
        %vm3709 = vcmask 785920
        %3710 = vst.msk [vmem:[#allocation2] sm:$0xff] %vm3709, %v3693
        %3711 = vst.msk [vmem:[#allocation2 + $0x8] sm:$0xff] %vm3709, %v3694
        %3712 = vst.msk [vmem:[#allocation2 + $0x10] sm:$0xff] %vm3709, %v3695
        %3713 = vst.msk [vmem:[#allocation2 + $0x18] sm:$0xff] %vm3709, %v3696
        %3714 = vst.msk [vmem:[#allocation2 + $0x20] sm:$0xff] %vm3709, %v3697
        %3715 = vst.msk [vmem:[#allocation2 + $0x28] sm:$0xff] %vm3709, %v3698
        %3716 = vst.msk [vmem:[#allocation2 + $0x30] sm:$0xff] %vm3709, %v3699
        %3717 = vst.msk [vmem:[#allocation2 + $0x38] sm:$0xff] %vm3709, %v3700
        %3718 = vst.msk [vmem:[#allocation2 + $0x40] sm:$0xff] %vm3709, %v3701
        %3719 = vst.msk [vmem:[#allocation2 + $0x48] sm:$0xff] %vm3709, %v3702
        %3720 = vst.msk [vmem:[#allocation2 + $0x50] sm:$0xff] %vm3709, %v3703
        %3721 = vst.msk [vmem:[#allocation2 + $0x58] sm:$0xff] %vm3709, %v3704
        %3722 = vst.msk [vmem:[#allocation2 + $0x60] sm:$0xff] %vm3709, %v3705
        %3723 = vst.msk [vmem:[#allocation2 + $0x68] sm:$0xff] %vm3709, %v3706
        %3724 = vst.msk [vmem:[#allocation2 + $0x70] sm:$0xff] %vm3709, %v3707
        %3725 = vst.msk [vmem:[#allocation2 + $0x78] sm:$0xff] %vm3709, %v3708
        %3726 = vset.pattern.permute.xlu0 3
        %3727 = vperm.xlu0 %3726, %v618
        %v3728 = vpop.permute.xlu0 %3727
        %3730 = vset.pattern.permute.xlu0 3
        %3731 = vperm.xlu0 %3730, %v619
        %v3732 = vpop.permute.xlu0 %3731
        %3734 = vset.pattern.permute.xlu0 3
        %3735 = vperm.xlu0 %3734, %v620
        %v3736 = vpop.permute.xlu0 %3735
        %3738 = vset.pattern.permute.xlu0 3
        %3739 = vperm.xlu0 %3738, %v621
        %v3740 = vpop.permute.xlu0 %3739
        %3742 = vset.pattern.permute.xlu0 3
        %3743 = vperm.xlu0 %3742, %v622
        %v3744 = vpop.permute.xlu0 %3743
        %3746 = vset.pattern.permute.xlu0 3
        %3747 = vperm.xlu0 %3746, %v623
        %v3748 = vpop.permute.xlu0 %3747
        %3750 = vset.pattern.permute.xlu0 3
        %3751 = vperm.xlu0 %3750, %v624
        %v3752 = vpop.permute.xlu0 %3751
        %3754 = vset.pattern.permute.xlu0 3
        %3755 = vperm.xlu0 %3754, %v625
        %v3756 = vpop.permute.xlu0 %3755
        %3758 = vset.pattern.permute.xlu0 3
        %3759 = vperm.xlu0 %3758, %v626
        %v3760 = vpop.permute.xlu0 %3759
        %3762 = vset.pattern.permute.xlu0 3
        %3763 = vperm.xlu0 %3762, %v627
        %v3764 = vpop.permute.xlu0 %3763
        %3766 = vset.pattern.permute.xlu0 3
        %3767 = vperm.xlu0 %3766, %v628
        %v3768 = vpop.permute.xlu0 %3767
        %3770 = vset.pattern.permute.xlu0 3
        %3771 = vperm.xlu0 %3770, %v629
        %v3772 = vpop.permute.xlu0 %3771
        %3774 = vset.pattern.permute.xlu0 3
        %3775 = vperm.xlu0 %3774, %v630
        %v3776 = vpop.permute.xlu0 %3775
        %3778 = vset.pattern.permute.xlu0 3
        %3779 = vperm.xlu0 %3778, %v631
        %v3780 = vpop.permute.xlu0 %3779
        %3782 = vset.pattern.permute.xlu0 3
        %3783 = vperm.xlu0 %3782, %v632
        %v3784 = vpop.permute.xlu0 %3783
        %3786 = vset.pattern.permute.xlu0 3
        %3787 = vperm.xlu0 %3786, %v633
        %v3788 = vpop.permute.xlu0 %3787
        %v3790 = vmul.f32 %v522, %v3728
        %v3791 = vmul.f32 %v523, %v3732
        %v3792 = vmul.f32 %v524, %v3736
        %v3793 = vmul.f32 %v525, %v3740
        %v3794 = vmul.f32 %v526, %v3744
        %v3795 = vmul.f32 %v527, %v3748
        %v3796 = vmul.f32 %v528, %v3752
        %v3797 = vmul.f32 %v529, %v3756
        %v3798 = vmul.f32 %v530, %v3760
        %v3799 = vmul.f32 %v531, %v3764
        %v3800 = vmul.f32 %v532, %v3768
        %v3801 = vmul.f32 %v533, %v3772
        %v3802 = vmul.f32 %v534, %v3776
        %v3803 = vmul.f32 %v535, %v3780
        %v3804 = vmul.f32 %v536, %v3784
        %v3805 = vmul.f32 %v537, %v3788
        %v3806 = vpack.c.bf16 %v3791, %v3790
        %v3807 = vpack.c.bf16 %v3793, %v3792
        %v3808 = vpack.c.bf16 %v3795, %v3794
        %v3809 = vpack.c.bf16 %v3797, %v3796
        %v3810 = vpack.c.bf16 %v3799, %v3798
        %v3811 = vpack.c.bf16 %v3801, %v3800
        %v3812 = vpack.c.bf16 %v3803, %v3802
        %v3813 = vpack.c.bf16 %v3805, %v3804
        %3822 = vrot.lane.b32.xlu0 %v3806, 32
        %v3823 = vpop.permute.xlu0 %3822
        %3824 = vrot.lane.b32.xlu0 %v3807, 32
        %v3825 = vpop.permute.xlu0 %3824
        %3826 = vrot.lane.b32.xlu0 %v3808, 32
        %v3827 = vpop.permute.xlu0 %3826
        %3828 = vrot.lane.b32.xlu0 %v3809, 32
        %v3829 = vpop.permute.xlu0 %3828
        %3830 = vrot.lane.b32.xlu0 %v3810, 32
        %v3831 = vpop.permute.xlu0 %3830
        %3832 = vrot.lane.b32.xlu0 %v3811, 32
        %v3833 = vpop.permute.xlu0 %3832
        %3834 = vrot.lane.b32.xlu0 %v3812, 32
        %v3835 = vpop.permute.xlu0 %3834
        %3836 = vrot.lane.b32.xlu0 %v3813, 32
        %v3837 = vpop.permute.xlu0 %3836
        %3838 = vrot.lane.b32.xlu0 %v738, 32
        %v3839 = vpop.permute.xlu0 %3838
        %3840 = vrot.lane.b32.xlu0 %v739, 32
        %v3841 = vpop.permute.xlu0 %3840
        %3842 = vrot.lane.b32.xlu0 %v740, 32
        %v3843 = vpop.permute.xlu0 %3842
        %3844 = vrot.lane.b32.xlu0 %v741, 32
        %v3845 = vpop.permute.xlu0 %3844
        %3846 = vrot.lane.b32.xlu0 %v742, 32
        %v3847 = vpop.permute.xlu0 %3846
        %3848 = vrot.lane.b32.xlu0 %v743, 32
        %v3849 = vpop.permute.xlu0 %3848
        %3850 = vrot.lane.b32.xlu0 %v744, 32
        %v3851 = vpop.permute.xlu0 %3850
        %3852 = vrot.lane.b32.xlu0 %v745, 32
        %v3853 = vpop.permute.xlu0 %3852
        %v3855 = vsel %vm746, %v3823, 0
        %v3858 = vsel %vm746, %v3825, 0
        %v3861 = vsel %vm746, %v3827, 0
        %v3864 = vsel %vm746, %v3829, 0
        %v3867 = vsel %vm746, %v3831, 0
        %v3870 = vsel %vm746, %v3833, 0
        %v3873 = vsel %vm746, %v3835, 0
        %v3876 = vsel %vm746, %v3837, 0
        %v3879 = vsel %vm746, %v3839, 0
        %v3882 = vsel %vm746, %v3841, 0
        %v3885 = vsel %vm746, %v3843, 0
        %v3888 = vsel %vm746, %v3845, 0
        %v3891 = vsel %vm746, %v3847, 0
        %v3894 = vsel %vm746, %v3849, 0
        %v3897 = vsel %vm746, %v3851, 0
        %v3900 = vsel %vm746, %v3853, 0
        %3902 = vmatprep.subr.bf16.mxu0 0
        %3903 = vmatpush1.bf16.xpose.msra.mxu0 %v3900
        %3904 = vmatprep.subr.bf16.mxu0 0
        %3905 = vmatpush1.bf16.xpose.msra.mxu0 %v3897
        %3906 = vmatprep.subr.bf16.mxu0 0
        %3907 = vmatpush1.bf16.xpose.msra.mxu0 %v3894
        %3908 = vmatprep.subr.bf16.mxu0 0
        %3909 = vmatpush1.bf16.xpose.msra.mxu0 %v3891
        %3910 = vmatprep.subr.bf16.mxu0 0
        %3911 = vmatpush1.bf16.xpose.msra.mxu0 %v3888
        %3912 = vmatprep.subr.bf16.mxu0 0
        %3913 = vmatpush1.bf16.xpose.msra.mxu0 %v3885
        %3914 = vmatprep.subr.bf16.mxu0 0
        %3915 = vmatpush1.bf16.xpose.msra.mxu0 %v3882
        %3916 = vmatprep.subr.bf16.mxu0 0
        %3917 = vmatpush1.bf16.xpose.msra.mxu0 %v3879
        %3918 = vmatprep.subr.bf16.mxu0 0
        %3919 = vmatpush2.bf16.xpose.msra.mxu0 0
        %3920 = vmatprep.subr.bf16.mxu0 0
        %3921 = vmatpush2.bf16.xpose.msra.mxu0 0
        %3922 = vmatprep.subr.bf16.mxu0 0
        %3923 = vmatpush2.bf16.xpose.msra.mxu0 0
        %3924 = vmatprep.subr.bf16.mxu0 0
        %3925 = vmatpush2.bf16.xpose.msra.mxu0 0
        %3926 = vmatprep.subr.bf16.mxu0 0
        %3927 = vmatpush2.bf16.xpose.msra.mxu0 0
        %3928 = vmatprep.subr.bf16.mxu0 0
        %3929 = vmatpush2.bf16.xpose.msra.mxu0 0
        %3930 = vmatprep.subr.bf16.mxu0 0
        %3931 = vmatpush2.bf16.xpose.msra.mxu0 0
        %3932 = vmatprep.subr.bf16.mxu0 0
        %3933 = vmatpush2.bf16.xpose.msra.mxu0 0
        %3934 = vmatprep.mubr.bf16.mxu0 0
        %3935 = vmatmul.mubr.bf16.gmra.mxu0 %v3855
        %v3936 = vpop.f32.mrf.mxu0
        %v3937 = vadd.f32 %v602, %v3936
        %v3938 = vpop.f32.mrf.mxu0
        %v3939 = vpop.f32.mrf.mxu0
        %v3940 = vadd.f32 %v603, %v3939
        %v3941 = vpop.f32.mrf.mxu0
        %3942 = vmatprep.mubr.bf16.mxu0 0
        %3943 = vmatmul.mubr.bf16.gmra.mxu0 %v3858
        %v3944 = vpop.f32.mrf.mxu0
        %v3945 = vadd.f32 %v604, %v3944
        %v3946 = vpop.f32.mrf.mxu0
        %v3947 = vpop.f32.mrf.mxu0
        %v3948 = vadd.f32 %v605, %v3947
        %v3949 = vpop.f32.mrf.mxu0
        %3950 = vmatprep.mubr.bf16.mxu0 0
        %3951 = vmatmul.mubr.bf16.gmra.mxu0 %v3861
        %v3952 = vpop.f32.mrf.mxu0
        %v3953 = vadd.f32 %v606, %v3952
        %v3954 = vpop.f32.mrf.mxu0
        %v3955 = vpop.f32.mrf.mxu0
        %v3956 = vadd.f32 %v607, %v3955
        %v3957 = vpop.f32.mrf.mxu0
        %3958 = vmatprep.mubr.bf16.mxu0 0
        %3959 = vmatmul.mubr.bf16.gmra.mxu0 %v3864
        %v3960 = vpop.f32.mrf.mxu0
        %v3961 = vadd.f32 %v608, %v3960
        %v3962 = vpop.f32.mrf.mxu0
        %v3963 = vpop.f32.mrf.mxu0
        %v3964 = vadd.f32 %v609, %v3963
        %v3965 = vpop.f32.mrf.mxu0
        %3966 = vmatprep.mubr.bf16.mxu0 0
        %3967 = vmatmul.mubr.bf16.gmra.mxu0 %v3867
        %v3968 = vpop.f32.mrf.mxu0
        %v3969 = vadd.f32 %v610, %v3968
        %v3970 = vpop.f32.mrf.mxu0
        %v3971 = vpop.f32.mrf.mxu0
        %v3972 = vadd.f32 %v611, %v3971
        %v3973 = vpop.f32.mrf.mxu0
        %3974 = vmatprep.mubr.bf16.mxu0 0
        %3975 = vmatmul.mubr.bf16.gmra.mxu0 %v3870
        %v3976 = vpop.f32.mrf.mxu0
        %v3977 = vadd.f32 %v612, %v3976
        %v3978 = vpop.f32.mrf.mxu0
        %v3979 = vpop.f32.mrf.mxu0
        %v3980 = vadd.f32 %v613, %v3979
        %v3981 = vpop.f32.mrf.mxu0
        %3982 = vmatprep.mubr.bf16.mxu0 0
        %3983 = vmatmul.mubr.bf16.gmra.mxu0 %v3873
        %v3984 = vpop.f32.mrf.mxu0
        %v3985 = vadd.f32 %v614, %v3984
        %v3986 = vpop.f32.mrf.mxu0
        %v3987 = vpop.f32.mrf.mxu0
        %v3988 = vadd.f32 %v615, %v3987
        %v3989 = vpop.f32.mrf.mxu0
        %3990 = vmatprep.mubr.bf16.mxu0 0
        %3991 = vmatmul.mubr.bf16.gmra.mxu0 %v3876
        %v3992 = vpop.f32.mrf.mxu0
        %v3993 = vadd.f32 %v616, %v3992
        %v3994 = vpop.f32.mrf.mxu0
        %v3995 = vpop.f32.mrf.mxu0
        %v3996 = vadd.f32 %v617, %v3995
        %v3997 = vpop.f32.mrf.mxu0
        %3998 = vdwg.mxu0
        %v3999 = vld [vmem:[#allocation3] sm:$0xff]
        %v4000 = vld [vmem:[#allocation3 + $0x8] sm:$0xff]
        %v4001 = vld [vmem:[#allocation3 + $0x10] sm:$0xff]
        %v4002 = vld [vmem:[#allocation3 + $0x18] sm:$0xff]
        %v4003 = vld [vmem:[#allocation3 + $0x20] sm:$0xff]
        %v4004 = vld [vmem:[#allocation3 + $0x28] sm:$0xff]
        %v4005 = vld [vmem:[#allocation3 + $0x30] sm:$0xff]
        %v4006 = vld [vmem:[#allocation3 + $0x38] sm:$0xff]
        %v4007 = vld [vmem:[#allocation3 + $0x40] sm:$0xff]
        %v4008 = vld [vmem:[#allocation3 + $0x48] sm:$0xff]
        %v4009 = vld [vmem:[#allocation3 + $0x50] sm:$0xff]
        %v4010 = vld [vmem:[#allocation3 + $0x58] sm:$0xff]
        %v4011 = vld [vmem:[#allocation3 + $0x60] sm:$0xff]
        %v4012 = vld [vmem:[#allocation3 + $0x68] sm:$0xff]
        %v4013 = vld [vmem:[#allocation3 + $0x70] sm:$0xff]
        %v4014 = vld [vmem:[#allocation3 + $0x78] sm:$0xff]
        %v4015 = vld [vmem:[#allocation4] sm:$0xff]
        %v4016 = vld [vmem:[#allocation4 + $0x8] sm:$0xff]
        %v4017 = vld [vmem:[#allocation4 + $0x10] sm:$0xff]
        %v4018 = vld [vmem:[#allocation4 + $0x18] sm:$0xff]
        %v4019 = vld [vmem:[#allocation4 + $0x20] sm:$0xff]
        %v4020 = vld [vmem:[#allocation4 + $0x28] sm:$0xff]
        %v4021 = vld [vmem:[#allocation4 + $0x30] sm:$0xff]
        %v4022 = vld [vmem:[#allocation4 + $0x38] sm:$0xff]
        %v4023 = vld [vmem:[#allocation4 + $0x40] sm:$0xff]
        %v4024 = vld [vmem:[#allocation4 + $0x48] sm:$0xff]
        %v4025 = vld [vmem:[#allocation4 + $0x50] sm:$0xff]
        %v4026 = vld [vmem:[#allocation4 + $0x58] sm:$0xff]
        %v4027 = vld [vmem:[#allocation4 + $0x60] sm:$0xff]
        %v4028 = vld [vmem:[#allocation4 + $0x68] sm:$0xff]
        %v4029 = vld [vmem:[#allocation4 + $0x70] sm:$0xff]
        %v4030 = vld [vmem:[#allocation4 + $0x78] sm:$0xff]
        %4031 = vmax.xlane.f32.xlu0 %v3937
        %v4032 = vpop.xlane.xlu0 %4031
        %4033 = vmax.xlane.f32.xlu0 %v3940
        %v4034 = vpop.xlane.xlu0 %4033
        %4035 = vmax.xlane.f32.xlu0 %v3945
        %v4036 = vpop.xlane.xlu0 %4035
        %4037 = vmax.xlane.f32.xlu0 %v3948
        %v4038 = vpop.xlane.xlu0 %4037
        %4039 = vmax.xlane.f32.xlu0 %v3953
        %v4040 = vpop.xlane.xlu0 %4039
        %4041 = vmax.xlane.f32.xlu0 %v3956
        %v4042 = vpop.xlane.xlu0 %4041
        %4043 = vmax.xlane.f32.xlu0 %v3961
        %v4044 = vpop.xlane.xlu0 %4043
        %4045 = vmax.xlane.f32.xlu0 %v3964
        %v4046 = vpop.xlane.xlu0 %4045
        %4047 = vmax.xlane.f32.xlu0 %v3969
        %v4048 = vpop.xlane.xlu0 %4047
        %4049 = vmax.xlane.f32.xlu0 %v3972
        %v4050 = vpop.xlane.xlu0 %4049
        %4051 = vmax.xlane.f32.xlu0 %v3977
        %v4052 = vpop.xlane.xlu0 %4051
        %4053 = vmax.xlane.f32.xlu0 %v3980
        %v4054 = vpop.xlane.xlu0 %4053
        %4055 = vmax.xlane.f32.xlu0 %v3985
        %v4056 = vpop.xlane.xlu0 %4055
        %4057 = vmax.xlane.f32.xlu0 %v3988
        %v4058 = vpop.xlane.xlu0 %4057
        %4059 = vmax.xlane.f32.xlu0 %v3993
        %v4060 = vpop.xlane.xlu0 %4059
        %4061 = vmax.xlane.f32.xlu0 %v3996
        %v4062 = vpop.xlane.xlu0 %4061
        %v4063 = vmax.f32 %v3999, %v4032
        %v4064 = vmax.f32 %v4000, %v4034
        %v4065 = vmax.f32 %v4001, %v4036
        %v4066 = vmax.f32 %v4002, %v4038
        %v4067 = vmax.f32 %v4003, %v4040
        %v4068 = vmax.f32 %v4004, %v4042
        %v4069 = vmax.f32 %v4005, %v4044
        %v4070 = vmax.f32 %v4006, %v4046
        %v4071 = vmax.f32 %v4007, %v4048
        %v4072 = vmax.f32 %v4008, %v4050
        %v4073 = vmax.f32 %v4009, %v4052
        %v4074 = vmax.f32 %v4010, %v4054
        %v4075 = vmax.f32 %v4011, %v4056
        %v4076 = vmax.f32 %v4012, %v4058
        %v4077 = vmax.f32 %v4013, %v4060
        %v4078 = vmax.f32 %v4014, %v4062
        %v4079 = vsub.f32 %v3999, %v4063
        %v4080 = vsub.f32 %v4000, %v4064
        %v4081 = vsub.f32 %v4001, %v4065
        %v4082 = vsub.f32 %v4002, %v4066
        %v4083 = vsub.f32 %v4003, %v4067
        %v4084 = vsub.f32 %v4004, %v4068
        %v4085 = vsub.f32 %v4005, %v4069
        %v4086 = vsub.f32 %v4006, %v4070
        %v4087 = vsub.f32 %v4007, %v4071
        %v4088 = vsub.f32 %v4008, %v4072
        %v4089 = vsub.f32 %v4009, %v4073
        %v4090 = vsub.f32 %v4010, %v4074
        %v4091 = vsub.f32 %v4011, %v4075
        %v4092 = vsub.f32 %v4012, %v4076
        %v4093 = vsub.f32 %v4013, %v4077
        %v4094 = vsub.f32 %v4014, %v4078
        %v4095 = vmul.f32 %v4079, 1.442695
        %v4096 = vpow.pop %v4095
        %v4097 = vmul.f32 %v4080, 1.442695
        %v4098 = vpow.pop %v4097
        %v4099 = vmul.f32 %v4081, 1.442695
        %v4100 = vpow.pop %v4099
        %v4101 = vmul.f32 %v4082, 1.442695
        %v4102 = vpow.pop %v4101
        %v4103 = vmul.f32 %v4083, 1.442695
        %v4104 = vpow.pop %v4103
        %v4105 = vmul.f32 %v4084, 1.442695
        %v4106 = vpow.pop %v4105
        %v4107 = vmul.f32 %v4085, 1.442695
        %v4108 = vpow.pop %v4107
        %v4109 = vmul.f32 %v4086, 1.442695
        %v4110 = vpow.pop %v4109
        %v4111 = vmul.f32 %v4087, 1.442695
        %v4112 = vpow.pop %v4111
        %v4113 = vmul.f32 %v4088, 1.442695
        %v4114 = vpow.pop %v4113
        %v4115 = vmul.f32 %v4089, 1.442695
        %v4116 = vpow.pop %v4115
        %v4117 = vmul.f32 %v4090, 1.442695
        %v4118 = vpow.pop %v4117
        %v4119 = vmul.f32 %v4091, 1.442695
        %v4120 = vpow.pop %v4119
        %v4121 = vmul.f32 %v4092, 1.442695
        %v4122 = vpow.pop %v4121
        %v4123 = vmul.f32 %v4093, 1.442695
        %v4124 = vpow.pop %v4123
        %v4125 = vmul.f32 %v4094, 1.442695
        %v4126 = vpow.pop %v4125
        %4128 = vset.pattern.permute.xlu0 3
        %4129 = vperm.xlu0 %4128, %v4063
        %v4130 = vpop.permute.xlu0 %4129
        %4133 = vset.pattern.permute.xlu0 3
        %4134 = vperm.xlu0 %4133, %v4064
        %v4135 = vpop.permute.xlu0 %4134
        %4138 = vset.pattern.permute.xlu0 3
        %4139 = vperm.xlu0 %4138, %v4065
        %v4140 = vpop.permute.xlu0 %4139
        %4143 = vset.pattern.permute.xlu0 3
        %4144 = vperm.xlu0 %4143, %v4066
        %v4145 = vpop.permute.xlu0 %4144
        %4148 = vset.pattern.permute.xlu0 3
        %4149 = vperm.xlu0 %4148, %v4067
        %v4150 = vpop.permute.xlu0 %4149
        %4153 = vset.pattern.permute.xlu0 3
        %4154 = vperm.xlu0 %4153, %v4068
        %v4155 = vpop.permute.xlu0 %4154
        %4158 = vset.pattern.permute.xlu0 3
        %4159 = vperm.xlu0 %4158, %v4069
        %v4160 = vpop.permute.xlu0 %4159
        %4163 = vset.pattern.permute.xlu0 3
        %4164 = vperm.xlu0 %4163, %v4070
        %v4165 = vpop.permute.xlu0 %4164
        %4168 = vset.pattern.permute.xlu0 3
        %4169 = vperm.xlu0 %4168, %v4071
        %v4170 = vpop.permute.xlu0 %4169
        %4173 = vset.pattern.permute.xlu0 3
        %4174 = vperm.xlu0 %4173, %v4072
        %v4175 = vpop.permute.xlu0 %4174
        %4178 = vset.pattern.permute.xlu0 3
        %4179 = vperm.xlu0 %4178, %v4073
        %v4180 = vpop.permute.xlu0 %4179
        %4183 = vset.pattern.permute.xlu0 3
        %4184 = vperm.xlu0 %4183, %v4074
        %v4185 = vpop.permute.xlu0 %4184
        %4188 = vset.pattern.permute.xlu0 3
        %4189 = vperm.xlu0 %4188, %v4075
        %v4190 = vpop.permute.xlu0 %4189
        %4193 = vset.pattern.permute.xlu0 3
        %4194 = vperm.xlu0 %4193, %v4076
        %v4195 = vpop.permute.xlu0 %4194
        %4198 = vset.pattern.permute.xlu0 3
        %4199 = vperm.xlu0 %4198, %v4077
        %v4200 = vpop.permute.xlu0 %4199
        %4203 = vset.pattern.permute.xlu0 3
        %4204 = vperm.xlu0 %4203, %v4078
        %v4205 = vpop.permute.xlu0 %4204
        %v4207 = vsub.f32 %v3937, %v4130
        %v4208 = vsub.f32 %v3940, %v4135
        %v4209 = vsub.f32 %v3945, %v4140
        %v4210 = vsub.f32 %v3948, %v4145
        %v4211 = vsub.f32 %v3953, %v4150
        %v4212 = vsub.f32 %v3956, %v4155
        %v4213 = vsub.f32 %v3961, %v4160
        %v4214 = vsub.f32 %v3964, %v4165
        %v4215 = vsub.f32 %v3969, %v4170
        %v4216 = vsub.f32 %v3972, %v4175
        %v4217 = vsub.f32 %v3977, %v4180
        %v4218 = vsub.f32 %v3980, %v4185
        %v4219 = vsub.f32 %v3985, %v4190
        %v4220 = vsub.f32 %v3988, %v4195
        %v4221 = vsub.f32 %v3993, %v4200
        %v4222 = vsub.f32 %v3996, %v4205
        %v4223 = vmul.f32 %v4207, 1.442695
        %v4224 = vpow.pop %v4223
        %v4225 = vmul.f32 %v4208, 1.442695
        %v4226 = vpow.pop %v4225
        %v4227 = vmul.f32 %v4209, 1.442695
        %v4228 = vpow.pop %v4227
        %v4229 = vmul.f32 %v4210, 1.442695
        %v4230 = vpow.pop %v4229
        %v4231 = vmul.f32 %v4211, 1.442695
        %v4232 = vpow.pop %v4231
        %v4233 = vmul.f32 %v4212, 1.442695
        %v4234 = vpow.pop %v4233
        %v4235 = vmul.f32 %v4213, 1.442695
        %v4236 = vpow.pop %v4235
        %v4237 = vmul.f32 %v4214, 1.442695
        %v4238 = vpow.pop %v4237
        %v4239 = vmul.f32 %v4215, 1.442695
        %v4240 = vpow.pop %v4239
        %v4241 = vmul.f32 %v4216, 1.442695
        %v4242 = vpow.pop %v4241
        %v4243 = vmul.f32 %v4217, 1.442695
        %v4244 = vpow.pop %v4243
        %v4245 = vmul.f32 %v4218, 1.442695
        %v4246 = vpow.pop %v4245
        %v4247 = vmul.f32 %v4219, 1.442695
        %v4248 = vpow.pop %v4247
        %v4249 = vmul.f32 %v4220, 1.442695
        %v4250 = vpow.pop %v4249
        %v4251 = vmul.f32 %v4221, 1.442695
        %v4252 = vpow.pop %v4251
        %v4253 = vmul.f32 %v4222, 1.442695
        %v4254 = vpow.pop %v4253
        %v4255 = vmul.f32 %v4096, %v4015
        %v4256 = vmul.f32 %v4098, %v4016
        %v4257 = vmul.f32 %v4100, %v4017
        %v4258 = vmul.f32 %v4102, %v4018
        %v4259 = vmul.f32 %v4104, %v4019
        %v4260 = vmul.f32 %v4106, %v4020
        %v4261 = vmul.f32 %v4108, %v4021
        %v4262 = vmul.f32 %v4110, %v4022
        %v4263 = vmul.f32 %v4112, %v4023
        %v4264 = vmul.f32 %v4114, %v4024
        %v4265 = vmul.f32 %v4116, %v4025
        %v4266 = vmul.f32 %v4118, %v4026
        %v4267 = vmul.f32 %v4120, %v4027
        %v4268 = vmul.f32 %v4122, %v4028
        %v4269 = vmul.f32 %v4124, %v4029
        %v4270 = vmul.f32 %v4126, %v4030
        %4271 = vadd.xlane.f32.xlu0 %v4224
        %v4272 = vpop.xlane.xlu0 %4271
        %4273 = vadd.xlane.f32.xlu0 %v4226
        %v4274 = vpop.xlane.xlu0 %4273
        %4275 = vadd.xlane.f32.xlu0 %v4228
        %v4276 = vpop.xlane.xlu0 %4275
        %4277 = vadd.xlane.f32.xlu0 %v4230
        %v4278 = vpop.xlane.xlu0 %4277
        %4279 = vadd.xlane.f32.xlu0 %v4232
        %v4280 = vpop.xlane.xlu0 %4279
        %4281 = vadd.xlane.f32.xlu0 %v4234
        %v4282 = vpop.xlane.xlu0 %4281
        %4283 = vadd.xlane.f32.xlu0 %v4236
        %v4284 = vpop.xlane.xlu0 %4283
        %4285 = vadd.xlane.f32.xlu0 %v4238
        %v4286 = vpop.xlane.xlu0 %4285
        %4287 = vadd.xlane.f32.xlu0 %v4240
        %v4288 = vpop.xlane.xlu0 %4287
        %4289 = vadd.xlane.f32.xlu0 %v4242
        %v4290 = vpop.xlane.xlu0 %4289
        %4291 = vadd.xlane.f32.xlu0 %v4244
        %v4292 = vpop.xlane.xlu0 %4291
        %4293 = vadd.xlane.f32.xlu0 %v4246
        %v4294 = vpop.xlane.xlu0 %4293
        %4295 = vadd.xlane.f32.xlu0 %v4248
        %v4296 = vpop.xlane.xlu0 %4295
        %4297 = vadd.xlane.f32.xlu0 %v4250
        %v4298 = vpop.xlane.xlu0 %4297
        %4299 = vadd.xlane.f32.xlu0 %v4252
        %v4300 = vpop.xlane.xlu0 %4299
        %4301 = vadd.xlane.f32.xlu0 %v4254
        %v4302 = vpop.xlane.xlu0 %4301
        %v4303 = vadd.f32 %v4255, %v4272
        %v4304 = vadd.f32 %v4256, %v4274
        %v4305 = vadd.f32 %v4257, %v4276
        %v4306 = vadd.f32 %v4258, %v4278
        %v4307 = vadd.f32 %v4259, %v4280
        %v4308 = vadd.f32 %v4260, %v4282
        %v4309 = vadd.f32 %v4261, %v4284
        %v4310 = vadd.f32 %v4262, %v4286
        %v4311 = vadd.f32 %v4263, %v4288
        %v4312 = vadd.f32 %v4264, %v4290
        %v4313 = vadd.f32 %v4265, %v4292
        %v4314 = vadd.f32 %v4266, %v4294
        %v4315 = vadd.f32 %v4267, %v4296
        %v4316 = vadd.f32 %v4268, %v4298
        %v4317 = vadd.f32 %v4269, %v4300
        %v4318 = vadd.f32 %v4270, %v4302
        %vm4319 = vcmask 31768
        %4320 = vst.msk [vmem:[#allocation4] sm:$0xff] %vm4319, %v4303
        %4321 = vst.msk [vmem:[#allocation4 + $0x8] sm:$0xff] %vm4319, %v4304
        %4322 = vst.msk [vmem:[#allocation4 + $0x10] sm:$0xff] %vm4319, %v4305
        %4323 = vst.msk [vmem:[#allocation4 + $0x18] sm:$0xff] %vm4319, %v4306
        %4324 = vst.msk [vmem:[#allocation4 + $0x20] sm:$0xff] %vm4319, %v4307
        %4325 = vst.msk [vmem:[#allocation4 + $0x28] sm:$0xff] %vm4319, %v4308
        %4326 = vst.msk [vmem:[#allocation4 + $0x30] sm:$0xff] %vm4319, %v4309
        %4327 = vst.msk [vmem:[#allocation4 + $0x38] sm:$0xff] %vm4319, %v4310
        %4328 = vst.msk [vmem:[#allocation4 + $0x40] sm:$0xff] %vm4319, %v4311
        %4329 = vst.msk [vmem:[#allocation4 + $0x48] sm:$0xff] %vm4319, %v4312
        %4330 = vst.msk [vmem:[#allocation4 + $0x50] sm:$0xff] %vm4319, %v4313
        %4331 = vst.msk [vmem:[#allocation4 + $0x58] sm:$0xff] %vm4319, %v4314
        %4332 = vst.msk [vmem:[#allocation4 + $0x60] sm:$0xff] %vm4319, %v4315
        %4333 = vst.msk [vmem:[#allocation4 + $0x68] sm:$0xff] %vm4319, %v4316
        %4334 = vst.msk [vmem:[#allocation4 + $0x70] sm:$0xff] %vm4319, %v4317
        %4335 = vst.msk [vmem:[#allocation4 + $0x78] sm:$0xff] %vm4319, %v4318
        %4336 = vst.msk [vmem:[#allocation3] sm:$0xff] %vm4319, %v4063
        %4337 = vst.msk [vmem:[#allocation3 + $0x8] sm:$0xff] %vm4319, %v4064
        %4338 = vst.msk [vmem:[#allocation3 + $0x10] sm:$0xff] %vm4319, %v4065
        %4339 = vst.msk [vmem:[#allocation3 + $0x18] sm:$0xff] %vm4319, %v4066
        %4340 = vst.msk [vmem:[#allocation3 + $0x20] sm:$0xff] %vm4319, %v4067
        %4341 = vst.msk [vmem:[#allocation3 + $0x28] sm:$0xff] %vm4319, %v4068
        %4342 = vst.msk [vmem:[#allocation3 + $0x30] sm:$0xff] %vm4319, %v4069
        %4343 = vst.msk [vmem:[#allocation3 + $0x38] sm:$0xff] %vm4319, %v4070
        %4344 = vst.msk [vmem:[#allocation3 + $0x40] sm:$0xff] %vm4319, %v4071
        %4345 = vst.msk [vmem:[#allocation3 + $0x48] sm:$0xff] %vm4319, %v4072
        %4346 = vst.msk [vmem:[#allocation3 + $0x50] sm:$0xff] %vm4319, %v4073
        %4347 = vst.msk [vmem:[#allocation3 + $0x58] sm:$0xff] %vm4319, %v4074
        %4348 = vst.msk [vmem:[#allocation3 + $0x60] sm:$0xff] %vm4319, %v4075
        %4349 = vst.msk [vmem:[#allocation3 + $0x68] sm:$0xff] %vm4319, %v4076
        %4350 = vst.msk [vmem:[#allocation3 + $0x70] sm:$0xff] %vm4319, %v4077
        %4351 = vst.msk [vmem:[#allocation3 + $0x78] sm:$0xff] %vm4319, %v4078
        %4352 = vset.pattern.permute.xlu0 3
        %4353 = vperm.xlu0 %4352, %v586
        %v4354 = vpop.permute.xlu0 %4353
        %4356 = vset.pattern.permute.xlu0 3
        %4357 = vperm.xlu0 %4356, %v587
        %v4358 = vpop.permute.xlu0 %4357
        %4360 = vset.pattern.permute.xlu0 3
        %4361 = vperm.xlu0 %4360, %v588
        %v4362 = vpop.permute.xlu0 %4361
        %4364 = vset.pattern.permute.xlu0 3
        %4365 = vperm.xlu0 %4364, %v589
        %v4366 = vpop.permute.xlu0 %4365
        %4368 = vset.pattern.permute.xlu0 3
        %4369 = vperm.xlu0 %4368, %v590
        %v4370 = vpop.permute.xlu0 %4369
        %4372 = vset.pattern.permute.xlu0 3
        %4373 = vperm.xlu0 %4372, %v591
        %v4374 = vpop.permute.xlu0 %4373
        %4376 = vset.pattern.permute.xlu0 3
        %4377 = vperm.xlu0 %4376, %v592
        %v4378 = vpop.permute.xlu0 %4377
        %4380 = vset.pattern.permute.xlu0 3
        %4381 = vperm.xlu0 %4380, %v593
        %v4382 = vpop.permute.xlu0 %4381
        %4384 = vset.pattern.permute.xlu0 3
        %4385 = vperm.xlu0 %4384, %v594
        %v4386 = vpop.permute.xlu0 %4385
        %4388 = vset.pattern.permute.xlu0 3
        %4389 = vperm.xlu0 %4388, %v595
        %v4390 = vpop.permute.xlu0 %4389
        %4392 = vset.pattern.permute.xlu0 3
        %4393 = vperm.xlu0 %4392, %v596
        %v4394 = vpop.permute.xlu0 %4393
        %4396 = vset.pattern.permute.xlu0 3
        %4397 = vperm.xlu0 %4396, %v597
        %v4398 = vpop.permute.xlu0 %4397
        %4400 = vset.pattern.permute.xlu0 3
        %4401 = vperm.xlu0 %4400, %v598
        %v4402 = vpop.permute.xlu0 %4401
        %4404 = vset.pattern.permute.xlu0 3
        %4405 = vperm.xlu0 %4404, %v599
        %v4406 = vpop.permute.xlu0 %4405
        %4408 = vset.pattern.permute.xlu0 3
        %4409 = vperm.xlu0 %4408, %v600
        %v4410 = vpop.permute.xlu0 %4409
        %4412 = vset.pattern.permute.xlu0 3
        %4413 = vperm.xlu0 %4412, %v601
        %v4414 = vpop.permute.xlu0 %4413
        %v4416 = vmul.f32 %v554, %v4354
        %v4417 = vmul.f32 %v555, %v4358
        %v4418 = vmul.f32 %v556, %v4362
        %v4419 = vmul.f32 %v557, %v4366
        %v4420 = vmul.f32 %v558, %v4370
        %v4421 = vmul.f32 %v559, %v4374
        %v4422 = vmul.f32 %v560, %v4378
        %v4423 = vmul.f32 %v561, %v4382
        %v4424 = vmul.f32 %v562, %v4386
        %v4425 = vmul.f32 %v563, %v4390
        %v4426 = vmul.f32 %v564, %v4394
        %v4427 = vmul.f32 %v565, %v4398
        %v4428 = vmul.f32 %v566, %v4402
        %v4429 = vmul.f32 %v567, %v4406
        %v4430 = vmul.f32 %v568, %v4410
        %v4431 = vmul.f32 %v569, %v4414
        %v4432 = vpack.c.bf16 %v4417, %v4416
        %v4433 = vpack.c.bf16 %v4419, %v4418
        %v4434 = vpack.c.bf16 %v4421, %v4420
        %v4435 = vpack.c.bf16 %v4423, %v4422
        %v4436 = vpack.c.bf16 %v4425, %v4424
        %v4437 = vpack.c.bf16 %v4427, %v4426
        %v4438 = vpack.c.bf16 %v4429, %v4428
        %v4439 = vpack.c.bf16 %v4431, %v4430
        %v4440 = vpack.c.bf16 %v4226, %v4224
        %v4441 = vpack.c.bf16 %v4230, %v4228
        %v4442 = vpack.c.bf16 %v4234, %v4232
        %v4443 = vpack.c.bf16 %v4238, %v4236
        %v4444 = vpack.c.bf16 %v4242, %v4240
        %v4445 = vpack.c.bf16 %v4246, %v4244
        %v4446 = vpack.c.bf16 %v4250, %v4248
        %v4447 = vpack.c.bf16 %v4254, %v4252
        %4456 = vrot.lane.b32.xlu0 %v4432, 32
        %v4457 = vpop.permute.xlu0 %4456
        %4458 = vrot.lane.b32.xlu0 %v4433, 32
        %v4459 = vpop.permute.xlu0 %4458
        %4460 = vrot.lane.b32.xlu0 %v4434, 32
        %v4461 = vpop.permute.xlu0 %4460
        %4462 = vrot.lane.b32.xlu0 %v4435, 32
        %v4463 = vpop.permute.xlu0 %4462
        %4464 = vrot.lane.b32.xlu0 %v4436, 32
        %v4465 = vpop.permute.xlu0 %4464
        %4466 = vrot.lane.b32.xlu0 %v4437, 32
        %v4467 = vpop.permute.xlu0 %4466
        %4468 = vrot.lane.b32.xlu0 %v4438, 32
        %v4469 = vpop.permute.xlu0 %4468
        %4470 = vrot.lane.b32.xlu0 %v4439, 32
        %v4471 = vpop.permute.xlu0 %4470
        %4480 = vmatprep.subr.bf16.mxu0 0
        %4481 = vmatpush1.bf16.msra.mxu0 %v4471
        %4482 = vmatprep.subr.bf16.mxu0 0
        %4483 = vmatpush1.bf16.msra.mxu0 %v4469
        %4484 = vmatprep.subr.bf16.mxu0 0
        %4485 = vmatpush1.bf16.msra.mxu0 %v4467
        %4486 = vmatprep.subr.bf16.mxu0 0
        %4487 = vmatpush1.bf16.msra.mxu0 %v4465
        %4488 = vmatprep.subr.bf16.mxu0 0
        %4489 = vmatpush1.bf16.msra.mxu0 %v4463
        %4490 = vmatprep.subr.bf16.mxu0 0
        %4491 = vmatpush1.bf16.msra.mxu0 %v4461
        %4492 = vmatprep.subr.bf16.mxu0 0
        %4493 = vmatpush1.bf16.msra.mxu0 %v4459
        %4494 = vmatprep.subr.bf16.mxu0 0
        %4495 = vmatpush1.bf16.msra.mxu0 %v4457
        %4496 = vmatprep.subr.bf16.mxu0 0
        %4497 = vmatpush2.bf16.msra.mxu0 0
        %4498 = vmatprep.subr.bf16.mxu0 0
        %4499 = vmatpush2.bf16.msra.mxu0 0
        %4500 = vmatprep.subr.bf16.mxu0 0
        %4501 = vmatpush2.bf16.msra.mxu0 0
        %4502 = vmatprep.subr.bf16.mxu0 0
        %4503 = vmatpush2.bf16.msra.mxu0 0
        %4504 = vmatprep.subr.bf16.mxu0 0
        %4505 = vmatpush2.bf16.msra.mxu0 0
        %4506 = vmatprep.subr.bf16.mxu0 0
        %4507 = vmatpush2.bf16.msra.mxu0 0
        %4508 = vmatprep.subr.bf16.mxu0 0
        %4509 = vmatpush2.bf16.msra.mxu0 0
        %4510 = vmatprep.subr.bf16.mxu0 0
        %4511 = vmatpush2.bf16.msra.mxu0 0
        %4512 = vmatprep.mubr.bf16.mxu0 0
        %4513 = vmatmul.mubr.bf16.gmra.mxu0 %v4440
        %v4514 = vpop.f32.mrf.mxu0
        %v4515 = vadd.f32 0.0, %v4514
        %v4516 = vpop.f32.mrf.mxu0
        %v4517 = vpop.f32.mrf.mxu0
        %v4518 = vadd.f32 0.0, %v4517
        %v4519 = vpop.f32.mrf.mxu0
        %4520 = vmatprep.mubr.bf16.mxu0 0
        %4521 = vmatmul.mubr.bf16.gmra.mxu0 %v4441
        %v4522 = vpop.f32.mrf.mxu0
        %v4523 = vadd.f32 0.0, %v4522
        %v4524 = vpop.f32.mrf.mxu0
        %v4525 = vpop.f32.mrf.mxu0
        %v4526 = vadd.f32 0.0, %v4525
        %v4527 = vpop.f32.mrf.mxu0
        %4528 = vmatprep.mubr.bf16.mxu0 0
        %4529 = vmatmul.mubr.bf16.gmra.mxu0 %v4442
        %v4530 = vpop.f32.mrf.mxu0
        %v4531 = vadd.f32 0.0, %v4530
        %v4532 = vpop.f32.mrf.mxu0
        %v4533 = vpop.f32.mrf.mxu0
        %v4534 = vadd.f32 0.0, %v4533
        %v4535 = vpop.f32.mrf.mxu0
        %4536 = vmatprep.mubr.bf16.mxu0 0
        %4537 = vmatmul.mubr.bf16.gmra.mxu0 %v4443
        %v4538 = vpop.f32.mrf.mxu0
        %v4539 = vadd.f32 0.0, %v4538
        %v4540 = vpop.f32.mrf.mxu0
        %v4541 = vpop.f32.mrf.mxu0
        %v4542 = vadd.f32 0.0, %v4541
        %v4543 = vpop.f32.mrf.mxu0
        %4544 = vmatprep.mubr.bf16.mxu0 0
        %4545 = vmatmul.mubr.bf16.gmra.mxu0 %v4444
        %v4546 = vpop.f32.mrf.mxu0
        %v4547 = vadd.f32 0.0, %v4546
        %v4548 = vpop.f32.mrf.mxu0
        %v4549 = vpop.f32.mrf.mxu0
        %v4550 = vadd.f32 0.0, %v4549
        %v4551 = vpop.f32.mrf.mxu0
        %4552 = vmatprep.mubr.bf16.mxu0 0
        %4553 = vmatmul.mubr.bf16.gmra.mxu0 %v4445
        %v4554 = vpop.f32.mrf.mxu0
        %v4555 = vadd.f32 0.0, %v4554
        %v4556 = vpop.f32.mrf.mxu0
        %v4557 = vpop.f32.mrf.mxu0
        %v4558 = vadd.f32 0.0, %v4557
        %v4559 = vpop.f32.mrf.mxu0
        %4560 = vmatprep.mubr.bf16.mxu0 0
        %4561 = vmatmul.mubr.bf16.gmra.mxu0 %v4446
        %v4562 = vpop.f32.mrf.mxu0
        %v4563 = vadd.f32 0.0, %v4562
        %v4564 = vpop.f32.mrf.mxu0
        %v4565 = vpop.f32.mrf.mxu0
        %v4566 = vadd.f32 0.0, %v4565
        %v4567 = vpop.f32.mrf.mxu0
        %4568 = vmatprep.mubr.bf16.mxu0 0
        %4569 = vmatmul.mubr.bf16.gmra.mxu0 %v4447
        %v4570 = vpop.f32.mrf.mxu0
        %v4571 = vadd.f32 0.0, %v4570
        %v4572 = vpop.f32.mrf.mxu0
        %v4573 = vpop.f32.mrf.mxu0
        %v4574 = vadd.f32 0.0, %v4573
        %v4575 = vpop.f32.mrf.mxu0
        %4576 = vdwg.mxu0
        %v4577 = vld [vmem:[#allocation2] sm:$0xff]
        %v4578 = vld [vmem:[#allocation2 + $0x8] sm:$0xff]
        %v4579 = vld [vmem:[#allocation2 + $0x10] sm:$0xff]
        %v4580 = vld [vmem:[#allocation2 + $0x18] sm:$0xff]
        %v4581 = vld [vmem:[#allocation2 + $0x20] sm:$0xff]
        %v4582 = vld [vmem:[#allocation2 + $0x28] sm:$0xff]
        %v4583 = vld [vmem:[#allocation2 + $0x30] sm:$0xff]
        %v4584 = vld [vmem:[#allocation2 + $0x38] sm:$0xff]
        %v4585 = vld [vmem:[#allocation2 + $0x40] sm:$0xff]
        %v4586 = vld [vmem:[#allocation2 + $0x48] sm:$0xff]
        %v4587 = vld [vmem:[#allocation2 + $0x50] sm:$0xff]
        %v4588 = vld [vmem:[#allocation2 + $0x58] sm:$0xff]
        %v4589 = vld [vmem:[#allocation2 + $0x60] sm:$0xff]
        %v4590 = vld [vmem:[#allocation2 + $0x68] sm:$0xff]
        %v4591 = vld [vmem:[#allocation2 + $0x70] sm:$0xff]
        %v4592 = vld [vmem:[#allocation2 + $0x78] sm:$0xff]
        %4594 = vset.pattern.permute.xlu0 3
        %4595 = vperm.xlu0 %4594, %v4096
        %v4596 = vpop.permute.xlu0 %4595
        %4599 = vset.pattern.permute.xlu0 3
        %4600 = vperm.xlu0 %4599, %v4098
        %v4601 = vpop.permute.xlu0 %4600
        %4604 = vset.pattern.permute.xlu0 3
        %4605 = vperm.xlu0 %4604, %v4100
        %v4606 = vpop.permute.xlu0 %4605
        %4609 = vset.pattern.permute.xlu0 3
        %4610 = vperm.xlu0 %4609, %v4102
        %v4611 = vpop.permute.xlu0 %4610
        %4614 = vset.pattern.permute.xlu0 3
        %4615 = vperm.xlu0 %4614, %v4104
        %v4616 = vpop.permute.xlu0 %4615
        %4619 = vset.pattern.permute.xlu0 3
        %4620 = vperm.xlu0 %4619, %v4106
        %v4621 = vpop.permute.xlu0 %4620
        %4624 = vset.pattern.permute.xlu0 3
        %4625 = vperm.xlu0 %4624, %v4108
        %v4626 = vpop.permute.xlu0 %4625
        %4629 = vset.pattern.permute.xlu0 3
        %4630 = vperm.xlu0 %4629, %v4110
        %v4631 = vpop.permute.xlu0 %4630
        %4634 = vset.pattern.permute.xlu0 3
        %4635 = vperm.xlu0 %4634, %v4112
        %v4636 = vpop.permute.xlu0 %4635
        %4639 = vset.pattern.permute.xlu0 3
        %4640 = vperm.xlu0 %4639, %v4114
        %v4641 = vpop.permute.xlu0 %4640
        %4644 = vset.pattern.permute.xlu0 3
        %4645 = vperm.xlu0 %4644, %v4116
        %v4646 = vpop.permute.xlu0 %4645
        %4649 = vset.pattern.permute.xlu0 3
        %4650 = vperm.xlu0 %4649, %v4118
        %v4651 = vpop.permute.xlu0 %4650
        %4654 = vset.pattern.permute.xlu0 3
        %4655 = vperm.xlu0 %4654, %v4120
        %v4656 = vpop.permute.xlu0 %4655
        %4659 = vset.pattern.permute.xlu0 3
        %4660 = vperm.xlu0 %4659, %v4122
        %v4661 = vpop.permute.xlu0 %4660
        %4664 = vset.pattern.permute.xlu0 3
        %4665 = vperm.xlu0 %4664, %v4124
        %v4666 = vpop.permute.xlu0 %4665
        %4669 = vset.pattern.permute.xlu0 3
        %4670 = vperm.xlu0 %4669, %v4126
        %v4671 = vpop.permute.xlu0 %4670
        %v4673 = vmul.f32 %v4596, %v4577
        %v4674 = vmul.f32 %v4601, %v4578
        %v4675 = vmul.f32 %v4606, %v4579
        %v4676 = vmul.f32 %v4611, %v4580
        %v4677 = vmul.f32 %v4616, %v4581
        %v4678 = vmul.f32 %v4621, %v4582
        %v4679 = vmul.f32 %v4626, %v4583
        %v4680 = vmul.f32 %v4631, %v4584
        %v4681 = vmul.f32 %v4636, %v4585
        %v4682 = vmul.f32 %v4641, %v4586
        %v4683 = vmul.f32 %v4646, %v4587
        %v4684 = vmul.f32 %v4651, %v4588
        %v4685 = vmul.f32 %v4656, %v4589
        %v4686 = vmul.f32 %v4661, %v4590
        %v4687 = vmul.f32 %v4666, %v4591
        %v4688 = vmul.f32 %v4671, %v4592
        %4705 = vrot.lane.b32.xlu0 %v4515, 96
        %v4706 = vpop.permute.xlu0 %4705
        %4707 = vrot.lane.b32.xlu0 %v4518, 96
        %v4708 = vpop.permute.xlu0 %4707
        %4709 = vrot.lane.b32.xlu0 %v4523, 96
        %v4710 = vpop.permute.xlu0 %4709
        %4711 = vrot.lane.b32.xlu0 %v4526, 96
        %v4712 = vpop.permute.xlu0 %4711
        %4713 = vrot.lane.b32.xlu0 %v4531, 96
        %v4714 = vpop.permute.xlu0 %4713
        %4715 = vrot.lane.b32.xlu0 %v4534, 96
        %v4716 = vpop.permute.xlu0 %4715
        %4717 = vrot.lane.b32.xlu0 %v4539, 96
        %v4718 = vpop.permute.xlu0 %4717
        %4719 = vrot.lane.b32.xlu0 %v4542, 96
        %v4720 = vpop.permute.xlu0 %4719
        %4721 = vrot.lane.b32.xlu0 %v4547, 96
        %v4722 = vpop.permute.xlu0 %4721
        %4723 = vrot.lane.b32.xlu0 %v4550, 96
        %v4724 = vpop.permute.xlu0 %4723
        %4725 = vrot.lane.b32.xlu0 %v4555, 96
        %v4726 = vpop.permute.xlu0 %4725
        %4727 = vrot.lane.b32.xlu0 %v4558, 96
        %v4728 = vpop.permute.xlu0 %4727
        %4729 = vrot.lane.b32.xlu0 %v4563, 96
        %v4730 = vpop.permute.xlu0 %4729
        %4731 = vrot.lane.b32.xlu0 %v4566, 96
        %v4732 = vpop.permute.xlu0 %4731
        %4733 = vrot.lane.b32.xlu0 %v4571, 96
        %v4734 = vpop.permute.xlu0 %4733
        %4735 = vrot.lane.b32.xlu0 %v4574, 96
        %v4736 = vpop.permute.xlu0 %4735
        %v4753 = vadd.f32 %v4673, %v4706
        %v4754 = vadd.f32 %v4674, %v4708
        %v4755 = vadd.f32 %v4675, %v4710
        %v4756 = vadd.f32 %v4676, %v4712
        %v4757 = vadd.f32 %v4677, %v4714
        %v4758 = vadd.f32 %v4678, %v4716
        %v4759 = vadd.f32 %v4679, %v4718
        %v4760 = vadd.f32 %v4680, %v4720
        %v4761 = vadd.f32 %v4681, %v4722
        %v4762 = vadd.f32 %v4682, %v4724
        %v4763 = vadd.f32 %v4683, %v4726
        %v4764 = vadd.f32 %v4684, %v4728
        %v4765 = vadd.f32 %v4685, %v4730
        %v4766 = vadd.f32 %v4686, %v4732
        %v4767 = vadd.f32 %v4687, %v4734
        %v4768 = vadd.f32 %v4688, %v4736
        %vm4769 = vcmask 1048320
        %4770 = vst.msk [vmem:[#allocation2] sm:$0xff] %vm4769, %v4753
        %4771 = vst.msk [vmem:[#allocation2 + $0x8] sm:$0xff] %vm4769, %v4754
        %4772 = vst.msk [vmem:[#allocation2 + $0x10] sm:$0xff] %vm4769, %v4755
        %4773 = vst.msk [vmem:[#allocation2 + $0x18] sm:$0xff] %vm4769, %v4756
        %4774 = vst.msk [vmem:[#allocation2 + $0x20] sm:$0xff] %vm4769, %v4757
        %4775 = vst.msk [vmem:[#allocation2 + $0x28] sm:$0xff] %vm4769, %v4758
        %4776 = vst.msk [vmem:[#allocation2 + $0x30] sm:$0xff] %vm4769, %v4759
        %4777 = vst.msk [vmem:[#allocation2 + $0x38] sm:$0xff] %vm4769, %v4760
        %4778 = vst.msk [vmem:[#allocation2 + $0x40] sm:$0xff] %vm4769, %v4761
        %4779 = vst.msk [vmem:[#allocation2 + $0x48] sm:$0xff] %vm4769, %v4762
        %4780 = vst.msk [vmem:[#allocation2 + $0x50] sm:$0xff] %vm4769, %v4763
        %4781 = vst.msk [vmem:[#allocation2 + $0x58] sm:$0xff] %vm4769, %v4764
        %4782 = vst.msk [vmem:[#allocation2 + $0x60] sm:$0xff] %vm4769, %v4765
        %4783 = vst.msk [vmem:[#allocation2 + $0x68] sm:$0xff] %vm4769, %v4766
        %4784 = vst.msk [vmem:[#allocation2 + $0x70] sm:$0xff] %vm4769, %v4767
        %4785 = vst.msk [vmem:[#allocation2 + $0x78] sm:$0xff] %vm4769, %v4768
        // Predicated region
        $region57: #{tpu_custom_call.1} parent=43 // pred_check
          %p4786 = pneg %p469
        $region58: #{tpu_custom_call.1} parent=43 // pred_check_branch
          %4788 = sbr.rel (%p4786) target = $region60
        $region59: #{tpu_custom_call.1} parent=43 // pred_region
          %v4789 = vld [vmem:[#allocation4] sm:$0xff]
          %v4790 = vld [vmem:[#allocation4 + $0x8] sm:$0xff]
          %v4791 = vld [vmem:[#allocation4 + $0x10] sm:$0xff]
          %v4792 = vld [vmem:[#allocation4 + $0x18] sm:$0xff]
          %v4793 = vld [vmem:[#allocation4 + $0x20] sm:$0xff]
          %v4794 = vld [vmem:[#allocation4 + $0x28] sm:$0xff]
          %v4795 = vld [vmem:[#allocation4 + $0x30] sm:$0xff]
          %v4796 = vld [vmem:[#allocation4 + $0x38] sm:$0xff]
          %v4797 = vld [vmem:[#allocation4 + $0x40] sm:$0xff]
          %v4798 = vld [vmem:[#allocation4 + $0x48] sm:$0xff]
          %v4799 = vld [vmem:[#allocation4 + $0x50] sm:$0xff]
          %v4800 = vld [vmem:[#allocation4 + $0x58] sm:$0xff]
          %v4801 = vld [vmem:[#allocation4 + $0x60] sm:$0xff]
          %v4802 = vld [vmem:[#allocation4 + $0x68] sm:$0xff]
          %v4803 = vld [vmem:[#allocation4 + $0x70] sm:$0xff]
          %v4804 = vld [vmem:[#allocation4 + $0x78] sm:$0xff]
          %v4805 = vrcp.pop %v4789
          %v4806 = vrcp.pop %v4790
          %v4807 = vrcp.pop %v4791
          %v4808 = vrcp.pop %v4792
          %v4809 = vrcp.pop %v4793
          %v4810 = vrcp.pop %v4794
          %v4811 = vrcp.pop %v4795
          %v4812 = vrcp.pop %v4796
          %v4813 = vrcp.pop %v4797
          %v4814 = vrcp.pop %v4798
          %v4815 = vrcp.pop %v4799
          %v4816 = vrcp.pop %v4800
          %v4817 = vrcp.pop %v4801
          %v4818 = vrcp.pop %v4802
          %v4819 = vrcp.pop %v4803
          %v4820 = vrcp.pop %v4804
          %v4821 = vld [vmem:[#allocation2] sm:$0xff]
          %v4822 = vld [vmem:[#allocation2 + $0x8] sm:$0xff]
          %v4823 = vld [vmem:[#allocation2 + $0x10] sm:$0xff]
          %v4824 = vld [vmem:[#allocation2 + $0x18] sm:$0xff]
          %v4825 = vld [vmem:[#allocation2 + $0x20] sm:$0xff]
          %v4826 = vld [vmem:[#allocation2 + $0x28] sm:$0xff]
          %v4827 = vld [vmem:[#allocation2 + $0x30] sm:$0xff]
          %v4828 = vld [vmem:[#allocation2 + $0x38] sm:$0xff]
          %v4829 = vld [vmem:[#allocation2 + $0x40] sm:$0xff]
          %v4830 = vld [vmem:[#allocation2 + $0x48] sm:$0xff]
          %v4831 = vld [vmem:[#allocation2 + $0x50] sm:$0xff]
          %v4832 = vld [vmem:[#allocation2 + $0x58] sm:$0xff]
          %v4833 = vld [vmem:[#allocation2 + $0x60] sm:$0xff]
          %v4834 = vld [vmem:[#allocation2 + $0x68] sm:$0xff]
          %v4835 = vld [vmem:[#allocation2 + $0x70] sm:$0xff]
          %v4836 = vld [vmem:[#allocation2 + $0x78] sm:$0xff]
          %4838 = vset.pattern.permute.xlu0 0
          %4839 = vperm.xlu0 %4838, %v4805
          %v4840 = vpop.permute.xlu0 %4839
          %4843 = vset.pattern.permute.xlu0 0
          %4844 = vperm.xlu0 %4843, %v4806
          %v4845 = vpop.permute.xlu0 %4844
          %4848 = vset.pattern.permute.xlu0 0
          %4849 = vperm.xlu0 %4848, %v4807
          %v4850 = vpop.permute.xlu0 %4849
          %4853 = vset.pattern.permute.xlu0 0
          %4854 = vperm.xlu0 %4853, %v4808
          %v4855 = vpop.permute.xlu0 %4854
          %4858 = vset.pattern.permute.xlu0 0
          %4859 = vperm.xlu0 %4858, %v4809
          %v4860 = vpop.permute.xlu0 %4859
          %4863 = vset.pattern.permute.xlu0 0
          %4864 = vperm.xlu0 %4863, %v4810
          %v4865 = vpop.permute.xlu0 %4864
          %4868 = vset.pattern.permute.xlu0 0
          %4869 = vperm.xlu0 %4868, %v4811
          %v4870 = vpop.permute.xlu0 %4869
          %4873 = vset.pattern.permute.xlu0 0
          %4874 = vperm.xlu0 %4873, %v4812
          %v4875 = vpop.permute.xlu0 %4874
          %4878 = vset.pattern.permute.xlu0 0
          %4879 = vperm.xlu0 %4878, %v4813
          %v4880 = vpop.permute.xlu0 %4879
          %4883 = vset.pattern.permute.xlu0 0
          %4884 = vperm.xlu0 %4883, %v4814
          %v4885 = vpop.permute.xlu0 %4884
          %4888 = vset.pattern.permute.xlu0 0
          %4889 = vperm.xlu0 %4888, %v4815
          %v4890 = vpop.permute.xlu0 %4889
          %4893 = vset.pattern.permute.xlu0 0
          %4894 = vperm.xlu0 %4893, %v4816
          %v4895 = vpop.permute.xlu0 %4894
          %4898 = vset.pattern.permute.xlu0 0
          %4899 = vperm.xlu0 %4898, %v4817
          %v4900 = vpop.permute.xlu0 %4899
          %4903 = vset.pattern.permute.xlu0 0
          %4904 = vperm.xlu0 %4903, %v4818
          %v4905 = vpop.permute.xlu0 %4904
          %4908 = vset.pattern.permute.xlu0 0
          %4909 = vperm.xlu0 %4908, %v4819
          %v4910 = vpop.permute.xlu0 %4909
          %4913 = vset.pattern.permute.xlu0 0
          %4914 = vperm.xlu0 %4913, %v4820
          %v4915 = vpop.permute.xlu0 %4914
          %v4917 = vmul.f32 %v4821, %v4840
          %v4918 = vmul.f32 %v4822, %v4845
          %v4919 = vmul.f32 %v4823, %v4850
          %v4920 = vmul.f32 %v4824, %v4855
          %v4921 = vmul.f32 %v4825, %v4860
          %v4922 = vmul.f32 %v4826, %v4865
          %v4923 = vmul.f32 %v4827, %v4870
          %v4924 = vmul.f32 %v4828, %v4875
          %v4925 = vmul.f32 %v4829, %v4880
          %v4926 = vmul.f32 %v4830, %v4885
          %v4927 = vmul.f32 %v4831, %v4890
          %v4928 = vmul.f32 %v4832, %v4895
          %v4929 = vmul.f32 %v4833, %v4900
          %v4930 = vmul.f32 %v4834, %v4905
          %v4931 = vmul.f32 %v4835, %v4910
          %v4932 = vmul.f32 %v4836, %v4915
          %4933 = vst.msk [vmem:[%s424] sm:$0xff] %vm746, %v4917
          %4934 = vst.msk [vmem:[%s424 + $0x8] sm:$0xff] %vm746, %v4918
          %4935 = vst.msk [vmem:[%s424 + $0x10] sm:$0xff] %vm746, %v4919
          %4936 = vst.msk [vmem:[%s424 + $0x18] sm:$0xff] %vm746, %v4920
          %4937 = vst.msk [vmem:[%s424 + $0x20] sm:$0xff] %vm746, %v4921
          %4938 = vst.msk [vmem:[%s424 + $0x28] sm:$0xff] %vm746, %v4922
          %4939 = vst.msk [vmem:[%s424 + $0x30] sm:$0xff] %vm746, %v4923
          %4940 = vst.msk [vmem:[%s424 + $0x38] sm:$0xff] %vm746, %v4924
          %4941 = vst.msk [vmem:[%s424 + $0x40] sm:$0xff] %vm746, %v4925
          %4942 = vst.msk [vmem:[%s424 + $0x48] sm:$0xff] %vm746, %v4926
          %4943 = vst.msk [vmem:[%s424 + $0x50] sm:$0xff] %vm746, %v4927
          %4944 = vst.msk [vmem:[%s424 + $0x58] sm:$0xff] %vm746, %v4928
          %4945 = vst.msk [vmem:[%s424 + $0x60] sm:$0xff] %vm746, %v4929
          %4946 = vst.msk [vmem:[%s424 + $0x68] sm:$0xff] %vm746, %v4930
          %4947 = vst.msk [vmem:[%s424 + $0x70] sm:$0xff] %vm746, %v4931
          %4948 = vst.msk [vmem:[%s424 + $0x78] sm:$0xff] %vm746, %v4932
          %v4949 = vld [vmem:[#allocation4] sm:$0xff]
          %v4950 = vld [vmem:[#allocation4 + $0x8] sm:$0xff]
          %v4951 = vld [vmem:[#allocation4 + $0x10] sm:$0xff]
          %v4952 = vld [vmem:[#allocation4 + $0x18] sm:$0xff]
          %v4953 = vld [vmem:[#allocation4 + $0x20] sm:$0xff]
          %v4954 = vld [vmem:[#allocation4 + $0x28] sm:$0xff]
          %v4955 = vld [vmem:[#allocation4 + $0x30] sm:$0xff]
          %v4956 = vld [vmem:[#allocation4 + $0x38] sm:$0xff]
          %v4957 = vld [vmem:[#allocation4 + $0x40] sm:$0xff]
          %v4958 = vld [vmem:[#allocation4 + $0x48] sm:$0xff]
          %v4959 = vld [vmem:[#allocation4 + $0x50] sm:$0xff]
          %v4960 = vld [vmem:[#allocation4 + $0x58] sm:$0xff]
          %v4961 = vld [vmem:[#allocation4 + $0x60] sm:$0xff]
          %v4962 = vld [vmem:[#allocation4 + $0x68] sm:$0xff]
          %v4963 = vld [vmem:[#allocation4 + $0x70] sm:$0xff]
          %v4964 = vld [vmem:[#allocation4 + $0x78] sm:$0xff]
          %v4965 = vrcp.pop %v4949
          %v4966 = vrcp.pop %v4950
          %v4967 = vrcp.pop %v4951
          %v4968 = vrcp.pop %v4952
          %v4969 = vrcp.pop %v4953
          %v4970 = vrcp.pop %v4954
          %v4971 = vrcp.pop %v4955
          %v4972 = vrcp.pop %v4956
          %v4973 = vrcp.pop %v4957
          %v4974 = vrcp.pop %v4958
          %v4975 = vrcp.pop %v4959
          %v4976 = vrcp.pop %v4960
          %v4977 = vrcp.pop %v4961
          %v4978 = vrcp.pop %v4962
          %v4979 = vrcp.pop %v4963
          %v4980 = vrcp.pop %v4964
          %v4981 = vld [vmem:[#allocation2] sm:$0xff]
          %v4982 = vld [vmem:[#allocation2 + $0x8] sm:$0xff]
          %v4983 = vld [vmem:[#allocation2 + $0x10] sm:$0xff]
          %v4984 = vld [vmem:[#allocation2 + $0x18] sm:$0xff]
          %v4985 = vld [vmem:[#allocation2 + $0x20] sm:$0xff]
          %v4986 = vld [vmem:[#allocation2 + $0x28] sm:$0xff]
          %v4987 = vld [vmem:[#allocation2 + $0x30] sm:$0xff]
          %v4988 = vld [vmem:[#allocation2 + $0x38] sm:$0xff]
          %v4989 = vld [vmem:[#allocation2 + $0x40] sm:$0xff]
          %v4990 = vld [vmem:[#allocation2 + $0x48] sm:$0xff]
          %v4991 = vld [vmem:[#allocation2 + $0x50] sm:$0xff]
          %v4992 = vld [vmem:[#allocation2 + $0x58] sm:$0xff]
          %v4993 = vld [vmem:[#allocation2 + $0x60] sm:$0xff]
          %v4994 = vld [vmem:[#allocation2 + $0x68] sm:$0xff]
          %v4995 = vld [vmem:[#allocation2 + $0x70] sm:$0xff]
          %v4996 = vld [vmem:[#allocation2 + $0x78] sm:$0xff]
          %4998 = vset.pattern.permute.xlu0 1
          %4999 = vperm.xlu0 %4998, %v4965
          %v5000 = vpop.permute.xlu0 %4999
          %5003 = vset.pattern.permute.xlu0 1
          %5004 = vperm.xlu0 %5003, %v4966
          %v5005 = vpop.permute.xlu0 %5004
          %5008 = vset.pattern.permute.xlu0 1
          %5009 = vperm.xlu0 %5008, %v4967
          %v5010 = vpop.permute.xlu0 %5009
          %5013 = vset.pattern.permute.xlu0 1
          %5014 = vperm.xlu0 %5013, %v4968
          %v5015 = vpop.permute.xlu0 %5014
          %5018 = vset.pattern.permute.xlu0 1
          %5019 = vperm.xlu0 %5018, %v4969
          %v5020 = vpop.permute.xlu0 %5019
          %5023 = vset.pattern.permute.xlu0 1
          %5024 = vperm.xlu0 %5023, %v4970
          %v5025 = vpop.permute.xlu0 %5024
          %5028 = vset.pattern.permute.xlu0 1
          %5029 = vperm.xlu0 %5028, %v4971
          %v5030 = vpop.permute.xlu0 %5029
          %5033 = vset.pattern.permute.xlu0 1
          %5034 = vperm.xlu0 %5033, %v4972
          %v5035 = vpop.permute.xlu0 %5034
          %5038 = vset.pattern.permute.xlu0 1
          %5039 = vperm.xlu0 %5038, %v4973
          %v5040 = vpop.permute.xlu0 %5039
          %5043 = vset.pattern.permute.xlu0 1
          %5044 = vperm.xlu0 %5043, %v4974
          %v5045 = vpop.permute.xlu0 %5044
          %5048 = vset.pattern.permute.xlu0 1
          %5049 = vperm.xlu0 %5048, %v4975
          %v5050 = vpop.permute.xlu0 %5049
          %5053 = vset.pattern.permute.xlu0 1
          %5054 = vperm.xlu0 %5053, %v4976
          %v5055 = vpop.permute.xlu0 %5054
          %5058 = vset.pattern.permute.xlu0 1
          %5059 = vperm.xlu0 %5058, %v4977
          %v5060 = vpop.permute.xlu0 %5059
          %5063 = vset.pattern.permute.xlu0 1
          %5064 = vperm.xlu0 %5063, %v4978
          %v5065 = vpop.permute.xlu0 %5064
          %5068 = vset.pattern.permute.xlu0 1
          %5069 = vperm.xlu0 %5068, %v4979
          %v5070 = vpop.permute.xlu0 %5069
          %5073 = vset.pattern.permute.xlu0 1
          %5074 = vperm.xlu0 %5073, %v4980
          %v5075 = vpop.permute.xlu0 %5074
          %v5077 = vmul.f32 %v4981, %v5000
          %v5078 = vmul.f32 %v4982, %v5005
          %v5079 = vmul.f32 %v4983, %v5010
          %v5080 = vmul.f32 %v4984, %v5015
          %v5081 = vmul.f32 %v4985, %v5020
          %v5082 = vmul.f32 %v4986, %v5025
          %v5083 = vmul.f32 %v4987, %v5030
          %v5084 = vmul.f32 %v4988, %v5035
          %v5085 = vmul.f32 %v4989, %v5040
          %v5086 = vmul.f32 %v4990, %v5045
          %v5087 = vmul.f32 %v4991, %v5050
          %v5088 = vmul.f32 %v4992, %v5055
          %v5089 = vmul.f32 %v4993, %v5060
          %v5090 = vmul.f32 %v4994, %v5065
          %v5091 = vmul.f32 %v4995, %v5070
          %v5092 = vmul.f32 %v4996, %v5075
          %5093 = vst.msk [vmem:[%s424] sm:$0xff] %vm2649, %v5077
          %5094 = vst.msk [vmem:[%s424 + $0x8] sm:$0xff] %vm2649, %v5078
          %5095 = vst.msk [vmem:[%s424 + $0x10] sm:$0xff] %vm2649, %v5079
          %5096 = vst.msk [vmem:[%s424 + $0x18] sm:$0xff] %vm2649, %v5080
          %5097 = vst.msk [vmem:[%s424 + $0x20] sm:$0xff] %vm2649, %v5081
          %5098 = vst.msk [vmem:[%s424 + $0x28] sm:$0xff] %vm2649, %v5082
          %5099 = vst.msk [vmem:[%s424 + $0x30] sm:$0xff] %vm2649, %v5083
          %5100 = vst.msk [vmem:[%s424 + $0x38] sm:$0xff] %vm2649, %v5084
          %5101 = vst.msk [vmem:[%s424 + $0x40] sm:$0xff] %vm2649, %v5085
          %5102 = vst.msk [vmem:[%s424 + $0x48] sm:$0xff] %vm2649, %v5086
          %5103 = vst.msk [vmem:[%s424 + $0x50] sm:$0xff] %vm2649, %v5087
          %5104 = vst.msk [vmem:[%s424 + $0x58] sm:$0xff] %vm2649, %v5088
          %5105 = vst.msk [vmem:[%s424 + $0x60] sm:$0xff] %vm2649, %v5089
          %5106 = vst.msk [vmem:[%s424 + $0x68] sm:$0xff] %vm2649, %v5090
          %5107 = vst.msk [vmem:[%s424 + $0x70] sm:$0xff] %vm2649, %v5091
          %5108 = vst.msk [vmem:[%s424 + $0x78] sm:$0xff] %vm2649, %v5092
          %v5109 = vld [vmem:[#allocation4] sm:$0xff]
          %v5110 = vld [vmem:[#allocation4 + $0x8] sm:$0xff]
          %v5111 = vld [vmem:[#allocation4 + $0x10] sm:$0xff]
          %v5112 = vld [vmem:[#allocation4 + $0x18] sm:$0xff]
          %v5113 = vld [vmem:[#allocation4 + $0x20] sm:$0xff]
          %v5114 = vld [vmem:[#allocation4 + $0x28] sm:$0xff]
          %v5115 = vld [vmem:[#allocation4 + $0x30] sm:$0xff]
          %v5116 = vld [vmem:[#allocation4 + $0x38] sm:$0xff]
          %v5117 = vld [vmem:[#allocation4 + $0x40] sm:$0xff]
          %v5118 = vld [vmem:[#allocation4 + $0x48] sm:$0xff]
          %v5119 = vld [vmem:[#allocation4 + $0x50] sm:$0xff]
          %v5120 = vld [vmem:[#allocation4 + $0x58] sm:$0xff]
          %v5121 = vld [vmem:[#allocation4 + $0x60] sm:$0xff]
          %v5122 = vld [vmem:[#allocation4 + $0x68] sm:$0xff]
          %v5123 = vld [vmem:[#allocation4 + $0x70] sm:$0xff]
          %v5124 = vld [vmem:[#allocation4 + $0x78] sm:$0xff]
          %v5125 = vrcp.pop %v5109
          %v5126 = vrcp.pop %v5110
          %v5127 = vrcp.pop %v5111
          %v5128 = vrcp.pop %v5112
          %v5129 = vrcp.pop %v5113
          %v5130 = vrcp.pop %v5114
          %v5131 = vrcp.pop %v5115
          %v5132 = vrcp.pop %v5116
          %v5133 = vrcp.pop %v5117
          %v5134 = vrcp.pop %v5118
          %v5135 = vrcp.pop %v5119
          %v5136 = vrcp.pop %v5120
          %v5137 = vrcp.pop %v5121
          %v5138 = vrcp.pop %v5122
          %v5139 = vrcp.pop %v5123
          %v5140 = vrcp.pop %v5124
          %v5141 = vld [vmem:[#allocation2] sm:$0xff]
          %v5142 = vld [vmem:[#allocation2 + $0x8] sm:$0xff]
          %v5143 = vld [vmem:[#allocation2 + $0x10] sm:$0xff]
          %v5144 = vld [vmem:[#allocation2 + $0x18] sm:$0xff]
          %v5145 = vld [vmem:[#allocation2 + $0x20] sm:$0xff]
          %v5146 = vld [vmem:[#allocation2 + $0x28] sm:$0xff]
          %v5147 = vld [vmem:[#allocation2 + $0x30] sm:$0xff]
          %v5148 = vld [vmem:[#allocation2 + $0x38] sm:$0xff]
          %v5149 = vld [vmem:[#allocation2 + $0x40] sm:$0xff]
          %v5150 = vld [vmem:[#allocation2 + $0x48] sm:$0xff]
          %v5151 = vld [vmem:[#allocation2 + $0x50] sm:$0xff]
          %v5152 = vld [vmem:[#allocation2 + $0x58] sm:$0xff]
          %v5153 = vld [vmem:[#allocation2 + $0x60] sm:$0xff]
          %v5154 = vld [vmem:[#allocation2 + $0x68] sm:$0xff]
          %v5155 = vld [vmem:[#allocation2 + $0x70] sm:$0xff]
          %v5156 = vld [vmem:[#allocation2 + $0x78] sm:$0xff]
          %5158 = vset.pattern.permute.xlu0 2
          %5159 = vperm.xlu0 %5158, %v5125
          %v5160 = vpop.permute.xlu0 %5159
          %5163 = vset.pattern.permute.xlu0 2
          %5164 = vperm.xlu0 %5163, %v5126
          %v5165 = vpop.permute.xlu0 %5164
          %5168 = vset.pattern.permute.xlu0 2
          %5169 = vperm.xlu0 %5168, %v5127
          %v5170 = vpop.permute.xlu0 %5169
          %5173 = vset.pattern.permute.xlu0 2
          %5174 = vperm.xlu0 %5173, %v5128
          %v5175 = vpop.permute.xlu0 %5174
          %5178 = vset.pattern.permute.xlu0 2
          %5179 = vperm.xlu0 %5178, %v5129
          %v5180 = vpop.permute.xlu0 %5179
          %5183 = vset.pattern.permute.xlu0 2
          %5184 = vperm.xlu0 %5183, %v5130
          %v5185 = vpop.permute.xlu0 %5184
          %5188 = vset.pattern.permute.xlu0 2
          %5189 = vperm.xlu0 %5188, %v5131
          %v5190 = vpop.permute.xlu0 %5189
          %5193 = vset.pattern.permute.xlu0 2
          %5194 = vperm.xlu0 %5193, %v5132
          %v5195 = vpop.permute.xlu0 %5194
          %5198 = vset.pattern.permute.xlu0 2
          %5199 = vperm.xlu0 %5198, %v5133
          %v5200 = vpop.permute.xlu0 %5199
          %5203 = vset.pattern.permute.xlu0 2
          %5204 = vperm.xlu0 %5203, %v5134
          %v5205 = vpop.permute.xlu0 %5204
          %5208 = vset.pattern.permute.xlu0 2
          %5209 = vperm.xlu0 %5208, %v5135
          %v5210 = vpop.permute.xlu0 %5209
          %5213 = vset.pattern.permute.xlu0 2
          %5214 = vperm.xlu0 %5213, %v5136
          %v5215 = vpop.permute.xlu0 %5214
          %5218 = vset.pattern.permute.xlu0 2
          %5219 = vperm.xlu0 %5218, %v5137
          %v5220 = vpop.permute.xlu0 %5219
          %5223 = vset.pattern.permute.xlu0 2
          %5224 = vperm.xlu0 %5223, %v5138
          %v5225 = vpop.permute.xlu0 %5224
          %5228 = vset.pattern.permute.xlu0 2
          %5229 = vperm.xlu0 %5228, %v5139
          %v5230 = vpop.permute.xlu0 %5229
          %5233 = vset.pattern.permute.xlu0 2
          %5234 = vperm.xlu0 %5233, %v5140
          %v5235 = vpop.permute.xlu0 %5234
          %v5237 = vmul.f32 %v5141, %v5160
          %v5238 = vmul.f32 %v5142, %v5165
          %v5239 = vmul.f32 %v5143, %v5170
          %v5240 = vmul.f32 %v5144, %v5175
          %v5241 = vmul.f32 %v5145, %v5180
          %v5242 = vmul.f32 %v5146, %v5185
          %v5243 = vmul.f32 %v5147, %v5190
          %v5244 = vmul.f32 %v5148, %v5195
          %v5245 = vmul.f32 %v5149, %v5200
          %v5246 = vmul.f32 %v5150, %v5205
          %v5247 = vmul.f32 %v5151, %v5210
          %v5248 = vmul.f32 %v5152, %v5215
          %v5249 = vmul.f32 %v5153, %v5220
          %v5250 = vmul.f32 %v5154, %v5225
          %v5251 = vmul.f32 %v5155, %v5230
          %v5252 = vmul.f32 %v5156, %v5235
          %5253 = vst.msk [vmem:[%s424] sm:$0xff] %vm3709, %v5237
          %5254 = vst.msk [vmem:[%s424 + $0x8] sm:$0xff] %vm3709, %v5238
          %5255 = vst.msk [vmem:[%s424 + $0x10] sm:$0xff] %vm3709, %v5239
          %5256 = vst.msk [vmem:[%s424 + $0x18] sm:$0xff] %vm3709, %v5240
          %5257 = vst.msk [vmem:[%s424 + $0x20] sm:$0xff] %vm3709, %v5241
          %5258 = vst.msk [vmem:[%s424 + $0x28] sm:$0xff] %vm3709, %v5242
          %5259 = vst.msk [vmem:[%s424 + $0x30] sm:$0xff] %vm3709, %v5243
          %5260 = vst.msk [vmem:[%s424 + $0x38] sm:$0xff] %vm3709, %v5244
          %5261 = vst.msk [vmem:[%s424 + $0x40] sm:$0xff] %vm3709, %v5245
          %5262 = vst.msk [vmem:[%s424 + $0x48] sm:$0xff] %vm3709, %v5246
          %5263 = vst.msk [vmem:[%s424 + $0x50] sm:$0xff] %vm3709, %v5247
          %5264 = vst.msk [vmem:[%s424 + $0x58] sm:$0xff] %vm3709, %v5248
          %5265 = vst.msk [vmem:[%s424 + $0x60] sm:$0xff] %vm3709, %v5249
          %5266 = vst.msk [vmem:[%s424 + $0x68] sm:$0xff] %vm3709, %v5250
          %5267 = vst.msk [vmem:[%s424 + $0x70] sm:$0xff] %vm3709, %v5251
          %5268 = vst.msk [vmem:[%s424 + $0x78] sm:$0xff] %vm3709, %v5252
          %v5269 = vld [vmem:[#allocation4] sm:$0xff]
          %v5270 = vld [vmem:[#allocation4 + $0x8] sm:$0xff]
          %v5271 = vld [vmem:[#allocation4 + $0x10] sm:$0xff]
          %v5272 = vld [vmem:[#allocation4 + $0x18] sm:$0xff]
          %v5273 = vld [vmem:[#allocation4 + $0x20] sm:$0xff]
          %v5274 = vld [vmem:[#allocation4 + $0x28] sm:$0xff]
          %v5275 = vld [vmem:[#allocation4 + $0x30] sm:$0xff]
          %v5276 = vld [vmem:[#allocation4 + $0x38] sm:$0xff]
          %v5277 = vld [vmem:[#allocation4 + $0x40] sm:$0xff]
          %v5278 = vld [vmem:[#allocation4 + $0x48] sm:$0xff]
          %v5279 = vld [vmem:[#allocation4 + $0x50] sm:$0xff]
          %v5280 = vld [vmem:[#allocation4 + $0x58] sm:$0xff]
          %v5281 = vld [vmem:[#allocation4 + $0x60] sm:$0xff]
          %v5282 = vld [vmem:[#allocation4 + $0x68] sm:$0xff]
          %v5283 = vld [vmem:[#allocation4 + $0x70] sm:$0xff]
          %v5284 = vld [vmem:[#allocation4 + $0x78] sm:$0xff]
          %v5285 = vrcp.pop %v5269
          %v5286 = vrcp.pop %v5270
          %v5287 = vrcp.pop %v5271
          %v5288 = vrcp.pop %v5272
          %v5289 = vrcp.pop %v5273
          %v5290 = vrcp.pop %v5274
          %v5291 = vrcp.pop %v5275
          %v5292 = vrcp.pop %v5276
          %v5293 = vrcp.pop %v5277
          %v5294 = vrcp.pop %v5278
          %v5295 = vrcp.pop %v5279
          %v5296 = vrcp.pop %v5280
          %v5297 = vrcp.pop %v5281
          %v5298 = vrcp.pop %v5282
          %v5299 = vrcp.pop %v5283
          %v5300 = vrcp.pop %v5284
          %v5301 = vld [vmem:[#allocation2] sm:$0xff]
          %v5302 = vld [vmem:[#allocation2 + $0x8] sm:$0xff]
          %v5303 = vld [vmem:[#allocation2 + $0x10] sm:$0xff]
          %v5304 = vld [vmem:[#allocation2 + $0x18] sm:$0xff]
          %v5305 = vld [vmem:[#allocation2 + $0x20] sm:$0xff]
          %v5306 = vld [vmem:[#allocation2 + $0x28] sm:$0xff]
          %v5307 = vld [vmem:[#allocation2 + $0x30] sm:$0xff]
          %v5308 = vld [vmem:[#allocation2 + $0x38] sm:$0xff]
          %v5309 = vld [vmem:[#allocation2 + $0x40] sm:$0xff]
          %v5310 = vld [vmem:[#allocation2 + $0x48] sm:$0xff]
          %v5311 = vld [vmem:[#allocation2 + $0x50] sm:$0xff]
          %v5312 = vld [vmem:[#allocation2 + $0x58] sm:$0xff]
          %v5313 = vld [vmem:[#allocation2 + $0x60] sm:$0xff]
          %v5314 = vld [vmem:[#allocation2 + $0x68] sm:$0xff]
          %v5315 = vld [vmem:[#allocation2 + $0x70] sm:$0xff]
          %v5316 = vld [vmem:[#allocation2 + $0x78] sm:$0xff]
          %5318 = vset.pattern.permute.xlu0 3
          %5319 = vperm.xlu0 %5318, %v5285
          %v5320 = vpop.permute.xlu0 %5319
          %5323 = vset.pattern.permute.xlu0 3
          %5324 = vperm.xlu0 %5323, %v5286
          %v5325 = vpop.permute.xlu0 %5324
          %5328 = vset.pattern.permute.xlu0 3
          %5329 = vperm.xlu0 %5328, %v5287
          %v5330 = vpop.permute.xlu0 %5329
          %5333 = vset.pattern.permute.xlu0 3
          %5334 = vperm.xlu0 %5333, %v5288
          %v5335 = vpop.permute.xlu0 %5334
          %5338 = vset.pattern.permute.xlu0 3
          %5339 = vperm.xlu0 %5338, %v5289
          %v5340 = vpop.permute.xlu0 %5339
          %5343 = vset.pattern.permute.xlu0 3
          %5344 = vperm.xlu0 %5343, %v5290
          %v5345 = vpop.permute.xlu0 %5344
          %5348 = vset.pattern.permute.xlu0 3
          %5349 = vperm.xlu0 %5348, %v5291
          %v5350 = vpop.permute.xlu0 %5349
          %5353 = vset.pattern.permute.xlu0 3
          %5354 = vperm.xlu0 %5353, %v5292
          %v5355 = vpop.permute.xlu0 %5354
          %5358 = vset.pattern.permute.xlu0 3
          %5359 = vperm.xlu0 %5358, %v5293
          %v5360 = vpop.permute.xlu0 %5359
          %5363 = vset.pattern.permute.xlu0 3
          %5364 = vperm.xlu0 %5363, %v5294
          %v5365 = vpop.permute.xlu0 %5364
          %5368 = vset.pattern.permute.xlu0 3
          %5369 = vperm.xlu0 %5368, %v5295
          %v5370 = vpop.permute.xlu0 %5369
          %5373 = vset.pattern.permute.xlu0 3
          %5374 = vperm.xlu0 %5373, %v5296
          %v5375 = vpop.permute.xlu0 %5374
          %5378 = vset.pattern.permute.xlu0 3
          %5379 = vperm.xlu0 %5378, %v5297
          %v5380 = vpop.permute.xlu0 %5379
          %5383 = vset.pattern.permute.xlu0 3
          %5384 = vperm.xlu0 %5383, %v5298
          %v5385 = vpop.permute.xlu0 %5384
          %5388 = vset.pattern.permute.xlu0 3
          %5389 = vperm.xlu0 %5388, %v5299
          %v5390 = vpop.permute.xlu0 %5389
          %5393 = vset.pattern.permute.xlu0 3
          %5394 = vperm.xlu0 %5393, %v5300
          %v5395 = vpop.permute.xlu0 %5394
          %v5397 = vmul.f32 %v5301, %v5320
          %v5398 = vmul.f32 %v5302, %v5325
          %v5399 = vmul.f32 %v5303, %v5330
          %v5400 = vmul.f32 %v5304, %v5335
          %v5401 = vmul.f32 %v5305, %v5340
          %v5402 = vmul.f32 %v5306, %v5345
          %v5403 = vmul.f32 %v5307, %v5350
          %v5404 = vmul.f32 %v5308, %v5355
          %v5405 = vmul.f32 %v5309, %v5360
          %v5406 = vmul.f32 %v5310, %v5365
          %v5407 = vmul.f32 %v5311, %v5370
          %v5408 = vmul.f32 %v5312, %v5375
          %v5409 = vmul.f32 %v5313, %v5380
          %v5410 = vmul.f32 %v5314, %v5385
          %v5411 = vmul.f32 %v5315, %v5390
          %v5412 = vmul.f32 %v5316, %v5395
          %5413 = vst.msk [vmem:[%s424] sm:$0xff] %vm4769, %v5397
          %5414 = vst.msk [vmem:[%s424 + $0x8] sm:$0xff] %vm4769, %v5398
          %5415 = vst.msk [vmem:[%s424 + $0x10] sm:$0xff] %vm4769, %v5399
          %5416 = vst.msk [vmem:[%s424 + $0x18] sm:$0xff] %vm4769, %v5400
          %5417 = vst.msk [vmem:[%s424 + $0x20] sm:$0xff] %vm4769, %v5401
          %5418 = vst.msk [vmem:[%s424 + $0x28] sm:$0xff] %vm4769, %v5402
          %5419 = vst.msk [vmem:[%s424 + $0x30] sm:$0xff] %vm4769, %v5403
          %5420 = vst.msk [vmem:[%s424 + $0x38] sm:$0xff] %vm4769, %v5404
          %5421 = vst.msk [vmem:[%s424 + $0x40] sm:$0xff] %vm4769, %v5405
          %5422 = vst.msk [vmem:[%s424 + $0x48] sm:$0xff] %vm4769, %v5406
          %5423 = vst.msk [vmem:[%s424 + $0x50] sm:$0xff] %vm4769, %v5407
          %5424 = vst.msk [vmem:[%s424 + $0x58] sm:$0xff] %vm4769, %v5408
          %5425 = vst.msk [vmem:[%s424 + $0x60] sm:$0xff] %vm4769, %v5409
          %5426 = vst.msk [vmem:[%s424 + $0x68] sm:$0xff] %vm4769, %v5410
          %5427 = vst.msk [vmem:[%s424 + $0x70] sm:$0xff] %vm4769, %v5411
          %5428 = vst.msk [vmem:[%s424 + $0x78] sm:$0xff] %vm4769, %v5412
        $region60: #{tpu_custom_call.1} parent=43 // pred_fallthru
          _
        %s5429 = sand.u32 %s221, 1
        %s5430 = scalar_lea.sflag [#allocation7], %s5429
        %s5431 = sand.u32 %s221, 1
        %s5432 = smul.addr %s5431, 128
        %s5433 = scalar_lea.vmem [#allocation10], %s5432
        // Predicated region
        $region61: #{tpu_custom_call.1} parent=43 // pred_check
          %p5434 = pneg %p231
        $region62: #{tpu_custom_call.1} parent=43 // pred_check_branch
          %5436 = sbr.rel (%p5434) target = $region64
        $region63: #{tpu_custom_call.1} parent=43 // pred_region
          %s5437 = smul.u32 16, %s30
          %s5439 = ssub.s32 2048, 2048
          %5440 = vsyncadd %s5430, %s5439
          %s5441 = smul.addr %s29, 16
          %s5442 = sadd.s32 %s5437, %s5441
          %s5443 = smul.addr %s5442, 128
          %s5444 = scalar_lea.hbm %s6, %s5443
          %s5445 = sshll.u32 %s5433, 4
          %s5446 = int_to_ptr.vmem [resolvable:$true] %s5445
          %5451 = dma.vmem_to_hbm [thread:$0]  %s5446, 2048, %s5444, %s5430, 128, 128, 8
        $region64: #{tpu_custom_call.1} parent=43 // pred_fallthru
          _
      $region44: #{tpu_custom_call.1} parent=5 // pred_fallthru
        _
      %p5452 = scmp.le.s32.totalorder 2, %s19
      // Predicated region
      $region65: #{tpu_custom_call.1} parent=5 // pred_check
        %p5453 = pneg %p5452
      $region66: #{tpu_custom_call.1} parent=5 // pred_check_branch
        %5455 = sbr.rel (%p5453) target = $region68
      $region67: #{tpu_custom_call.1} parent=5 // pred_region
        %s5456 = ssub.s32 %s19, 2
        // Predicated region
        $region69: #{tpu_custom_call.1} parent=67 // pred_check
          %p5457 = pneg %p237
        $region70: #{tpu_custom_call.1} parent=67 // pred_check_branch
          %5459 = sbr.rel (%p5457) target = $region72
        $region71: #{tpu_custom_call.1} parent=67 // pred_region
          %s5460 = sand.u32 %s222, 1
          %s5461 = scalar_lea.sflag [#allocation7], %s5460
          %s5462 = sand.u32 %s222, 1
          %s5463 = smul.addr %s5462, 128
          %s5464 = scalar_lea.vmem [#allocation10], %s5463
          %5465 = dma.done %s5461, 2048
        $region72: #{tpu_custom_call.1} parent=67 // pred_fallthru
          _
      $region68: #{tpu_custom_call.1} parent=5 // pred_fallthru
        _
    $region6: #{tpu_custom_call.1} parent=1 // loop_footer
      %s23 = sadd.s32 1, %s19
    $region7: #{tpu_custom_call.1} parent=1 // loop_footer_branch
      %18 = sbr.rel target = $region3
    $region8: #{tpu_custom_call.1} parent=1 // loop_exit
      _
    %5466 = vsyncpa [#allocation6], 1
    %s5467 = scalar_lea.sflag [#allocation6], 1
    %5468 = vsyncpa %s5467, 1
    %5469 = vsyncpa [#allocation9], 1
    %5470 = vsyncpa [#allocation7], 1
    %s5471 = scalar_lea.sflag [#allocation7], 1
    %5472 = vsyncpa %s5471, 1

</llo_original>
